<compile_context>
chip_gen: v6e
topology: v6e:2x2x1
jax: 0.10.0
libtpu: 0.0.40
codegen_flags: <defaults>
</compile_context>

<pallas_src>
import jax
import jax.numpy as jnp
from jax.experimental import pallas as pl
from jax.experimental.pallas import tpu as pltpu

# Small shapes consistent with the module's forward.
INPUT_DIM = 4
HIDDEN_DIM = 32
LATENT_DIM = 16
NUM_LAYERS = 2
BATCH = 2
SEQ = 8


# --------------------------------------------------------------------------
# Fused Pallas kernel: 2-layer BiLSTM + VAE heads, everything VMEM-resident
# --------------------------------------------------------------------------
def _fused_encoder_kernel(x_ref, wih0_ref, whh0_ref, b0_ref,
                          wih1_ref, whh1_ref, b1_ref,
                          whead_ref, bhead_ref,
                          out_ref,
                          ih_sc, ih_al_sc, seq_sc):
    TB, G8 = ih_sc.shape            # (T*B, 8H)
    H = seq_sc.shape[1] // 2
    G2, G6 = 2 * H, 6 * H
    B = out_ref.shape[0]
    T = TB // B

    # Lane mask: True on the forward-direction half of every 2H-wide gate group.
    col = jax.lax.broadcasted_iota(jnp.int32, (B, G8), 1)
    fwd_mask = (col % G2) < H

    def run_layer(in_ref, wih_ref, whh_ref, b_ref, store_seq):
        # ---- 1) Hoisted input-gate contributions: ONE (T*B, Din)@(Din, 8H) matmul ----
        ih_sc[...] = (jnp.dot(in_ref[...], wih_ref[...],
                              preferred_element_type=jnp.float32) + b_ref[...])

        # ---- 2) Time-align bwd columns (step T-1-t) with fwd columns (step t) ----
        #      (off the sequential critical path)
        for t in range(T):
            fwd_rows = ih_sc[pl.ds(t * B, B), :]
            bwd_rows = ih_sc[pl.ds((T - 1 - t) * B, B), :]
            ih_al_sc[pl.ds(t * B, B), :] = jnp.where(fwd_mask, fwd_rows, bwd_rows)

        # ---- 3) Sequential recurrence with a single fused (B, 2H) carry ----
        whh = whh_ref[...]                               # hoisted load, (2H, 8H)
        h = jnp.zeros((B, G2), jnp.float32)              # [h_fwd | h_bwd]
        c = jnp.zeros((B, G2), jnp.float32)
        for t in range(T):
            rec = jnp.dot(h, whh, preferred_element_type=jnp.float32)   # (B, 8H)
            gates = rec + ih_al_sc[pl.ds(t * B, B), :]                  # single add
            sig = jax.nn.sigmoid(gates[:, 0:G6])         # i|f|o, both directions
            i_g = sig[:, 0:G2]
            f_g = sig[:, G2:2 * G2]
            o_g = sig[:, 2 * G2:G6]
            g_g = jnp.tanh(gates[:, G6:G8])
            c = f_g * c + i_g * g_g
            h = o_g * jnp.tanh(c)
            if store_seq:
                # time-aligned bidirectional sequence: fwd at t, bwd at T-1-t
                seq_sc[pl.ds(t * B, B), pl.ds(0, H)] = h[:, 0:H]
                seq_sc[pl.ds((T - 1 - t) * B, B), pl.ds(H, H)] = h[:, H:G2]
        return h

    # Layer 0: input = raw flattened sequence (T*B, D)
    run_layer(x_ref, wih0_ref, whh0_ref, b0_ref, store_seq=True)
    # Layer 1: input = layer-0 bidirectional output sequence (T*B, 2H)
    h_final = run_layer(seq_sc, wih1_ref, whh1_ref, b1_ref, store_seq=False)

    # h_final == [h_fwd_final | h_bwd_final]  ->  fused fc_mu / fc_logvar head
    out_ref[...] = (jnp.dot(h_final, whead_ref[...],
                            preferred_element_type=jnp.float32) + bhead_ref[...])


def stroke_encoder_vae_forward(x, packed_params):
    """x: (B, T, D) batch-first, same convention as the PyTorch module."""
    lstm_packed, (whead, bhead) = packed_params
    (wih0, whh0, b0), (wih1, whh1, b1) = lstm_packed

    B, T, D = x.shape
    H, L = HIDDEN_DIM, LATENT_DIM
    # time-major, flattened to 2D for the batched hoist matmul
    x2d = jnp.transpose(x, (1, 0, 2)).reshape(T * B, D).astype(jnp.float32)

    vmem = pl.BlockSpec(memory_space=pltpu.MemorySpace.VMEM)
    out = pl.pallas_call(
        _fused_encoder_kernel,
        out_shape=jax.ShapeDtypeStruct((B, 2 * L), jnp.float32),
        in_specs=[vmem] * 9,
        out_specs=vmem,
        scratch_shapes=[
            pltpu.VMEM((T * B, 8 * H), jnp.float32),   # raw hoisted gate inputs
            pltpu.VMEM((T * B, 8 * H), jnp.float32),   # time-aligned gate inputs
            pltpu.VMEM((T * B, 2 * H), jnp.float32),   # layer-0 bidirectional sequence
        ],
    )(x2d, wih0, whh0, b0, wih1, whh1, b1, whead, bhead)
    return out[:, :L], out[:, L:]


# --------------------------------------------------------------------------
# Parameters (PyTorch layout) and kernel-side packing
# --------------------------------------------------------------------------
def init_params(key):
    """Raw weights in PyTorch nn.LSTM / nn.Linear layout."""
    keys = iter(jax.random.split(key, 64))
    scale = 1.0 / jnp.sqrt(HIDDEN_DIM)
    lstm = []
    for layer in range(NUM_LAYERS):
        in_dim = INPUT_DIM if layer == 0 else 2 * HIDDEN_DIM
        dirs = []
        for _ in range(2):   # forward, backward
            w_ih = jax.random.uniform(next(keys), (4 * HIDDEN_DIM, in_dim),
                                      minval=-scale, maxval=scale)
            w_hh = jax.random.uniform(next(keys), (4 * HIDDEN_DIM, HIDDEN_DIM),
                                      minval=-scale, maxval=scale)
            b_ih = jax.random.uniform(next(keys), (4 * HIDDEN_DIM,),
                                      minval=-scale, maxval=scale)
            b_hh = jax.random.uniform(next(keys), (4 * HIDDEN_DIM,),
                                      minval=-scale, maxval=scale)
            dirs.append((w_ih, w_hh, b_ih, b_hh))
        lstm.append(tuple(dirs))
    enc_out = 2 * HIDDEN_DIM
    fscale = 1.0 / jnp.sqrt(enc_out)
    w_mu = jax.random.uniform(next(keys), (LATENT_DIM, enc_out), minval=-fscale, maxval=fscale)
    b_mu = jax.random.uniform(next(keys), (LATENT_DIM,), minval=-fscale, maxval=fscale)
    w_lv = jax.random.uniform(next(keys), (LATENT_DIM, enc_out), minval=-fscale, maxval=fscale)
    b_lv = jax.random.uniform(next(keys), (LATENT_DIM,), minval=-fscale, maxval=fscale)
    return {"lstm": lstm, "heads": (w_mu, b_mu, w_lv, b_lv)}


def pack_params(raw):
    """Repack PyTorch-layout weights into the kernel's interleaved gate layout.

    Gate-column layout (8H wide): [ i_f | i_b | f_f | f_b | o_f | o_b | g_f | g_b ]
    Hidden/cell carry layout (2H wide): [ h_fwd | h_bwd ]
    """
    H, L = HIDDEN_DIM, LATENT_DIM

    def split_gates(wT):
        # wT: (in, 4H) with column blocks in PyTorch order [i | f | g | o]
        return wT[:, 0:H], wT[:, H:2 * H], wT[:, 2 * H:3 * H], wT[:, 3 * H:4 * H]

    packed_layers = []
    for (wif, whf, bif, bhf), (wib, whb, bib, bhb) in raw["lstm"]:
        i_f, f_f, g_f, o_f = split_gates(wif.T.astype(jnp.float32))
        i_b, f_b, g_b, o_b = split_gates(wib.T.astype(jnp.float32))
        wih = jnp.concatenate([i_f, i_b, f_f, f_b, o_f, o_b, g_f, g_b], axis=1)

        ri_f, rf_f, rg_f, ro_f = split_gates(whf.T.astype(jnp.float32))
        ri_b, rf_b, rg_b, ro_b = split_gates(whb.T.astype(jnp.float32))
        zero = jnp.zeros((H, H), jnp.float32)
        top = jnp.concatenate([ri_f, zero, rf_f, zero, ro_f, zero, rg_f, zero], axis=1)
        bot = jnp.concatenate([zero, ri_b, zero, rf_b, zero, ro_b, zero, rg_b], axis=1)
        whh = jnp.concatenate([top, bot], axis=0)                        # (2H, 8H)

        bf = (bif + bhf).astype(jnp.float32)
        bb = (bib + bhb).astype(jnp.float32)
        b = jnp.concatenate([bf[0:H], bb[0:H],                 # i
                             bf[H:2 * H], bb[H:2 * H],         # f
                             bf[3 * H:4 * H], bb[3 * H:4 * H], # o
                             bf[2 * H:3 * H], bb[2 * H:3 * H]  # g
                             ]).reshape(1, 8 * H)
        packed_layers.append((wih, whh, b))

    w_mu, b_mu, w_lv, b_lv = raw["heads"]
    whead = jnp.concatenate([w_mu.T, w_lv.T], axis=1).astype(jnp.float32)   # (2H, 2L)
    bhead = jnp.concatenate([b_mu, b_lv]).reshape(1, 2 * L).astype(jnp.float32)
    return packed_layers, (whead, bhead)


# --------------------------------------------------------------------------
# Pure-JAX reference (independent of the packing) for verification
# --------------------------------------------------------------------------
def _lstm_dir_ref(x_tbd, w_ih, w_hh, b_ih, b_hh):
    B = x_tbd.shape[1]
    H = w_hh.shape[1]

    def step(carry, x_t):
        h, c = carry
        gates = x_t @ w_ih.T + h @ w_hh.T + b_ih + b_hh
        i = jax.nn.sigmoid(gates[:, 0:H])
        f = jax.nn.sigmoid(gates[:, H:2 * H])
        g = jnp.tanh(gates[:, 2 * H:3 * H])
        o = jax.nn.sigmoid(gates[:, 3 * H:4 * H])
        c = f * c + i * g
        h = o * jnp.tanh(c)
        return (h, c), h

    (_, _), hs = jax.lax.scan(step, (jnp.zeros((B, H)), jnp.zeros((B, H))), x_tbd)
    return hs


def _forward_ref(x, raw):
    xt = jnp.transpose(x, (1, 0, 2)).astype(jnp.float32)
    layer_in = xt
    h_fwd = h_bwd = None
    for (fwd, bwd) in raw["lstm"]:
        h_fwd = _lstm_dir_ref(layer_in, *fwd)
        h_bwd = _lstm_dir_ref(layer_in[::-1], *bwd)
        layer_in = jnp.concatenate([h_fwd, h_bwd[::-1]], axis=-1)
    final_hidden = jnp.concatenate([h_fwd[-1], h_bwd[-1]], axis=-1)
    w_mu, b_mu, w_lv, b_lv = raw["heads"]
    return final_hidden @ w_mu.T + b_mu, final_hidden @ w_lv.T + b_lv


if __name__ == "__main__":
    key = jax.random.PRNGKey(0)
    k_x, k_p = jax.random.split(key)
    x = jax.random.normal(k_x, (BATCH, SEQ, INPUT_DIM), dtype=jnp.float32)
    raw_params = init_params(k_p)
    packed_params = pack_params(raw_params)

    mu, logvar = stroke_encoder_vae_forward(x, packed_params)
    mu, logvar = jax.block_until_ready((mu, logvar))

    mu_ref, logvar_ref = _forward_ref(x, raw_params)
    assert mu.shape == (BATCH, LATENT_DIM) and logvar.shape == (BATCH, LATENT_DIM)
    assert jnp.allclose(mu, mu_ref, atol=1e-3), "mu mismatch vs reference"
    assert jnp.allclose(logvar, logvar_ref, atol=1e-3), "logvar mismatch vs reference"

    print("KERNEL_OK")
</pallas_src>

<mosaic_0001>
module attributes {stable_mosaic.version = 11 : i64} {
  func.func @_fused_encoder_kernel(%arg0: memref<16x4xf32, #tpu.memory_space<vmem>>, %arg1: memref<4x256xf32, #tpu.memory_space<vmem>>, %arg2: memref<64x256xf32, #tpu.memory_space<vmem>>, %arg3: memref<1x256xf32, #tpu.memory_space<vmem>>, %arg4: memref<64x256xf32, #tpu.memory_space<vmem>>, %arg5: memref<64x256xf32, #tpu.memory_space<vmem>>, %arg6: memref<1x256xf32, #tpu.memory_space<vmem>>, %arg7: memref<64x32xf32, #tpu.memory_space<vmem>>, %arg8: memref<1x32xf32, #tpu.memory_space<vmem>>, %arg9: memref<2x32xf32, #tpu.memory_space<vmem>>, %arg10: memref<16x256xf32, #tpu.memory_space<vmem>>, %arg11: memref<16x256xf32, #tpu.memory_space<vmem>>, %arg12: memref<16x64xf32, #tpu.memory_space<vmem>>) attributes {dimension_semantics = [], scalar_prefetch = 0 : i64, scratch_operands = 3 : i64, tpu.core_type = #tpu.core_type<tc>} {
    %0 = tpu.iota {dimensions = array<i32: 1>} : vector<2x256xi32>
    %c64_i32 = arith.constant 64 : i32
    %c0_i32 = arith.constant 0 : i32
    %1 = arith.cmpi eq, %c64_i32, %c0_i32 : i32
    %c1_i32 = arith.constant 1 : i32
    %2 = arith.select %1, %c1_i32, %c64_i32 : i32
    %3 = vector.broadcast %2 : i32 to vector<2x256xi32>
    %4 = arith.remsi %0, %3 : vector<2x256xi32>
    %c0_i32_0 = arith.constant 0 : i32
    %5 = vector.broadcast %c0_i32_0 : i32 to vector<2x256xi32>
    %6 = arith.cmpi ne, %4, %5 : vector<2x256xi32>
    %c0_i32_1 = arith.constant 0 : i32
    %7 = vector.broadcast %c0_i32_1 : i32 to vector<2x256xi32>
    %8 = arith.cmpi slt, %4, %7 : vector<2x256xi32>
    %c0_i32_2 = arith.constant 0 : i32
    %9 = arith.cmpi slt, %2, %c0_i32_2 : i32
    %10 = vector.broadcast %9 : i1 to vector<2x256xi1>
    %11 = vector.broadcast %10 : vector<2x256xi1> to vector<2x256xi1>
    %12 = arith.xori %8, %11 : vector<2x256xi1>
    %13 = arith.andi %12, %6 : vector<2x256xi1>
    %14 = vector.broadcast %2 : i32 to vector<2x256xi32>
    %15 = arith.addi %4, %14 : vector<2x256xi32>
    %16 = arith.select %13, %15, %4 : vector<2x256xi1>, vector<2x256xi32>
    %c32_i32 = arith.constant 32 : i32
    %17 = vector.broadcast %c32_i32 : i32 to vector<2x256xi32>
    %18 = arith.cmpi slt, %16, %17 : vector<2x256xi32>
    %c0 = arith.constant 0 : index
    %c0_3 = arith.constant 0 : index
    %19 = vector.load %arg0[%c0, %c0_3] : memref<16x4xf32, #tpu.memory_space<vmem>>, vector<16x4xf32>
    %c0_4 = arith.constant 0 : index
    %c0_5 = arith.constant 0 : index
    %20 = vector.load %arg1[%c0_4, %c0_5] : memref<4x256xf32, #tpu.memory_space<vmem>>, vector<4x256xf32>
    %cst = arith.constant dense<0.000000e+00> : vector<16x256xf32>
    %21 = tpu.matmul %19, %20, %cst {dimension_numbers = #tpu.dot_dimension_numbers<[1], [0], [0], [1], [0, 0, 1, 1], [], []>} : vector<16x4xf32>, vector<4x256xf32>, vector<16x256xf32> -> vector<16x256xf32>
    %c0_6 = arith.constant 0 : index
    %c0_7 = arith.constant 0 : index
    %22 = vector.load %arg3[%c0_6, %c0_7] : memref<1x256xf32, #tpu.memory_space<vmem>>, vector<1x256xf32>
    %23 = vector.broadcast %22 : vector<1x256xf32> to vector<16x256xf32>
    %24 = arith.addf %21, %23 : vector<16x256xf32>
    %c0_8 = arith.constant 0 : index
    %c0_9 = arith.constant 0 : index
    %25 = vector.load %arg10[%c0_8, %c0_9] : memref<16x256xf32, #tpu.memory_space<vmem>>, vector<16x256xf32>
    tpu.vector_store %arg10[%c0_8, %c0_9], %24 {strides = array<i32>} : memref<16x256xf32, #tpu.memory_space<vmem>>, vector<16x256xf32>,
    %c0_10 = arith.constant 0 : index
    %c0_11 = arith.constant 0 : index
    %26 = vector.load %arg10[%c0_10, %c0_11] : memref<16x256xf32, #tpu.memory_space<vmem>>, vector<2x256xf32>
    %c14 = arith.constant 14 : index
    %c0_12 = arith.constant 0 : index
    %27 = vector.load %arg10[%c14, %c0_12] : memref<16x256xf32, #tpu.memory_space<vmem>>, vector<2x256xf32>
    %28 = arith.select %18, %26, %27 : vector<2x256xi1>, vector<2x256xf32>
    %c0_13 = arith.constant 0 : index
    %c0_14 = arith.constant 0 : index
    %29 = vector.load %arg11[%c0_13, %c0_14] : memref<16x256xf32, #tpu.memory_space<vmem>>, vector<2x256xf32>
    tpu.vector_store %arg11[%c0_13, %c0_14], %28 {strides = array<i32>} : memref<16x256xf32, #tpu.memory_space<vmem>>, vector<2x256xf32>,
    %c2 = arith.constant 2 : index
    %c0_15 = arith.constant 0 : index
    %30 = vector.load %arg10[%c2, %c0_15] : memref<16x256xf32, #tpu.memory_space<vmem>>, vector<2x256xf32>
    %c12 = arith.constant 12 : index
    %c0_16 = arith.constant 0 : index
    %31 = vector.load %arg10[%c12, %c0_16] : memref<16x256xf32, #tpu.memory_space<vmem>>, vector<2x256xf32>
    %32 = arith.select %18, %30, %31 : vector<2x256xi1>, vector<2x256xf32>
    %c2_17 = arith.constant 2 : index
    %c0_18 = arith.constant 0 : index
    %33 = vector.load %arg11[%c2_17, %c0_18] : memref<16x256xf32, #tpu.memory_space<vmem>>, vector<2x256xf32>
    tpu.vector_store %arg11[%c2_17, %c0_18], %32 {strides = array<i32>} : memref<16x256xf32, #tpu.memory_space<vmem>>, vector<2x256xf32>,
    %c4 = arith.constant 4 : index
    %c0_19 = arith.constant 0 : index
    %34 = vector.load %arg10[%c4, %c0_19] : memref<16x256xf32, #tpu.memory_space<vmem>>, vector<2x256xf32>
    %c10 = arith.constant 10 : index
    %c0_20 = arith.constant 0 : index
    %35 = vector.load %arg10[%c10, %c0_20] : memref<16x256xf32, #tpu.memory_space<vmem>>, vector<2x256xf32>
    %36 = arith.select %18, %34, %35 : vector<2x256xi1>, vector<2x256xf32>
    %c4_21 = arith.constant 4 : index
    %c0_22 = arith.constant 0 : index
    %37 = vector.load %arg11[%c4_21, %c0_22] : memref<16x256xf32, #tpu.memory_space<vmem>>, vector<2x256xf32>
    tpu.vector_store %arg11[%c4_21, %c0_22], %36 {strides = array<i32>} : memref<16x256xf32, #tpu.memory_space<vmem>>, vector<2x256xf32>,
    %c6 = arith.constant 6 : index
    %c0_23 = arith.constant 0 : index
    %38 = vector.load %arg10[%c6, %c0_23] : memref<16x256xf32, #tpu.memory_space<vmem>>, vector<2x256xf32>
    %c8 = arith.constant 8 : index
    %c0_24 = arith.constant 0 : index
    %39 = vector.load %arg10[%c8, %c0_24] : memref<16x256xf32, #tpu.memory_space<vmem>>, vector<2x256xf32>
    %40 = arith.select %18, %38, %39 : vector<2x256xi1>, vector<2x256xf32>
    %c6_25 = arith.constant 6 : index
    %c0_26 = arith.constant 0 : index
    %41 = vector.load %arg11[%c6_25, %c0_26] : memref<16x256xf32, #tpu.memory_space<vmem>>, vector<2x256xf32>
    tpu.vector_store %arg11[%c6_25, %c0_26], %40 {strides = array<i32>} : memref<16x256xf32, #tpu.memory_space<vmem>>, vector<2x256xf32>,
    %c8_27 = arith.constant 8 : index
    %c0_28 = arith.constant 0 : index
    %42 = vector.load %arg10[%c8_27, %c0_28] : memref<16x256xf32, #tpu.memory_space<vmem>>, vector<2x256xf32>
    %c6_29 = arith.constant 6 : index
    %c0_30 = arith.constant 0 : index
    %43 = vector.load %arg10[%c6_29, %c0_30] : memref<16x256xf32, #tpu.memory_space<vmem>>, vector<2x256xf32>
    %44 = arith.select %18, %42, %43 : vector<2x256xi1>, vector<2x256xf32>
    %c8_31 = arith.constant 8 : index
    %c0_32 = arith.constant 0 : index
    %45 = vector.load %arg11[%c8_31, %c0_32] : memref<16x256xf32, #tpu.memory_space<vmem>>, vector<2x256xf32>
    tpu.vector_store %arg11[%c8_31, %c0_32], %44 {strides = array<i32>} : memref<16x256xf32, #tpu.memory_space<vmem>>, vector<2x256xf32>,
    %c10_33 = arith.constant 10 : index
    %c0_34 = arith.constant 0 : index
    %46 = vector.load %arg10[%c10_33, %c0_34] : memref<16x256xf32, #tpu.memory_space<vmem>>, vector<2x256xf32>
    %c4_35 = arith.constant 4 : index
    %c0_36 = arith.constant 0 : index
    %47 = vector.load %arg10[%c4_35, %c0_36] : memref<16x256xf32, #tpu.memory_space<vmem>>, vector<2x256xf32>
    %48 = arith.select %18, %46, %47 : vector<2x256xi1>, vector<2x256xf32>
    %c10_37 = arith.constant 10 : index
    %c0_38 = arith.constant 0 : index
    %49 = vector.load %arg11[%c10_37, %c0_38] : memref<16x256xf32, #tpu.memory_space<vmem>>, vector<2x256xf32>
    tpu.vector_store %arg11[%c10_37, %c0_38], %48 {strides = array<i32>} : memref<16x256xf32, #tpu.memory_space<vmem>>, vector<2x256xf32>,
    %c12_39 = arith.constant 12 : index
    %c0_40 = arith.constant 0 : index
    %50 = vector.load %arg10[%c12_39, %c0_40] : memref<16x256xf32, #tpu.memory_space<vmem>>, vector<2x256xf32>
    %c2_41 = arith.constant 2 : index
    %c0_42 = arith.constant 0 : index
    %51 = vector.load %arg10[%c2_41, %c0_42] : memref<16x256xf32, #tpu.memory_space<vmem>>, vector<2x256xf32>
    %52 = arith.select %18, %50, %51 : vector<2x256xi1>, vector<2x256xf32>
    %c12_43 = arith.constant 12 : index
    %c0_44 = arith.constant 0 : index
    %53 = vector.load %arg11[%c12_43, %c0_44] : memref<16x256xf32, #tpu.memory_space<vmem>>, vector<2x256xf32>
    tpu.vector_store %arg11[%c12_43, %c0_44], %52 {strides = array<i32>} : memref<16x256xf32, #tpu.memory_space<vmem>>, vector<2x256xf32>,
    %c14_45 = arith.constant 14 : index
    %c0_46 = arith.constant 0 : index
    %54 = vector.load %arg10[%c14_45, %c0_46] : memref<16x256xf32, #tpu.memory_space<vmem>>, vector<2x256xf32>
    %c0_47 = arith.constant 0 : index
    %c0_48 = arith.constant 0 : index
    %55 = vector.load %arg10[%c0_47, %c0_48] : memref<16x256xf32, #tpu.memory_space<vmem>>, vector<2x256xf32>
    %56 = arith.select %18, %54, %55 : vector<2x256xi1>, vector<2x256xf32>
    %c14_49 = arith.constant 14 : index
    %c0_50 = arith.constant 0 : index
    %57 = vector.load %arg11[%c14_49, %c0_50] : memref<16x256xf32, #tpu.memory_space<vmem>>, vector<2x256xf32>
    tpu.vector_store %arg11[%c14_49, %c0_50], %56 {strides = array<i32>} : memref<16x256xf32, #tpu.memory_space<vmem>>, vector<2x256xf32>,
    %c0_51 = arith.constant 0 : index
    %c0_52 = arith.constant 0 : index
    %58 = vector.load %arg2[%c0_51, %c0_52] : memref<64x256xf32, #tpu.memory_space<vmem>>, vector<64x256xf32>
    %cst_53 = arith.constant 0.000000e+00 : f32
    %59 = vector.broadcast %cst_53 : f32 to vector<2x64xf32>
    %cst_54 = arith.constant 0.000000e+00 : f32
    %60 = vector.broadcast %cst_54 : f32 to vector<2x64xf32>
    %cst_55 = arith.constant dense<0.000000e+00> : vector<2x256xf32>
    %61 = tpu.matmul %59, %58, %cst_55 {dimension_numbers = #tpu.dot_dimension_numbers<[1], [0], [0], [1], [0, 0, 1, 1], [], []>} : vector<2x64xf32>, vector<64x256xf32>, vector<2x256xf32> -> vector<2x256xf32>
    %c0_56 = arith.constant 0 : index
    %c0_57 = arith.constant 0 : index
    %62 = vector.load %arg11[%c0_56, %c0_57] : memref<16x256xf32, #tpu.memory_space<vmem>>, vector<2x256xf32>
    %63 = arith.addf %61, %62 : vector<2x256xf32>
    %64 = vector.extract_strided_slice %63 {offsets = [0, 0], sizes = [2, 192], strides = [1, 1]} : vector<2x256xf32> to vector<2x192xf32>
    %65 = arith.negf %64 : vector<2x192xf32>
    %66 = math.exp %65 : vector<2x192xf32>
    %cst_58 = arith.constant 1.000000e+00 : f32
    %67 = vector.broadcast %cst_58 : f32 to vector<2x192xf32>
    %68 = arith.addf %67, %66 : vector<2x192xf32>
    %69 = arith.divf %67, %68 : vector<2x192xf32>
    %70 = vector.extract_strided_slice %69 {offsets = [0, 0], sizes = [2, 64], strides = [1, 1]} : vector<2x192xf32> to vector<2x64xf32>
    %71 = vector.extract_strided_slice %69 {offsets = [0, 64], sizes = [2, 64], strides = [1, 1]} : vector<2x192xf32> to vector<2x64xf32>
    %72 = vector.extract_strided_slice %69 {offsets = [0, 128], sizes = [2, 64], strides = [1, 1]} : vector<2x192xf32> to vector<2x64xf32>
    %73 = vector.extract_strided_slice %63 {offsets = [0, 192], sizes = [2, 64], strides = [1, 1]} : vector<2x256xf32> to vector<2x64xf32>
    %74 = math.tanh %73 : vector<2x64xf32>
    %75 = arith.mulf %71, %60 : vector<2x64xf32>
    %76 = arith.mulf %70, %74 : vector<2x64xf32>
    %77 = arith.addf %75, %76 : vector<2x64xf32>
    %78 = math.tanh %77 : vector<2x64xf32>
    %79 = arith.mulf %72, %78 : vector<2x64xf32>
    %80 = vector.extract_strided_slice %79 {offsets = [0, 0], sizes = [2, 32], strides = [1, 1]} : vector<2x64xf32> to vector<2x32xf32>
    %c0_59 = arith.constant 0 : index
    %c0_60 = arith.constant 0 : index
    %81 = vector.load %arg12[%c0_59, %c0_60] : memref<16x64xf32, #tpu.memory_space<vmem>>, vector<2x32xf32>
    tpu.vector_store %arg12[%c0_59, %c0_60], %80 {strides = array<i32>} : memref<16x64xf32, #tpu.memory_space<vmem>>, vector<2x32xf32>,
    %82 = vector.extract_strided_slice %79 {offsets = [0, 32], sizes = [2, 32], strides = [1, 1]} : vector<2x64xf32> to vector<2x32xf32>
    %c14_61 = arith.constant 14 : index
    %c32 = arith.constant 32 : index
    %83 = vector.load %arg12[%c14_61, %c32] : memref<16x64xf32, #tpu.memory_space<vmem>>, vector<2x32xf32>
    tpu.vector_store %arg12[%c14_61, %c32], %82 {strides = array<i32>} : memref<16x64xf32, #tpu.memory_space<vmem>>, vector<2x32xf32>,
    %cst_62 = arith.constant dense<0.000000e+00> : vector<2x256xf32>
    %84 = tpu.matmul %79, %58, %cst_62 {dimension_numbers = #tpu.dot_dimension_numbers<[1], [0], [0], [1], [0, 0, 1, 1], [], []>} : vector<2x64xf32>, vector<64x256xf32>, vector<2x256xf32> -> vector<2x256xf32>
    %c2_63 = arith.constant 2 : index
    %c0_64 = arith.constant 0 : index
    %85 = vector.load %arg11[%c2_63, %c0_64] : memref<16x256xf32, #tpu.memory_space<vmem>>, vector<2x256xf32>
    %86 = arith.addf %84, %85 : vector<2x256xf32>
    %87 = vector.extract_strided_slice %86 {offsets = [0, 0], sizes = [2, 192], strides = [1, 1]} : vector<2x256xf32> to vector<2x192xf32>
    %88 = arith.negf %87 : vector<2x192xf32>
    %89 = math.exp %88 : vector<2x192xf32>
    %cst_65 = arith.constant 1.000000e+00 : f32
    %90 = vector.broadcast %cst_65 : f32 to vector<2x192xf32>
    %91 = arith.addf %90, %89 : vector<2x192xf32>
    %92 = arith.divf %90, %91 : vector<2x192xf32>
    %93 = vector.extract_strided_slice %92 {offsets = [0, 0], sizes = [2, 64], strides = [1, 1]} : vector<2x192xf32> to vector<2x64xf32>
    %94 = vector.extract_strided_slice %92 {offsets = [0, 64], sizes = [2, 64], strides = [1, 1]} : vector<2x192xf32> to vector<2x64xf32>
    %95 = vector.extract_strided_slice %92 {offsets = [0, 128], sizes = [2, 64], strides = [1, 1]} : vector<2x192xf32> to vector<2x64xf32>
    %96 = vector.extract_strided_slice %86 {offsets = [0, 192], sizes = [2, 64], strides = [1, 1]} : vector<2x256xf32> to vector<2x64xf32>
    %97 = math.tanh %96 : vector<2x64xf32>
    %98 = arith.mulf %94, %77 : vector<2x64xf32>
    %99 = arith.mulf %93, %97 : vector<2x64xf32>
    %100 = arith.addf %98, %99 : vector<2x64xf32>
    %101 = math.tanh %100 : vector<2x64xf32>
    %102 = arith.mulf %95, %101 : vector<2x64xf32>
    %103 = vector.extract_strided_slice %102 {offsets = [0, 0], sizes = [2, 32], strides = [1, 1]} : vector<2x64xf32> to vector<2x32xf32>
    %c2_66 = arith.constant 2 : index
    %c0_67 = arith.constant 0 : index
    %104 = vector.load %arg12[%c2_66, %c0_67] : memref<16x64xf32, #tpu.memory_space<vmem>>, vector<2x32xf32>
    tpu.vector_store %arg12[%c2_66, %c0_67], %103 {strides = array<i32>} : memref<16x64xf32, #tpu.memory_space<vmem>>, vector<2x32xf32>,
    %105 = vector.extract_strided_slice %102 {offsets = [0, 32], sizes = [2, 32], strides = [1, 1]} : vector<2x64xf32> to vector<2x32xf32>
    %c12_68 = arith.constant 12 : index
    %c32_69 = arith.constant 32 : index
    %106 = vector.load %arg12[%c12_68, %c32_69] : memref<16x64xf32, #tpu.memory_space<vmem>>, vector<2x32xf32>
    tpu.vector_store %arg12[%c12_68, %c32_69], %105 {strides = array<i32>} : memref<16x64xf32, #tpu.memory_space<vmem>>, vector<2x32xf32>,
    %cst_70 = arith.constant dense<0.000000e+00> : vector<2x256xf32>
    %107 = tpu.matmul %102, %58, %cst_70 {dimension_numbers = #tpu.dot_dimension_numbers<[1], [0], [0], [1], [0, 0, 1, 1], [], []>} : vector<2x64xf32>, vector<64x256xf32>, vector<2x256xf32> -> vector<2x256xf32>
    %c4_71 = arith.constant 4 : index
    %c0_72 = arith.constant 0 : index
    %108 = vector.load %arg11[%c4_71, %c0_72] : memref<16x256xf32, #tpu.memory_space<vmem>>, vector<2x256xf32>
    %109 = arith.addf %107, %108 : vector<2x256xf32>
    %110 = vector.extract_strided_slice %109 {offsets = [0, 0], sizes = [2, 192], strides = [1, 1]} : vector<2x256xf32> to vector<2x192xf32>
    %111 = arith.negf %110 : vector<2x192xf32>
    %112 = math.exp %111 : vector<2x192xf32>
    %cst_73 = arith.constant 1.000000e+00 : f32
    %113 = vector.broadcast %cst_73 : f32 to vector<2x192xf32>
    %114 = arith.addf %113, %112 : vector<2x192xf32>
    %115 = arith.divf %113, %114 : vector<2x192xf32>
    %116 = vector.extract_strided_slice %115 {offsets = [0, 0], sizes = [2, 64], strides = [1, 1]} : vector<2x192xf32> to vector<2x64xf32>
    %117 = vector.extract_strided_slice %115 {offsets = [0, 64], sizes = [2, 64], strides = [1, 1]} : vector<2x192xf32> to vector<2x64xf32>
    %118 = vector.extract_strided_slice %115 {offsets = [0, 128], sizes = [2, 64], strides = [1, 1]} : vector<2x192xf32> to vector<2x64xf32>
    %119 = vector.extract_strided_slice %109 {offsets = [0, 192], sizes = [2, 64], strides = [1, 1]} : vector<2x256xf32> to vector<2x64xf32>
    %120 = math.tanh %119 : vector<2x64xf32>
    %121 = arith.mulf %117, %100 : vector<2x64xf32>
    %122 = arith.mulf %116, %120 : vector<2x64xf32>
    %123 = arith.addf %121, %122 : vector<2x64xf32>
    %124 = math.tanh %123 : vector<2x64xf32>
    %125 = arith.mulf %118, %124 : vector<2x64xf32>
    %126 = vector.extract_strided_slice %125 {offsets = [0, 0], sizes = [2, 32], strides = [1, 1]} : vector<2x64xf32> to vector<2x32xf32>
    %c4_74 = arith.constant 4 : index
    %c0_75 = arith.constant 0 : index
    %127 = vector.load %arg12[%c4_74, %c0_75] : memref<16x64xf32, #tpu.memory_space<vmem>>, vector<2x32xf32>
    tpu.vector_store %arg12[%c4_74, %c0_75], %126 {strides = array<i32>} : memref<16x64xf32, #tpu.memory_space<vmem>>, vector<2x32xf32>,
    %128 = vector.extract_strided_slice %125 {offsets = [0, 32], sizes = [2, 32], strides = [1, 1]} : vector<2x64xf32> to vector<2x32xf32>
    %c10_76 = arith.constant 10 : index
    %c32_77 = arith.constant 32 : index
    %129 = vector.load %arg12[%c10_76, %c32_77] : memref<16x64xf32, #tpu.memory_space<vmem>>, vector<2x32xf32>
    tpu.vector_store %arg12[%c10_76, %c32_77], %128 {strides = array<i32>} : memref<16x64xf32, #tpu.memory_space<vmem>>, vector<2x32xf32>,
    %cst_78 = arith.constant dense<0.000000e+00> : vector<2x256xf32>
    %130 = tpu.matmul %125, %58, %cst_78 {dimension_numbers = #tpu.dot_dimension_numbers<[1], [0], [0], [1], [0, 0, 1, 1], [], []>} : vector<2x64xf32>, vector<64x256xf32>, vector<2x256xf32> -> vector<2x256xf32>
    %c6_79 = arith.constant 6 : index
    %c0_80 = arith.constant 0 : index
    %131 = vector.load %arg11[%c6_79, %c0_80] : memref<16x256xf32, #tpu.memory_space<vmem>>, vector<2x256xf32>
    %132 = arith.addf %130, %131 : vector<2x256xf32>
    %133 = vector.extract_strided_slice %132 {offsets = [0, 0], sizes = [2, 192], strides = [1, 1]} : vector<2x256xf32> to vector<2x192xf32>
    %134 = arith.negf %133 : vector<2x192xf32>
    %135 = math.exp %134 : vector<2x192xf32>
    %cst_81 = arith.constant 1.000000e+00 : f32
    %136 = vector.broadcast %cst_81 : f32 to vector<2x192xf32>
    %137 = arith.addf %136, %135 : vector<2x192xf32>
    %138 = arith.divf %136, %137 : vector<2x192xf32>
    %139 = vector.extract_strided_slice %138 {offsets = [0, 0], sizes = [2, 64], strides = [1, 1]} : vector<2x192xf32> to vector<2x64xf32>
    %140 = vector.extract_strided_slice %138 {offsets = [0, 64], sizes = [2, 64], strides = [1, 1]} : vector<2x192xf32> to vector<2x64xf32>
    %141 = vector.extract_strided_slice %138 {offsets = [0, 128], sizes = [2, 64], strides = [1, 1]} : vector<2x192xf32> to vector<2x64xf32>
    %142 = vector.extract_strided_slice %132 {offsets = [0, 192], sizes = [2, 64], strides = [1, 1]} : vector<2x256xf32> to vector<2x64xf32>
    %143 = math.tanh %142 : vector<2x64xf32>
    %144 = arith.mulf %140, %123 : vector<2x64xf32>
    %145 = arith.mulf %139, %143 : vector<2x64xf32>
    %146 = arith.addf %144, %145 : vector<2x64xf32>
    %147 = math.tanh %146 : vector<2x64xf32>
    %148 = arith.mulf %141, %147 : vector<2x64xf32>
    %149 = vector.extract_strided_slice %148 {offsets = [0, 0], sizes = [2, 32], strides = [1, 1]} : vector<2x64xf32> to vector<2x32xf32>
    %c6_82 = arith.constant 6 : index
    %c0_83 = arith.constant 0 : index
    %150 = vector.load %arg12[%c6_82, %c0_83] : memref<16x64xf32, #tpu.memory_space<vmem>>, vector<2x32xf32>
    tpu.vector_store %arg12[%c6_82, %c0_83], %149 {strides = array<i32>} : memref<16x64xf32, #tpu.memory_space<vmem>>, vector<2x32xf32>,
    %151 = vector.extract_strided_slice %148 {offsets = [0, 32], sizes = [2, 32], strides = [1, 1]} : vector<2x64xf32> to vector<2x32xf32>
    %c8_84 = arith.constant 8 : index
    %c32_85 = arith.constant 32 : index
    %152 = vector.load %arg12[%c8_84, %c32_85] : memref<16x64xf32, #tpu.memory_space<vmem>>, vector<2x32xf32>
    tpu.vector_store %arg12[%c8_84, %c32_85], %151 {strides = array<i32>} : memref<16x64xf32, #tpu.memory_space<vmem>>, vector<2x32xf32>,
    %cst_86 = arith.constant dense<0.000000e+00> : vector<2x256xf32>
    %153 = tpu.matmul %148, %58, %cst_86 {dimension_numbers = #tpu.dot_dimension_numbers<[1], [0], [0], [1], [0, 0, 1, 1], [], []>} : vector<2x64xf32>, vector<64x256xf32>, vector<2x256xf32> -> vector<2x256xf32>
    %c8_87 = arith.constant 8 : index
    %c0_88 = arith.constant 0 : index
    %154 = vector.load %arg11[%c8_87, %c0_88] : memref<16x256xf32, #tpu.memory_space<vmem>>, vector<2x256xf32>
    %155 = arith.addf %153, %154 : vector<2x256xf32>
    %156 = vector.extract_strided_slice %155 {offsets = [0, 0], sizes = [2, 192], strides = [1, 1]} : vector<2x256xf32> to vector<2x192xf32>
    %157 = arith.negf %156 : vector<2x192xf32>
    %158 = math.exp %157 : vector<2x192xf32>
    %cst_89 = arith.constant 1.000000e+00 : f32
    %159 = vector.broadcast %cst_89 : f32 to vector<2x192xf32>
    %160 = arith.addf %159, %158 : vector<2x192xf32>
    %161 = arith.divf %159, %160 : vector<2x192xf32>
    %162 = vector.extract_strided_slice %161 {offsets = [0, 0], sizes = [2, 64], strides = [1, 1]} : vector<2x192xf32> to vector<2x64xf32>
    %163 = vector.extract_strided_slice %161 {offsets = [0, 64], sizes = [2, 64], strides = [1, 1]} : vector<2x192xf32> to vector<2x64xf32>
    %164 = vector.extract_strided_slice %161 {offsets = [0, 128], sizes = [2, 64], strides = [1, 1]} : vector<2x192xf32> to vector<2x64xf32>
    %165 = vector.extract_strided_slice %155 {offsets = [0, 192], sizes = [2, 64], strides = [1, 1]} : vector<2x256xf32> to vector<2x64xf32>
    %166 = math.tanh %165 : vector<2x64xf32>
    %167 = arith.mulf %163, %146 : vector<2x64xf32>
    %168 = arith.mulf %162, %166 : vector<2x64xf32>
    %169 = arith.addf %167, %168 : vector<2x64xf32>
    %170 = math.tanh %169 : vector<2x64xf32>
    %171 = arith.mulf %164, %170 : vector<2x64xf32>
    %172 = vector.extract_strided_slice %171 {offsets = [0, 0], sizes = [2, 32], strides = [1, 1]} : vector<2x64xf32> to vector<2x32xf32>
    %c8_90 = arith.constant 8 : index
    %c0_91 = arith.constant 0 : index
    %173 = vector.load %arg12[%c8_90, %c0_91] : memref<16x64xf32, #tpu.memory_space<vmem>>, vector<2x32xf32>
    tpu.vector_store %arg12[%c8_90, %c0_91], %172 {strides = array<i32>} : memref<16x64xf32, #tpu.memory_space<vmem>>, vector<2x32xf32>,
    %174 = vector.extract_strided_slice %171 {offsets = [0, 32], sizes = [2, 32], strides = [1, 1]} : vector<2x64xf32> to vector<2x32xf32>
    %c6_92 = arith.constant 6 : index
    %c32_93 = arith.constant 32 : index
    %175 = vector.load %arg12[%c6_92, %c32_93] : memref<16x64xf32, #tpu.memory_space<vmem>>, vector<2x32xf32>
    tpu.vector_store %arg12[%c6_92, %c32_93], %174 {strides = array<i32>} : memref<16x64xf32, #tpu.memory_space<vmem>>, vector<2x32xf32>,
    %cst_94 = arith.constant dense<0.000000e+00> : vector<2x256xf32>
    %176 = tpu.matmul %171, %58, %cst_94 {dimension_numbers = #tpu.dot_dimension_numbers<[1], [0], [0], [1], [0, 0, 1, 1], [], []>} : vector<2x64xf32>, vector<64x256xf32>, vector<2x256xf32> -> vector<2x256xf32>
    %c10_95 = arith.constant 10 : index
    %c0_96 = arith.constant 0 : index
    %177 = vector.load %arg11[%c10_95, %c0_96] : memref<16x256xf32, #tpu.memory_space<vmem>>, vector<2x256xf32>
    %178 = arith.addf %176, %177 : vector<2x256xf32>
    %179 = vector.extract_strided_slice %178 {offsets = [0, 0], sizes = [2, 192], strides = [1, 1]} : vector<2x256xf32> to vector<2x192xf32>
    %180 = arith.negf %179 : vector<2x192xf32>
    %181 = math.exp %180 : vector<2x192xf32>
    %cst_97 = arith.constant 1.000000e+00 : f32
    %182 = vector.broadcast %cst_97 : f32 to vector<2x192xf32>
    %183 = arith.addf %182, %181 : vector<2x192xf32>
    %184 = arith.divf %182, %183 : vector<2x192xf32>
    %185 = vector.extract_strided_slice %184 {offsets = [0, 0], sizes = [2, 64], strides = [1, 1]} : vector<2x192xf32> to vector<2x64xf32>
    %186 = vector.extract_strided_slice %184 {offsets = [0, 64], sizes = [2, 64], strides = [1, 1]} : vector<2x192xf32> to vector<2x64xf32>
    %187 = vector.extract_strided_slice %184 {offsets = [0, 128], sizes = [2, 64], strides = [1, 1]} : vector<2x192xf32> to vector<2x64xf32>
    %188 = vector.extract_strided_slice %178 {offsets = [0, 192], sizes = [2, 64], strides = [1, 1]} : vector<2x256xf32> to vector<2x64xf32>
    %189 = math.tanh %188 : vector<2x64xf32>
    %190 = arith.mulf %186, %169 : vector<2x64xf32>
    %191 = arith.mulf %185, %189 : vector<2x64xf32>
    %192 = arith.addf %190, %191 : vector<2x64xf32>
    %193 = math.tanh %192 : vector<2x64xf32>
    %194 = arith.mulf %187, %193 : vector<2x64xf32>
    %195 = vector.extract_strided_slice %194 {offsets = [0, 0], sizes = [2, 32], strides = [1, 1]} : vector<2x64xf32> to vector<2x32xf32>
    %c10_98 = arith.constant 10 : index
    %c0_99 = arith.constant 0 : index
    %196 = vector.load %arg12[%c10_98, %c0_99] : memref<16x64xf32, #tpu.memory_space<vmem>>, vector<2x32xf32>
    tpu.vector_store %arg12[%c10_98, %c0_99], %195 {strides = array<i32>} : memref<16x64xf32, #tpu.memory_space<vmem>>, vector<2x32xf32>,
    %197 = vector.extract_strided_slice %194 {offsets = [0, 32], sizes = [2, 32], strides = [1, 1]} : vector<2x64xf32> to vector<2x32xf32>
    %c4_100 = arith.constant 4 : index
    %c32_101 = arith.constant 32 : index
    %198 = vector.load %arg12[%c4_100, %c32_101] : memref<16x64xf32, #tpu.memory_space<vmem>>, vector<2x32xf32>
    tpu.vector_store %arg12[%c4_100, %c32_101], %197 {strides = array<i32>} : memref<16x64xf32, #tpu.memory_space<vmem>>, vector<2x32xf32>,
    %cst_102 = arith.constant dense<0.000000e+00> : vector<2x256xf32>
    %199 = tpu.matmul %194, %58, %cst_102 {dimension_numbers = #tpu.dot_dimension_numbers<[1], [0], [0], [1], [0, 0, 1, 1], [], []>} : vector<2x64xf32>, vector<64x256xf32>, vector<2x256xf32> -> vector<2x256xf32>
    %c12_103 = arith.constant 12 : index
    %c0_104 = arith.constant 0 : index
    %200 = vector.load %arg11[%c12_103, %c0_104] : memref<16x256xf32, #tpu.memory_space<vmem>>, vector<2x256xf32>
    %201 = arith.addf %199, %200 : vector<2x256xf32>
    %202 = vector.extract_strided_slice %201 {offsets = [0, 0], sizes = [2, 192], strides = [1, 1]} : vector<2x256xf32> to vector<2x192xf32>
    %203 = arith.negf %202 : vector<2x192xf32>
    %204 = math.exp %203 : vector<2x192xf32>
    %cst_105 = arith.constant 1.000000e+00 : f32
    %205 = vector.broadcast %cst_105 : f32 to vector<2x192xf32>
    %206 = arith.addf %205, %204 : vector<2x192xf32>
    %207 = arith.divf %205, %206 : vector<2x192xf32>
    %208 = vector.extract_strided_slice %207 {offsets = [0, 0], sizes = [2, 64], strides = [1, 1]} : vector<2x192xf32> to vector<2x64xf32>
    %209 = vector.extract_strided_slice %207 {offsets = [0, 64], sizes = [2, 64], strides = [1, 1]} : vector<2x192xf32> to vector<2x64xf32>
    %210 = vector.extract_strided_slice %207 {offsets = [0, 128], sizes = [2, 64], strides = [1, 1]} : vector<2x192xf32> to vector<2x64xf32>
    %211 = vector.extract_strided_slice %201 {offsets = [0, 192], sizes = [2, 64], strides = [1, 1]} : vector<2x256xf32> to vector<2x64xf32>
    %212 = math.tanh %211 : vector<2x64xf32>
    %213 = arith.mulf %209, %192 : vector<2x64xf32>
    %214 = arith.mulf %208, %212 : vector<2x64xf32>
    %215 = arith.addf %213, %214 : vector<2x64xf32>
    %216 = math.tanh %215 : vector<2x64xf32>
    %217 = arith.mulf %210, %216 : vector<2x64xf32>
    %218 = vector.extract_strided_slice %217 {offsets = [0, 0], sizes = [2, 32], strides = [1, 1]} : vector<2x64xf32> to vector<2x32xf32>
    %c12_106 = arith.constant 12 : index
    %c0_107 = arith.constant 0 : index
    %219 = vector.load %arg12[%c12_106, %c0_107] : memref<16x64xf32, #tpu.memory_space<vmem>>, vector<2x32xf32>
    tpu.vector_store %arg12[%c12_106, %c0_107], %218 {strides = array<i32>} : memref<16x64xf32, #tpu.memory_space<vmem>>, vector<2x32xf32>,
    %220 = vector.extract_strided_slice %217 {offsets = [0, 32], sizes = [2, 32], strides = [1, 1]} : vector<2x64xf32> to vector<2x32xf32>
    %c2_108 = arith.constant 2 : index
    %c32_109 = arith.constant 32 : index
    %221 = vector.load %arg12[%c2_108, %c32_109] : memref<16x64xf32, #tpu.memory_space<vmem>>, vector<2x32xf32>
    tpu.vector_store %arg12[%c2_108, %c32_109], %220 {strides = array<i32>} : memref<16x64xf32, #tpu.memory_space<vmem>>, vector<2x32xf32>,
    %cst_110 = arith.constant dense<0.000000e+00> : vector<2x256xf32>
    %222 = tpu.matmul %217, %58, %cst_110 {dimension_numbers = #tpu.dot_dimension_numbers<[1], [0], [0], [1], [0, 0, 1, 1], [], []>} : vector<2x64xf32>, vector<64x256xf32>, vector<2x256xf32> -> vector<2x256xf32>
    %c14_111 = arith.constant 14 : index
    %c0_112 = arith.constant 0 : index
    %223 = vector.load %arg11[%c14_111, %c0_112] : memref<16x256xf32, #tpu.memory_space<vmem>>, vector<2x256xf32>
    %224 = arith.addf %222, %223 : vector<2x256xf32>
    %225 = vector.extract_strided_slice %224 {offsets = [0, 0], sizes = [2, 192], strides = [1, 1]} : vector<2x256xf32> to vector<2x192xf32>
    %226 = arith.negf %225 : vector<2x192xf32>
    %227 = math.exp %226 : vector<2x192xf32>
    %cst_113 = arith.constant 1.000000e+00 : f32
    %228 = vector.broadcast %cst_113 : f32 to vector<2x192xf32>
    %229 = arith.addf %228, %227 : vector<2x192xf32>
    %230 = arith.divf %228, %229 : vector<2x192xf32>
    %231 = vector.extract_strided_slice %230 {offsets = [0, 0], sizes = [2, 64], strides = [1, 1]} : vector<2x192xf32> to vector<2x64xf32>
    %232 = vector.extract_strided_slice %230 {offsets = [0, 64], sizes = [2, 64], strides = [1, 1]} : vector<2x192xf32> to vector<2x64xf32>
    %233 = vector.extract_strided_slice %230 {offsets = [0, 128], sizes = [2, 64], strides = [1, 1]} : vector<2x192xf32> to vector<2x64xf32>
    %234 = vector.extract_strided_slice %224 {offsets = [0, 192], sizes = [2, 64], strides = [1, 1]} : vector<2x256xf32> to vector<2x64xf32>
    %235 = math.tanh %234 : vector<2x64xf32>
    %236 = arith.mulf %232, %215 : vector<2x64xf32>
    %237 = arith.mulf %231, %235 : vector<2x64xf32>
    %238 = arith.addf %236, %237 : vector<2x64xf32>
    %239 = math.tanh %238 : vector<2x64xf32>
    %240 = arith.mulf %233, %239 : vector<2x64xf32>
    %241 = vector.extract_strided_slice %240 {offsets = [0, 0], sizes = [2, 32], strides = [1, 1]} : vector<2x64xf32> to vector<2x32xf32>
    %c14_114 = arith.constant 14 : index
    %c0_115 = arith.constant 0 : index
    %242 = vector.load %arg12[%c14_114, %c0_115] : memref<16x64xf32, #tpu.memory_space<vmem>>, vector<2x32xf32>
    tpu.vector_store %arg12[%c14_114, %c0_115], %241 {strides = array<i32>} : memref<16x64xf32, #tpu.memory_space<vmem>>, vector<2x32xf32>,
    %243 = vector.extract_strided_slice %240 {offsets = [0, 32], sizes = [2, 32], strides = [1, 1]} : vector<2x64xf32> to vector<2x32xf32>
    %c0_116 = arith.constant 0 : index
    %c32_117 = arith.constant 32 : index
    %244 = vector.load %arg12[%c0_116, %c32_117] : memref<16x64xf32, #tpu.memory_space<vmem>>, vector<2x32xf32>
    tpu.vector_store %arg12[%c0_116, %c32_117], %243 {strides = array<i32>} : memref<16x64xf32, #tpu.memory_space<vmem>>, vector<2x32xf32>,
    %c0_118 = arith.constant 0 : index
    %c0_119 = arith.constant 0 : index
    %245 = vector.load %arg12[%c0_118, %c0_119] : memref<16x64xf32, #tpu.memory_space<vmem>>, vector<16x64xf32>
    %c0_120 = arith.constant 0 : index
    %c0_121 = arith.constant 0 : index
    %246 = vector.load %arg4[%c0_120, %c0_121] : memref<64x256xf32, #tpu.memory_space<vmem>>, vector<64x256xf32>
    %cst_122 = arith.constant dense<0.000000e+00> : vector<16x256xf32>
    %247 = tpu.matmul %245, %246, %cst_122 {dimension_numbers = #tpu.dot_dimension_numbers<[1], [0], [0], [1], [0, 0, 1, 1], [], []>} : vector<16x64xf32>, vector<64x256xf32>, vector<16x256xf32> -> vector<16x256xf32>
    %c0_123 = arith.constant 0 : index
    %c0_124 = arith.constant 0 : index
    %248 = vector.load %arg6[%c0_123, %c0_124] : memref<1x256xf32, #tpu.memory_space<vmem>>, vector<1x256xf32>
    %249 = vector.broadcast %248 : vector<1x256xf32> to vector<16x256xf32>
    %250 = arith.addf %247, %249 : vector<16x256xf32>
    %c0_125 = arith.constant 0 : index
    %c0_126 = arith.constant 0 : index
    %251 = vector.load %arg10[%c0_125, %c0_126] : memref<16x256xf32, #tpu.memory_space<vmem>>, vector<16x256xf32>
    tpu.vector_store %arg10[%c0_125, %c0_126], %250 {strides = array<i32>} : memref<16x256xf32, #tpu.memory_space<vmem>>, vector<16x256xf32>,
    %c0_127 = arith.constant 0 : index
    %c0_128 = arith.constant 0 : index
    %252 = vector.load %arg10[%c0_127, %c0_128] : memref<16x256xf32, #tpu.memory_space<vmem>>, vector<2x256xf32>
    %c14_129 = arith.constant 14 : index
    %c0_130 = arith.constant 0 : index
    %253 = vector.load %arg10[%c14_129, %c0_130] : memref<16x256xf32, #tpu.memory_space<vmem>>, vector<2x256xf32>
    %254 = arith.select %18, %252, %253 : vector<2x256xi1>, vector<2x256xf32>
    %c0_131 = arith.constant 0 : index
    %c0_132 = arith.constant 0 : index
    %255 = vector.load %arg11[%c0_131, %c0_132] : memref<16x256xf32, #tpu.memory_space<vmem>>, vector<2x256xf32>
    tpu.vector_store %arg11[%c0_131, %c0_132], %254 {strides = array<i32>} : memref<16x256xf32, #tpu.memory_space<vmem>>, vector<2x256xf32>,
    %c2_133 = arith.constant 2 : index
    %c0_134 = arith.constant 0 : index
    %256 = vector.load %arg10[%c2_133, %c0_134] : memref<16x256xf32, #tpu.memory_space<vmem>>, vector<2x256xf32>
    %c12_135 = arith.constant 12 : index
    %c0_136 = arith.constant 0 : index
    %257 = vector.load %arg10[%c12_135, %c0_136] : memref<16x256xf32, #tpu.memory_space<vmem>>, vector<2x256xf32>
    %258 = arith.select %18, %256, %257 : vector<2x256xi1>, vector<2x256xf32>
    %c2_137 = arith.constant 2 : index
    %c0_138 = arith.constant 0 : index
    %259 = vector.load %arg11[%c2_137, %c0_138] : memref<16x256xf32, #tpu.memory_space<vmem>>, vector<2x256xf32>
    tpu.vector_store %arg11[%c2_137, %c0_138], %258 {strides = array<i32>} : memref<16x256xf32, #tpu.memory_space<vmem>>, vector<2x256xf32>,
    %c4_139 = arith.constant 4 : index
    %c0_140 = arith.constant 0 : index
    %260 = vector.load %arg10[%c4_139, %c0_140] : memref<16x256xf32, #tpu.memory_space<vmem>>, vector<2x256xf32>
    %c10_141 = arith.constant 10 : index
    %c0_142 = arith.constant 0 : index
    %261 = vector.load %arg10[%c10_141, %c0_142] : memref<16x256xf32, #tpu.memory_space<vmem>>, vector<2x256xf32>
    %262 = arith.select %18, %260, %261 : vector<2x256xi1>, vector<2x256xf32>
    %c4_143 = arith.constant 4 : index
    %c0_144 = arith.constant 0 : index
    %263 = vector.load %arg11[%c4_143, %c0_144] : memref<16x256xf32, #tpu.memory_space<vmem>>, vector<2x256xf32>
    tpu.vector_store %arg11[%c4_143, %c0_144], %262 {strides = array<i32>} : memref<16x256xf32, #tpu.memory_space<vmem>>, vector<2x256xf32>,
    %c6_145 = arith.constant 6 : index
    %c0_146 = arith.constant 0 : index
    %264 = vector.load %arg10[%c6_145, %c0_146] : memref<16x256xf32, #tpu.memory_space<vmem>>, vector<2x256xf32>
    %c8_147 = arith.constant 8 : index
    %c0_148 = arith.constant 0 : index
    %265 = vector.load %arg10[%c8_147, %c0_148] : memref<16x256xf32, #tpu.memory_space<vmem>>, vector<2x256xf32>
    %266 = arith.select %18, %264, %265 : vector<2x256xi1>, vector<2x256xf32>
    %c6_149 = arith.constant 6 : index
    %c0_150 = arith.constant 0 : index
    %267 = vector.load %arg11[%c6_149, %c0_150] : memref<16x256xf32, #tpu.memory_space<vmem>>, vector<2x256xf32>
    tpu.vector_store %arg11[%c6_149, %c0_150], %266 {strides = array<i32>} : memref<16x256xf32, #tpu.memory_space<vmem>>, vector<2x256xf32>,
    %c8_151 = arith.constant 8 : index
    %c0_152 = arith.constant 0 : index
    %268 = vector.load %arg10[%c8_151, %c0_152] : memref<16x256xf32, #tpu.memory_space<vmem>>, vector<2x256xf32>
    %c6_153 = arith.constant 6 : index
    %c0_154 = arith.constant 0 : index
    %269 = vector.load %arg10[%c6_153, %c0_154] : memref<16x256xf32, #tpu.memory_space<vmem>>, vector<2x256xf32>
    %270 = arith.select %18, %268, %269 : vector<2x256xi1>, vector<2x256xf32>
    %c8_155 = arith.constant 8 : index
    %c0_156 = arith.constant 0 : index
    %271 = vector.load %arg11[%c8_155, %c0_156] : memref<16x256xf32, #tpu.memory_space<vmem>>, vector<2x256xf32>
    tpu.vector_store %arg11[%c8_155, %c0_156], %270 {strides = array<i32>} : memref<16x256xf32, #tpu.memory_space<vmem>>, vector<2x256xf32>,
    %c10_157 = arith.constant 10 : index
    %c0_158 = arith.constant 0 : index
    %272 = vector.load %arg10[%c10_157, %c0_158] : memref<16x256xf32, #tpu.memory_space<vmem>>, vector<2x256xf32>
    %c4_159 = arith.constant 4 : index
    %c0_160 = arith.constant 0 : index
    %273 = vector.load %arg10[%c4_159, %c0_160] : memref<16x256xf32, #tpu.memory_space<vmem>>, vector<2x256xf32>
    %274 = arith.select %18, %272, %273 : vector<2x256xi1>, vector<2x256xf32>
    %c10_161 = arith.constant 10 : index
    %c0_162 = arith.constant 0 : index
    %275 = vector.load %arg11[%c10_161, %c0_162] : memref<16x256xf32, #tpu.memory_space<vmem>>, vector<2x256xf32>
    tpu.vector_store %arg11[%c10_161, %c0_162], %274 {strides = array<i32>} : memref<16x256xf32, #tpu.memory_space<vmem>>, vector<2x256xf32>,
    %c12_163 = arith.constant 12 : index
    %c0_164 = arith.constant 0 : index
    %276 = vector.load %arg10[%c12_163, %c0_164] : memref<16x256xf32, #tpu.memory_space<vmem>>, vector<2x256xf32>
    %c2_165 = arith.constant 2 : index
    %c0_166 = arith.constant 0 : index
    %277 = vector.load %arg10[%c2_165, %c0_166] : memref<16x256xf32, #tpu.memory_space<vmem>>, vector<2x256xf32>
    %278 = arith.select %18, %276, %277 : vector<2x256xi1>, vector<2x256xf32>
    %c12_167 = arith.constant 12 : index
    %c0_168 = arith.constant 0 : index
    %279 = vector.load %arg11[%c12_167, %c0_168] : memref<16x256xf32, #tpu.memory_space<vmem>>, vector<2x256xf32>
    tpu.vector_store %arg11[%c12_167, %c0_168], %278 {strides = array<i32>} : memref<16x256xf32, #tpu.memory_space<vmem>>, vector<2x256xf32>,
    %c14_169 = arith.constant 14 : index
    %c0_170 = arith.constant 0 : index
    %280 = vector.load %arg10[%c14_169, %c0_170] : memref<16x256xf32, #tpu.memory_space<vmem>>, vector<2x256xf32>
    %c0_171 = arith.constant 0 : index
    %c0_172 = arith.constant 0 : index
    %281 = vector.load %arg10[%c0_171, %c0_172] : memref<16x256xf32, #tpu.memory_space<vmem>>, vector<2x256xf32>
    %282 = arith.select %18, %280, %281 : vector<2x256xi1>, vector<2x256xf32>
    %c14_173 = arith.constant 14 : index
    %c0_174 = arith.constant 0 : index
    %283 = vector.load %arg11[%c14_173, %c0_174] : memref<16x256xf32, #tpu.memory_space<vmem>>, vector<2x256xf32>
    tpu.vector_store %arg11[%c14_173, %c0_174], %282 {strides = array<i32>} : memref<16x256xf32, #tpu.memory_space<vmem>>, vector<2x256xf32>,
    %c0_175 = arith.constant 0 : index
    %c0_176 = arith.constant 0 : index
    %284 = vector.load %arg5[%c0_175, %c0_176] : memref<64x256xf32, #tpu.memory_space<vmem>>, vector<64x256xf32>
    %cst_177 = arith.constant 0.000000e+00 : f32
    %285 = vector.broadcast %cst_177 : f32 to vector<2x64xf32>
    %cst_178 = arith.constant 0.000000e+00 : f32
    %286 = vector.broadcast %cst_178 : f32 to vector<2x64xf32>
    %cst_179 = arith.constant dense<0.000000e+00> : vector<2x256xf32>
    %287 = tpu.matmul %285, %284, %cst_179 {dimension_numbers = #tpu.dot_dimension_numbers<[1], [0], [0], [1], [0, 0, 1, 1], [], []>} : vector<2x64xf32>, vector<64x256xf32>, vector<2x256xf32> -> vector<2x256xf32>
    %c0_180 = arith.constant 0 : index
    %c0_181 = arith.constant 0 : index
    %288 = vector.load %arg11[%c0_180, %c0_181] : memref<16x256xf32, #tpu.memory_space<vmem>>, vector<2x256xf32>
    %289 = arith.addf %287, %288 : vector<2x256xf32>
    %290 = vector.extract_strided_slice %289 {offsets = [0, 0], sizes = [2, 192], strides = [1, 1]} : vector<2x256xf32> to vector<2x192xf32>
    %291 = arith.negf %290 : vector<2x192xf32>
    %292 = math.exp %291 : vector<2x192xf32>
    %cst_182 = arith.constant 1.000000e+00 : f32
    %293 = vector.broadcast %cst_182 : f32 to vector<2x192xf32>
    %294 = arith.addf %293, %292 : vector<2x192xf32>
    %295 = arith.divf %293, %294 : vector<2x192xf32>
    %296 = vector.extract_strided_slice %295 {offsets = [0, 0], sizes = [2, 64], strides = [1, 1]} : vector<2x192xf32> to vector<2x64xf32>
    %297 = vector.extract_strided_slice %295 {offsets = [0, 64], sizes = [2, 64], strides = [1, 1]} : vector<2x192xf32> to vector<2x64xf32>
    %298 = vector.extract_strided_slice %295 {offsets = [0, 128], sizes = [2, 64], strides = [1, 1]} : vector<2x192xf32> to vector<2x64xf32>
    %299 = vector.extract_strided_slice %289 {offsets = [0, 192], sizes = [2, 64], strides = [1, 1]} : vector<2x256xf32> to vector<2x64xf32>
    %300 = math.tanh %299 : vector<2x64xf32>
    %301 = arith.mulf %297, %286 : vector<2x64xf32>
    %302 = arith.mulf %296, %300 : vector<2x64xf32>
    %303 = arith.addf %301, %302 : vector<2x64xf32>
    %304 = math.tanh %303 : vector<2x64xf32>
    %305 = arith.mulf %298, %304 : vector<2x64xf32>
    %cst_183 = arith.constant dense<0.000000e+00> : vector<2x256xf32>
    %306 = tpu.matmul %305, %284, %cst_183 {dimension_numbers = #tpu.dot_dimension_numbers<[1], [0], [0], [1], [0, 0, 1, 1], [], []>} : vector<2x64xf32>, vector<64x256xf32>, vector<2x256xf32> -> vector<2x256xf32>
    %c2_184 = arith.constant 2 : index
    %c0_185 = arith.constant 0 : index
    %307 = vector.load %arg11[%c2_184, %c0_185] : memref<16x256xf32, #tpu.memory_space<vmem>>, vector<2x256xf32>
    %308 = arith.addf %306, %307 : vector<2x256xf32>
    %309 = vector.extract_strided_slice %308 {offsets = [0, 0], sizes = [2, 192], strides = [1, 1]} : vector<2x256xf32> to vector<2x192xf32>
    %310 = arith.negf %309 : vector<2x192xf32>
    %311 = math.exp %310 : vector<2x192xf32>
    %cst_186 = arith.constant 1.000000e+00 : f32
    %312 = vector.broadcast %cst_186 : f32 to vector<2x192xf32>
    %313 = arith.addf %312, %311 : vector<2x192xf32>
    %314 = arith.divf %312, %313 : vector<2x192xf32>
    %315 = vector.extract_strided_slice %314 {offsets = [0, 0], sizes = [2, 64], strides = [1, 1]} : vector<2x192xf32> to vector<2x64xf32>
    %316 = vector.extract_strided_slice %314 {offsets = [0, 64], sizes = [2, 64], strides = [1, 1]} : vector<2x192xf32> to vector<2x64xf32>
    %317 = vector.extract_strided_slice %314 {offsets = [0, 128], sizes = [2, 64], strides = [1, 1]} : vector<2x192xf32> to vector<2x64xf32>
    %318 = vector.extract_strided_slice %308 {offsets = [0, 192], sizes = [2, 64], strides = [1, 1]} : vector<2x256xf32> to vector<2x64xf32>
    %319 = math.tanh %318 : vector<2x64xf32>
    %320 = arith.mulf %316, %303 : vector<2x64xf32>
    %321 = arith.mulf %315, %319 : vector<2x64xf32>
    %322 = arith.addf %320, %321 : vector<2x64xf32>
    %323 = math.tanh %322 : vector<2x64xf32>
    %324 = arith.mulf %317, %323 : vector<2x64xf32>
    %cst_187 = arith.constant dense<0.000000e+00> : vector<2x256xf32>
    %325 = tpu.matmul %324, %284, %cst_187 {dimension_numbers = #tpu.dot_dimension_numbers<[1], [0], [0], [1], [0, 0, 1, 1], [], []>} : vector<2x64xf32>, vector<64x256xf32>, vector<2x256xf32> -> vector<2x256xf32>
    %c4_188 = arith.constant 4 : index
    %c0_189 = arith.constant 0 : index
    %326 = vector.load %arg11[%c4_188, %c0_189] : memref<16x256xf32, #tpu.memory_space<vmem>>, vector<2x256xf32>
    %327 = arith.addf %325, %326 : vector<2x256xf32>
    %328 = vector.extract_strided_slice %327 {offsets = [0, 0], sizes = [2, 192], strides = [1, 1]} : vector<2x256xf32> to vector<2x192xf32>
    %329 = arith.negf %328 : vector<2x192xf32>
    %330 = math.exp %329 : vector<2x192xf32>
    %cst_190 = arith.constant 1.000000e+00 : f32
    %331 = vector.broadcast %cst_190 : f32 to vector<2x192xf32>
    %332 = arith.addf %331, %330 : vector<2x192xf32>
    %333 = arith.divf %331, %332 : vector<2x192xf32>
    %334 = vector.extract_strided_slice %333 {offsets = [0, 0], sizes = [2, 64], strides = [1, 1]} : vector<2x192xf32> to vector<2x64xf32>
    %335 = vector.extract_strided_slice %333 {offsets = [0, 64], sizes = [2, 64], strides = [1, 1]} : vector<2x192xf32> to vector<2x64xf32>
    %336 = vector.extract_strided_slice %333 {offsets = [0, 128], sizes = [2, 64], strides = [1, 1]} : vector<2x192xf32> to vector<2x64xf32>
    %337 = vector.extract_strided_slice %327 {offsets = [0, 192], sizes = [2, 64], strides = [1, 1]} : vector<2x256xf32> to vector<2x64xf32>
    %338 = math.tanh %337 : vector<2x64xf32>
    %339 = arith.mulf %335, %322 : vector<2x64xf32>
    %340 = arith.mulf %334, %338 : vector<2x64xf32>
    %341 = arith.addf %339, %340 : vector<2x64xf32>
    %342 = math.tanh %341 : vector<2x64xf32>
    %343 = arith.mulf %336, %342 : vector<2x64xf32>
    %cst_191 = arith.constant dense<0.000000e+00> : vector<2x256xf32>
    %344 = tpu.matmul %343, %284, %cst_191 {dimension_numbers = #tpu.dot_dimension_numbers<[1], [0], [0], [1], [0, 0, 1, 1], [], []>} : vector<2x64xf32>, vector<64x256xf32>, vector<2x256xf32> -> vector<2x256xf32>
    %c6_192 = arith.constant 6 : index
    %c0_193 = arith.constant 0 : index
    %345 = vector.load %arg11[%c6_192, %c0_193] : memref<16x256xf32, #tpu.memory_space<vmem>>, vector<2x256xf32>
    %346 = arith.addf %344, %345 : vector<2x256xf32>
    %347 = vector.extract_strided_slice %346 {offsets = [0, 0], sizes = [2, 192], strides = [1, 1]} : vector<2x256xf32> to vector<2x192xf32>
    %348 = arith.negf %347 : vector<2x192xf32>
    %349 = math.exp %348 : vector<2x192xf32>
    %cst_194 = arith.constant 1.000000e+00 : f32
    %350 = vector.broadcast %cst_194 : f32 to vector<2x192xf32>
    %351 = arith.addf %350, %349 : vector<2x192xf32>
    %352 = arith.divf %350, %351 : vector<2x192xf32>
    %353 = vector.extract_strided_slice %352 {offsets = [0, 0], sizes = [2, 64], strides = [1, 1]} : vector<2x192xf32> to vector<2x64xf32>
    %354 = vector.extract_strided_slice %352 {offsets = [0, 64], sizes = [2, 64], strides = [1, 1]} : vector<2x192xf32> to vector<2x64xf32>
    %355 = vector.extract_strided_slice %352 {offsets = [0, 128], sizes = [2, 64], strides = [1, 1]} : vector<2x192xf32> to vector<2x64xf32>
    %356 = vector.extract_strided_slice %346 {offsets = [0, 192], sizes = [2, 64], strides = [1, 1]} : vector<2x256xf32> to vector<2x64xf32>
    %357 = math.tanh %356 : vector<2x64xf32>
    %358 = arith.mulf %354, %341 : vector<2x64xf32>
    %359 = arith.mulf %353, %357 : vector<2x64xf32>
    %360 = arith.addf %358, %359 : vector<2x64xf32>
    %361 = math.tanh %360 : vector<2x64xf32>
    %362 = arith.mulf %355, %361 : vector<2x64xf32>
    %cst_195 = arith.constant dense<0.000000e+00> : vector<2x256xf32>
    %363 = tpu.matmul %362, %284, %cst_195 {dimension_numbers = #tpu.dot_dimension_numbers<[1], [0], [0], [1], [0, 0, 1, 1], [], []>} : vector<2x64xf32>, vector<64x256xf32>, vector<2x256xf32> -> vector<2x256xf32>
    %c8_196 = arith.constant 8 : index
    %c0_197 = arith.constant 0 : index
    %364 = vector.load %arg11[%c8_196, %c0_197] : memref<16x256xf32, #tpu.memory_space<vmem>>, vector<2x256xf32>
    %365 = arith.addf %363, %364 : vector<2x256xf32>
    %366 = vector.extract_strided_slice %365 {offsets = [0, 0], sizes = [2, 192], strides = [1, 1]} : vector<2x256xf32> to vector<2x192xf32>
    %367 = arith.negf %366 : vector<2x192xf32>
    %368 = math.exp %367 : vector<2x192xf32>
    %cst_198 = arith.constant 1.000000e+00 : f32
    %369 = vector.broadcast %cst_198 : f32 to vector<2x192xf32>
    %370 = arith.addf %369, %368 : vector<2x192xf32>
    %371 = arith.divf %369, %370 : vector<2x192xf32>
    %372 = vector.extract_strided_slice %371 {offsets = [0, 0], sizes = [2, 64], strides = [1, 1]} : vector<2x192xf32> to vector<2x64xf32>
    %373 = vector.extract_strided_slice %371 {offsets = [0, 64], sizes = [2, 64], strides = [1, 1]} : vector<2x192xf32> to vector<2x64xf32>
    %374 = vector.extract_strided_slice %371 {offsets = [0, 128], sizes = [2, 64], strides = [1, 1]} : vector<2x192xf32> to vector<2x64xf32>
    %375 = vector.extract_strided_slice %365 {offsets = [0, 192], sizes = [2, 64], strides = [1, 1]} : vector<2x256xf32> to vector<2x64xf32>
    %376 = math.tanh %375 : vector<2x64xf32>
    %377 = arith.mulf %373, %360 : vector<2x64xf32>
    %378 = arith.mulf %372, %376 : vector<2x64xf32>
    %379 = arith.addf %377, %378 : vector<2x64xf32>
    %380 = math.tanh %379 : vector<2x64xf32>
    %381 = arith.mulf %374, %380 : vector<2x64xf32>
    %cst_199 = arith.constant dense<0.000000e+00> : vector<2x256xf32>
    %382 = tpu.matmul %381, %284, %cst_199 {dimension_numbers = #tpu.dot_dimension_numbers<[1], [0], [0], [1], [0, 0, 1, 1], [], []>} : vector<2x64xf32>, vector<64x256xf32>, vector<2x256xf32> -> vector<2x256xf32>
    %c10_200 = arith.constant 10 : index
    %c0_201 = arith.constant 0 : index
    %383 = vector.load %arg11[%c10_200, %c0_201] : memref<16x256xf32, #tpu.memory_space<vmem>>, vector<2x256xf32>
    %384 = arith.addf %382, %383 : vector<2x256xf32>
    %385 = vector.extract_strided_slice %384 {offsets = [0, 0], sizes = [2, 192], strides = [1, 1]} : vector<2x256xf32> to vector<2x192xf32>
    %386 = arith.negf %385 : vector<2x192xf32>
    %387 = math.exp %386 : vector<2x192xf32>
    %cst_202 = arith.constant 1.000000e+00 : f32
    %388 = vector.broadcast %cst_202 : f32 to vector<2x192xf32>
    %389 = arith.addf %388, %387 : vector<2x192xf32>
    %390 = arith.divf %388, %389 : vector<2x192xf32>
    %391 = vector.extract_strided_slice %390 {offsets = [0, 0], sizes = [2, 64], strides = [1, 1]} : vector<2x192xf32> to vector<2x64xf32>
    %392 = vector.extract_strided_slice %390 {offsets = [0, 64], sizes = [2, 64], strides = [1, 1]} : vector<2x192xf32> to vector<2x64xf32>
    %393 = vector.extract_strided_slice %390 {offsets = [0, 128], sizes = [2, 64], strides = [1, 1]} : vector<2x192xf32> to vector<2x64xf32>
    %394 = vector.extract_strided_slice %384 {offsets = [0, 192], sizes = [2, 64], strides = [1, 1]} : vector<2x256xf32> to vector<2x64xf32>
    %395 = math.tanh %394 : vector<2x64xf32>
    %396 = arith.mulf %392, %379 : vector<2x64xf32>
    %397 = arith.mulf %391, %395 : vector<2x64xf32>
    %398 = arith.addf %396, %397 : vector<2x64xf32>
    %399 = math.tanh %398 : vector<2x64xf32>
    %400 = arith.mulf %393, %399 : vector<2x64xf32>
    %cst_203 = arith.constant dense<0.000000e+00> : vector<2x256xf32>
    %401 = tpu.matmul %400, %284, %cst_203 {dimension_numbers = #tpu.dot_dimension_numbers<[1], [0], [0], [1], [0, 0, 1, 1], [], []>} : vector<2x64xf32>, vector<64x256xf32>, vector<2x256xf32> -> vector<2x256xf32>
    %c12_204 = arith.constant 12 : index
    %c0_205 = arith.constant 0 : index
    %402 = vector.load %arg11[%c12_204, %c0_205] : memref<16x256xf32, #tpu.memory_space<vmem>>, vector<2x256xf32>
    %403 = arith.addf %401, %402 : vector<2x256xf32>
    %404 = vector.extract_strided_slice %403 {offsets = [0, 0], sizes = [2, 192], strides = [1, 1]} : vector<2x256xf32> to vector<2x192xf32>
    %405 = arith.negf %404 : vector<2x192xf32>
    %406 = math.exp %405 : vector<2x192xf32>
    %cst_206 = arith.constant 1.000000e+00 : f32
    %407 = vector.broadcast %cst_206 : f32 to vector<2x192xf32>
    %408 = arith.addf %407, %406 : vector<2x192xf32>
    %409 = arith.divf %407, %408 : vector<2x192xf32>
    %410 = vector.extract_strided_slice %409 {offsets = [0, 0], sizes = [2, 64], strides = [1, 1]} : vector<2x192xf32> to vector<2x64xf32>
    %411 = vector.extract_strided_slice %409 {offsets = [0, 64], sizes = [2, 64], strides = [1, 1]} : vector<2x192xf32> to vector<2x64xf32>
    %412 = vector.extract_strided_slice %409 {offsets = [0, 128], sizes = [2, 64], strides = [1, 1]} : vector<2x192xf32> to vector<2x64xf32>
    %413 = vector.extract_strided_slice %403 {offsets = [0, 192], sizes = [2, 64], strides = [1, 1]} : vector<2x256xf32> to vector<2x64xf32>
    %414 = math.tanh %413 : vector<2x64xf32>
    %415 = arith.mulf %411, %398 : vector<2x64xf32>
    %416 = arith.mulf %410, %414 : vector<2x64xf32>
    %417 = arith.addf %415, %416 : vector<2x64xf32>
    %418 = math.tanh %417 : vector<2x64xf32>
    %419 = arith.mulf %412, %418 : vector<2x64xf32>
    %cst_207 = arith.constant dense<0.000000e+00> : vector<2x256xf32>
    %420 = tpu.matmul %419, %284, %cst_207 {dimension_numbers = #tpu.dot_dimension_numbers<[1], [0], [0], [1], [0, 0, 1, 1], [], []>} : vector<2x64xf32>, vector<64x256xf32>, vector<2x256xf32> -> vector<2x256xf32>
    %c14_208 = arith.constant 14 : index
    %c0_209 = arith.constant 0 : index
    %421 = vector.load %arg11[%c14_208, %c0_209] : memref<16x256xf32, #tpu.memory_space<vmem>>, vector<2x256xf32>
    %422 = arith.addf %420, %421 : vector<2x256xf32>
    %423 = vector.extract_strided_slice %422 {offsets = [0, 0], sizes = [2, 192], strides = [1, 1]} : vector<2x256xf32> to vector<2x192xf32>
    %424 = arith.negf %423 : vector<2x192xf32>
    %425 = math.exp %424 : vector<2x192xf32>
    %cst_210 = arith.constant 1.000000e+00 : f32
    %426 = vector.broadcast %cst_210 : f32 to vector<2x192xf32>
    %427 = arith.addf %426, %425 : vector<2x192xf32>
    %428 = arith.divf %426, %427 : vector<2x192xf32>
    %429 = vector.extract_strided_slice %428 {offsets = [0, 0], sizes = [2, 64], strides = [1, 1]} : vector<2x192xf32> to vector<2x64xf32>
    %430 = vector.extract_strided_slice %428 {offsets = [0, 64], sizes = [2, 64], strides = [1, 1]} : vector<2x192xf32> to vector<2x64xf32>
    %431 = vector.extract_strided_slice %428 {offsets = [0, 128], sizes = [2, 64], strides = [1, 1]} : vector<2x192xf32> to vector<2x64xf32>
    %432 = vector.extract_strided_slice %422 {offsets = [0, 192], sizes = [2, 64], strides = [1, 1]} : vector<2x256xf32> to vector<2x64xf32>
    %433 = math.tanh %432 : vector<2x64xf32>
    %434 = arith.mulf %430, %417 : vector<2x64xf32>
    %435 = arith.mulf %429, %433 : vector<2x64xf32>
    %436 = arith.addf %434, %435 : vector<2x64xf32>
    %437 = math.tanh %436 : vector<2x64xf32>
    %438 = arith.mulf %431, %437 : vector<2x64xf32>
    %c0_211 = arith.constant 0 : index
    %c0_212 = arith.constant 0 : index
    %439 = vector.load %arg7[%c0_211, %c0_212] : memref<64x32xf32, #tpu.memory_space<vmem>>, vector<64x32xf32>
    %cst_213 = arith.constant dense<0.000000e+00> : vector<2x32xf32>
    %440 = tpu.matmul %438, %439, %cst_213 {dimension_numbers = #tpu.dot_dimension_numbers<[1], [0], [0], [1], [0, 0, 1, 1], [], []>} : vector<2x64xf32>, vector<64x32xf32>, vector<2x32xf32> -> vector<2x32xf32>
    %c0_214 = arith.constant 0 : index
    %c0_215 = arith.constant 0 : index
    %441 = vector.load %arg8[%c0_214, %c0_215] : memref<1x32xf32, #tpu.memory_space<vmem>>, vector<1x32xf32>
    %442 = vector.broadcast %441 : vector<1x32xf32> to vector<2x32xf32>
    %443 = arith.addf %440, %442 : vector<2x32xf32>
    %c0_216 = arith.constant 0 : index
    %c0_217 = arith.constant 0 : index
    %444 = vector.load %arg9[%c0_216, %c0_217] : memref<2x32xf32, #tpu.memory_space<vmem>>, vector<2x32xf32>
    tpu.vector_store %arg9[%c0_216, %c0_217], %443 {strides = array<i32>} : memref<2x32xf32, #tpu.memory_space<vmem>>, vector<2x32xf32>,
    return
  }
}

</mosaic_0001>

<llo_original>
// kernel: tpu_custom_call.1
$region0: #{tpu_custom_call.1}
  #allocation0 [shape = 'u32[]', space=smem, size = 0x4, offset = 0x4, fixed_abs, tag = 'smem constant byte address 0x4 - core index']
  #allocation1 [shape = 'u32[144,128]{1,0:T(1,128)}', space=vmem, size = 0x12000, scoped, tag = 'internal scratch']
  #allocation2 [shape = 'f32[16,256]{1,0:T(8,128)}', space=vmem, size = 0x4000, scoped, tag = 'scratch operand']
  #allocation3 [shape = 'f32[16,256]{1,0:T(8,128)}', space=vmem, size = 0x4000, scoped, tag = 'scratch operand']
  #allocation4 [shape = 'f32[16,64]{1,0:T(8,128)}', space=vmem, size = 0x2000, scoped, tag = 'scratch operand']
  %s0 = inlined_call_operand.vmem [shape: f32[16,4], index: 0, kind: input, shape index: {}]
  %s1 = inlined_call_operand.vmem [shape: f32[4,256], index: 1, kind: input, shape index: {}]
  %s2 = inlined_call_operand.hbm [shape: f32[64,256], index: 2, kind: input, shape index: {}]
  %s3 = inlined_call_operand.vmem [shape: f32[1,256], index: 3, kind: input, shape index: {}]
  %s4 = inlined_call_operand.hbm [shape: f32[64,256], index: 4, kind: input, shape index: {}]
  %s5 = inlined_call_operand.hbm [shape: f32[64,256], index: 5, kind: input, shape index: {}]
  %s6 = inlined_call_operand.vmem [shape: f32[1,256], index: 6, kind: input, shape index: {}]
  %s7 = inlined_call_operand.vmem [shape: f32[64,32], index: 7, kind: input, shape index: {}]
  %s8 = inlined_call_operand.vmem [shape: f32[1,32], index: 8, kind: input, shape index: {}]
  %s9 = inlined_call_operand.hbm [shape: f32[2,32], index: 9, kind: output, shape index: {}]
  %s10 = sld [smem:[#allocation0]]
  $region58: #{tpu_custom_call.1} parent=0
    _
  %s12 = ssub.s32 1, %s10
  %s13 = scalar_select 0, %s12, %s10
  $region1: #{tpu_custom_call.1} parent=0
    #allocation5 [shape = 'u8[65536]{0}', space=vmem, size = 0x10000, scoped, tag = 'input window, operand 2, single buffered']
    #allocation6 [shape = 's32[1]{0}', space=sflag, size = 0x4, scoped, tag = 'scoped memory for tpu_custom_call.1']
    #allocation7 [shape = 's32[1]{0}', space=sflag, size = 0x4, scoped, tag = 'scoped memory for tpu_custom_call.1']
    #allocation8 [shape = 'u8[65536]{0}', space=vmem, size = 0x10000, scoped, tag = 'input window, operand 4, single buffered']
    #allocation9 [shape = 's32[1]{0}', space=sflag, size = 0x4, scoped, tag = 'scoped memory for tpu_custom_call.1']
    #allocation10 [shape = 'u8[65536]{0}', space=vmem, size = 0x10000, scoped, tag = 'input window, operand 5, single buffered']
    #allocation11 [shape = 'u8[1024]{0}', space=vmem, size = 0x400, scoped, tag = 'output window, operand 0, single buffered']
    %14 = vsyncpa [#allocation6], 0
    %15 = vsyncpa [#allocation9], 0
    %16 = vsyncpa [#allocation7], 0
    // Predicated region
    $region2: #{tpu_custom_call.1} parent=1 // pred_check
      _
    $region3: #{tpu_custom_call.1} parent=1 // pred_check_branch
      %18 = sbr.rel (0) target = $region5
    $region4: #{tpu_custom_call.1} parent=1 // pred_region
      _
    $region5: #{tpu_custom_call.1} parent=1 // pred_fallthru
      _
    // Predicated region
    $region6: #{tpu_custom_call.1} parent=1 // pred_check
      _
    $region7: #{tpu_custom_call.1} parent=1 // pred_check_branch
      %20 = sbr.rel (0) target = $region9
    $region8: #{tpu_custom_call.1} parent=1 // pred_region
      _
    $region9: #{tpu_custom_call.1} parent=1 // pred_fallthru
      _
    // Predicated region
    $region10: #{tpu_custom_call.1} parent=1 // pred_check
      _
    $region11: #{tpu_custom_call.1} parent=1 // pred_check_branch
      %22 = sbr.rel (0) target = $region13
    $region12: #{tpu_custom_call.1} parent=1 // pred_region
      %s24 = ssub.s32 2048, 2048
      %25 = vsyncadd [#allocation6], %s24
      %s26 = sshll.u32 [#allocation5], 4
      %s27 = int_to_ptr.vmem [resolvable:$true] %s26
      %32 = dma.hbm_to_vmem [thread:$0]  %s2, 2048, %s27, [#allocation6], 256, 256, 16
    $region13: #{tpu_custom_call.1} parent=1 // pred_fallthru
      _
    // Predicated region
    $region14: #{tpu_custom_call.1} parent=1 // pred_check
      _
    $region15: #{tpu_custom_call.1} parent=1 // pred_check_branch
      %34 = sbr.rel (0) target = $region17
    $region16: #{tpu_custom_call.1} parent=1 // pred_region
      _
    $region17: #{tpu_custom_call.1} parent=1 // pred_fallthru
      _
    // Predicated region
    $region18: #{tpu_custom_call.1} parent=1 // pred_check
      _
    $region19: #{tpu_custom_call.1} parent=1 // pred_check_branch
      %36 = sbr.rel (0) target = $region21
    $region20: #{tpu_custom_call.1} parent=1 // pred_region
      %s38 = ssub.s32 2048, 2048
      %39 = vsyncadd [#allocation9], %s38
      %s40 = sshll.u32 [#allocation8], 4
      %s41 = int_to_ptr.vmem [resolvable:$true] %s40
      %46 = dma.hbm_to_vmem [thread:$0]  %s4, 2048, %s41, [#allocation9], 256, 256, 16
    $region21: #{tpu_custom_call.1} parent=1 // pred_fallthru
      _
    // Predicated region
    $region22: #{tpu_custom_call.1} parent=1 // pred_check
      _
    $region23: #{tpu_custom_call.1} parent=1 // pred_check_branch
      %48 = sbr.rel (0) target = $region25
    $region24: #{tpu_custom_call.1} parent=1 // pred_region
      %s50 = ssub.s32 2048, 2048
      %51 = vsyncadd [#allocation9], %s50
      %s52 = sshll.u32 [#allocation10], 4
      %s53 = int_to_ptr.vmem [resolvable:$true] %s52
      %58 = dma.hbm_to_vmem [thread:$0]  %s5, 2048, %s53, [#allocation9], 256, 256, 16
    $region25: #{tpu_custom_call.1} parent=1 // pred_fallthru
      _
    // Predicated region
    $region26: #{tpu_custom_call.1} parent=1 // pred_check
      _
    $region27: #{tpu_custom_call.1} parent=1 // pred_check_branch
      %60 = sbr.rel (0) target = $region29
    $region28: #{tpu_custom_call.1} parent=1 // pred_region
      _
    $region29: #{tpu_custom_call.1} parent=1 // pred_fallthru
      _
    // Predicated region
    $region30: #{tpu_custom_call.1} parent=1 // pred_check
      _
    $region31: #{tpu_custom_call.1} parent=1 // pred_check_branch
      %62 = sbr.rel (0) target = $region33
    $region32: #{tpu_custom_call.1} parent=1 // pred_region
      _
    $region33: #{tpu_custom_call.1} parent=1 // pred_fallthru
      _
    // Predicated region
    $region34: #{tpu_custom_call.1} parent=1 // pred_check
      _
    $region35: #{tpu_custom_call.1} parent=1 // pred_check_branch
      %64 = sbr.rel (0) target = $region37
    $region36: #{tpu_custom_call.1} parent=1 // pred_region
      _
    $region37: #{tpu_custom_call.1} parent=1 // pred_fallthru
      _
    // Predicated region
    $region38: #{tpu_custom_call.1} parent=1 // pred_check
      _
    $region39: #{tpu_custom_call.1} parent=1 // pred_check_branch
      %66 = sbr.rel (0) target = $region41
    $region40: #{tpu_custom_call.1} parent=1 // pred_region
      %67 = dma.done [#allocation6], 2048
    $region41: #{tpu_custom_call.1} parent=1 // pred_fallthru
      _
    // Predicated region
    $region42: #{tpu_custom_call.1} parent=1 // pred_check
      _
    $region43: #{tpu_custom_call.1} parent=1 // pred_check_branch
      %69 = sbr.rel (0) target = $region45
    $region44: #{tpu_custom_call.1} parent=1 // pred_region
      %70 = dma.done [#allocation9], 2048
    $region45: #{tpu_custom_call.1} parent=1 // pred_fallthru
      _
    // Predicated region
    $region46: #{tpu_custom_call.1} parent=1 // pred_check
      _
    $region47: #{tpu_custom_call.1} parent=1 // pred_check_branch
      %72 = sbr.rel (0) target = $region49
    $region48: #{tpu_custom_call.1} parent=1 // pred_region
      %73 = dma.done [#allocation9], 2048
    $region49: #{tpu_custom_call.1} parent=1 // pred_fallthru
      _
    %v74 = vlaneseq
    %v75 = vand.u32 %v74, 127
    %v76 = vadd.s32 %v75, 128
    %vm77 = vcmp.lt.s32.totalorder %v75, 0
    %v78 = vsub.s32 0, %v75
    %v79 = vsel %vm77, %v78, %v75
    %v80 = vshrl.u32 %v79, 6
    %v81 = vand.u32 %v79, 63
    %v82 = vsub.s32 0, %v81
    %v83 = vsel %vm77, %v82, %v81
    %vm84 = vcmp.lt.s32.totalorder %v76, 0
    %v85 = vsub.s32 0, %v76
    %v86 = vsel %vm84, %v85, %v76
    %v87 = vshrl.u32 %v86, 6
    %v88 = vand.u32 %v86, 63
    %v89 = vsub.s32 0, %v88
    %v90 = vsel %vm84, %v89, %v88
    %vm91 = vcmp.ne.s32.totalorder %v83, 0
    %vm92 = vcmp.ne.s32.totalorder %v90, 0
    %vm93 = vcmp.lt.s32.totalorder %v83, 0
    %vm94 = vcmp.lt.s32.totalorder %v90, 0
    %vm95 = vmand %vm93, %vm91
    %vm96 = vmand %vm94, %vm92
    %v97 = vadd.s32 %v83, 64
    %v98 = vadd.s32 %v90, 64
    %v99 = vsel %vm95, %v97, %v83
    %v100 = vsel %vm96, %v98, %v90
    %vm101 = vcmp.lt.s32.totalorder %v99, 32
    %vm102 = vcmp.lt.s32.totalorder %v100, 32
    %v103 = vld [vmem:[%s0] sm:$0xff]
    %v104 = vld [vmem:[%s0 + $0x8] sm:$0xff]
    %v105 = vld [vmem:[%s1] sm:$0xff]
    %v106 = vld [vmem:[%s3] sm:$0x3]
    %v108 = vlaneseq
    %v109 = vshrl.u32 %v108, 7
    %v110 = vsub.s32 0, %v109
    %v111 = vrot.slane %v106, %v110
    %v112 = vlaneseq
    %v113 = vshrl.u32 %v112, 7
    %v114 = vsub.s32 1, %v113
    %v115 = vrot.slane %v106, %v114
    %v119 = vcombine.high %v105, %v105
    %vm120 = vcmask 31744
    %v122 = vsel %vm120, %v103, 0
    %v125 = vsel %vm120, %v104, 0
    %vm127 = vcmask 1043456
    %v128 = vsel %vm127, %v105, 0
    %v130 = vsel %vm127, %v119, 0
    %132 = vmatprep.subr.mxu0 0.0
    %133 = vmatpush1.msra.mxu0 0.0
    %134 = vmatprep.subr.mxu0 0.0
    %135 = vmatpush1.msra.mxu0 0.0
    %136 = vmatprep.subr.mxu0 0.0
    %137 = vmatpush1.msra.mxu0 0.0
    %138 = vmatprep.subr.mxu0 0.0
    %139 = vmatpush1.msra.mxu0 0.0
    %140 = vmatprep.subr.mxu0 0.0
    %141 = vmatpush1.msra.mxu0 0.0
    %142 = vmatprep.subr.mxu0 0.0
    %143 = vmatpush1.msra.mxu0 0.0
    %144 = vmatprep.subr.mxu0 0.0
    %145 = vmatpush1.msra.mxu0 0.0
    %146 = vmatprep.subr.mxu0 0.0
    %147 = vmatpush1.msra.mxu0 0.0
    %148 = vmatprep.subr.mxu0 0.0
    %149 = vmatpush1.msra.mxu0 0.0
    %150 = vmatprep.subr.mxu0 0.0
    %151 = vmatpush1.msra.mxu0 0.0
    %152 = vmatprep.subr.mxu0 0.0
    %153 = vmatpush1.msra.mxu0 0.0
    %154 = vmatprep.subr.mxu0 0.0
    %155 = vmatpush1.msra.mxu0 0.0
    %156 = vmatprep.subr.mxu0 0.0
    %157 = vmatpush1.msra.mxu0 0.0
    %158 = vmatprep.subr.mxu0 0.0
    %159 = vmatpush1.msra.mxu0 0.0
    %160 = vmatprep.subr.mxu0 0.0
    %161 = vmatpush1.msra.mxu0 0.0
    %162 = vmatprep.subr.mxu0 %v130
    %163 = vmatpush1.msra.mxu0 %v128
    %164 = vmatprep.subr.mxu0 0.0
    %165 = vmatpush2.msra.mxu0 0.0
    %166 = vmatprep.subr.mxu0 0.0
    %167 = vmatpush2.msra.mxu0 0.0
    %168 = vmatprep.subr.mxu0 0.0
    %169 = vmatpush2.msra.mxu0 0.0
    %170 = vmatprep.subr.mxu0 0.0
    %171 = vmatpush2.msra.mxu0 0.0
    %172 = vmatprep.subr.mxu0 0.0
    %173 = vmatpush2.msra.mxu0 0.0
    %174 = vmatprep.subr.mxu0 0.0
    %175 = vmatpush2.msra.mxu0 0.0
    %176 = vmatprep.subr.mxu0 0.0
    %177 = vmatpush2.msra.mxu0 0.0
    %178 = vmatprep.subr.mxu0 0.0
    %179 = vmatpush2.msra.mxu0 0.0
    %180 = vmatprep.subr.mxu0 0.0
    %181 = vmatpush2.msra.mxu0 0.0
    %182 = vmatprep.subr.mxu0 0.0
    %183 = vmatpush2.msra.mxu0 0.0
    %184 = vmatprep.subr.mxu0 0.0
    %185 = vmatpush2.msra.mxu0 0.0
    %186 = vmatprep.subr.mxu0 0.0
    %187 = vmatpush2.msra.mxu0 0.0
    %188 = vmatprep.subr.mxu0 0.0
    %189 = vmatpush2.msra.mxu0 0.0
    %190 = vmatprep.subr.mxu0 0.0
    %191 = vmatpush2.msra.mxu0 0.0
    %192 = vmatprep.subr.mxu0 0.0
    %193 = vmatpush2.msra.mxu0 0.0
    %194 = vmatprep.subr.mxu0 0.0
    %195 = vmatpush2.msra.mxu0 0.0
    %196 = vmatprep.mubr.f32.mxu0 0.0
    %197 = vmatmul.mubr.f32.gmra.mxu0 %v122
    %v198 = vpop.f32.mrf.mxu0
    %v199 = vadd.f32 %v111, %v198
    %v200 = vpop.f32.mrf.mxu0
    %v201 = vadd.f32 %v115, %v200
    %202 = vmatprep.mubr.f32.mxu0 0.0
    %203 = vmatmul.mubr.f32.gmra.mxu0 %v125
    %v204 = vpop.f32.mrf.mxu0
    %v205 = vadd.f32 %v111, %v204
    %v206 = vpop.f32.mrf.mxu0
    %v207 = vadd.f32 %v115, %v206
    %208 = vdwg.mxu0
    %209 = vst [vmem:[#allocation2] sm:$0xff] %v199
    %210 = vst [vmem:[#allocation2 + $0x8] sm:$0xff] %v201
    %211 = vst [vmem:[#allocation2 + $0x10] sm:$0xff] %v205
    %212 = vst [vmem:[#allocation2 + $0x18] sm:$0xff] %v207
    %v213 = vld [vmem:[#allocation2] sm:$0x3]
    %v214 = vld [vmem:[#allocation2 + $0x8] sm:$0x3]
    %v215 = vld [vmem:[#allocation2 + $0x10] sm:$0xc0]
    %v216 = vld [vmem:[#allocation2 + $0x18] sm:$0xc0]
    %v219 = vrot.slane %v215, 6
    %v220 = vrot.slane %v216, 6
    %v223 = vsel %vm101, %v213, %v219
    %v224 = vsel %vm102, %v214, %v220
    %225 = vst [vmem:[#allocation3] sm:$0x3] %v223
    %226 = vst [vmem:[#allocation3 + $0x8] sm:$0x3] %v224
    %v227 = vld [vmem:[#allocation2] sm:$0xc]
    %v228 = vld [vmem:[#allocation2 + $0x8] sm:$0xc]
    %v229 = vld [vmem:[#allocation2 + $0x10] sm:$0x30]
    %v230 = vld [vmem:[#allocation2 + $0x18] sm:$0x30]
    %v233 = vrot.slane %v229, 2
    %v234 = vrot.slane %v230, 2
    %v237 = vsel %vm101, %v227, %v233
    %v238 = vsel %vm102, %v228, %v234
    %239 = vst [vmem:[#allocation3] sm:$0xc] %v237
    %240 = vst [vmem:[#allocation3 + $0x8] sm:$0xc] %v238
    %v241 = vld [vmem:[#allocation2] sm:$0x30]
    %v242 = vld [vmem:[#allocation2 + $0x8] sm:$0x30]
    %v243 = vld [vmem:[#allocation2 + $0x10] sm:$0xc]
    %v244 = vld [vmem:[#allocation2 + $0x18] sm:$0xc]
    %v247 = vrot.slane %v243, 6
    %v248 = vrot.slane %v244, 6
    %v251 = vsel %vm101, %v241, %v247
    %v252 = vsel %vm102, %v242, %v248
    %253 = vst [vmem:[#allocation3] sm:$0x30] %v251
    %254 = vst [vmem:[#allocation3 + $0x8] sm:$0x30] %v252
    %v255 = vld [vmem:[#allocation2] sm:$0xc0]
    %v256 = vld [vmem:[#allocation2 + $0x8] sm:$0xc0]
    %v257 = vld [vmem:[#allocation2 + $0x10] sm:$0x3]
    %v258 = vld [vmem:[#allocation2 + $0x18] sm:$0x3]
    %v261 = vrot.slane %v257, 2
    %v262 = vrot.slane %v258, 2
    %v265 = vsel %vm101, %v255, %v261
    %v266 = vsel %vm102, %v256, %v262
    %267 = vst [vmem:[#allocation3] sm:$0xc0] %v265
    %268 = vst [vmem:[#allocation3 + $0x8] sm:$0xc0] %v266
    %v269 = vld [vmem:[#allocation2 + $0x10] sm:$0x3]
    %v270 = vld [vmem:[#allocation2 + $0x18] sm:$0x3]
    %v271 = vld [vmem:[#allocation2] sm:$0xc0]
    %v272 = vld [vmem:[#allocation2 + $0x8] sm:$0xc0]
    %v275 = vrot.slane %v271, 6
    %v276 = vrot.slane %v272, 6
    %v279 = vsel %vm101, %v269, %v275
    %v280 = vsel %vm102, %v270, %v276
    %281 = vst [vmem:[#allocation3 + $0x10] sm:$0x3] %v279
    %282 = vst [vmem:[#allocation3 + $0x18] sm:$0x3] %v280
    %v283 = vld [vmem:[#allocation2 + $0x10] sm:$0xc]
    %v284 = vld [vmem:[#allocation2 + $0x18] sm:$0xc]
    %v285 = vld [vmem:[#allocation2] sm:$0x30]
    %v286 = vld [vmem:[#allocation2 + $0x8] sm:$0x30]
    %v289 = vrot.slane %v285, 2
    %v290 = vrot.slane %v286, 2
    %v293 = vsel %vm101, %v283, %v289
    %v294 = vsel %vm102, %v284, %v290
    %295 = vst [vmem:[#allocation3 + $0x10] sm:$0xc] %v293
    %296 = vst [vmem:[#allocation3 + $0x18] sm:$0xc] %v294
    %v297 = vld [vmem:[#allocation2 + $0x10] sm:$0x30]
    %v298 = vld [vmem:[#allocation2 + $0x18] sm:$0x30]
    %v299 = vld [vmem:[#allocation2] sm:$0xc]
    %v300 = vld [vmem:[#allocation2 + $0x8] sm:$0xc]
    %v303 = vrot.slane %v299, 6
    %v304 = vrot.slane %v300, 6
    %v307 = vsel %vm101, %v297, %v303
    %v308 = vsel %vm102, %v298, %v304
    %309 = vst [vmem:[#allocation3 + $0x10] sm:$0x30] %v307
    %310 = vst [vmem:[#allocation3 + $0x18] sm:$0x30] %v308
    %v311 = vld [vmem:[#allocation2 + $0x10] sm:$0xc0]
    %v312 = vld [vmem:[#allocation2 + $0x18] sm:$0xc0]
    %v313 = vld [vmem:[#allocation2] sm:$0x3]
    %v314 = vld [vmem:[#allocation2 + $0x8] sm:$0x3]
    %v317 = vrot.slane %v313, 2
    %v318 = vrot.slane %v314, 2
    %v321 = vsel %vm101, %v311, %v317
    %v322 = vsel %vm102, %v312, %v318
    %323 = vst [vmem:[#allocation3 + $0x10] sm:$0xc0] %v321
    %324 = vst [vmem:[#allocation3 + $0x18] sm:$0xc0] %v322
    %v325 = vld [vmem:[#allocation5] sm:$0xff]
    %v326 = vld [vmem:[#allocation5 + $0x8] sm:$0xff]
    %v327 = vld [vmem:[#allocation5 + $0x10] sm:$0xff]
    %v328 = vld [vmem:[#allocation5 + $0x18] sm:$0xff]
    %v329 = vld [vmem:[#allocation5 + $0x20] sm:$0xff]
    %v330 = vld [vmem:[#allocation5 + $0x28] sm:$0xff]
    %v331 = vld [vmem:[#allocation5 + $0x30] sm:$0xff]
    %v332 = vld [vmem:[#allocation5 + $0x38] sm:$0xff]
    %v333 = vld [vmem:[#allocation5 + $0x40] sm:$0xff]
    %v334 = vld [vmem:[#allocation5 + $0x48] sm:$0xff]
    %v335 = vld [vmem:[#allocation5 + $0x50] sm:$0xff]
    %v336 = vld [vmem:[#allocation5 + $0x58] sm:$0xff]
    %v337 = vld [vmem:[#allocation5 + $0x60] sm:$0xff]
    %v338 = vld [vmem:[#allocation5 + $0x68] sm:$0xff]
    %v339 = vld [vmem:[#allocation5 + $0x70] sm:$0xff]
    %v340 = vld [vmem:[#allocation5 + $0x78] sm:$0xff]
    %v341 = vld [vmem:[#allocation3] sm:$0x3]
    %v342 = vld [vmem:[#allocation3 + $0x8] sm:$0x3]
    %vm343 = vcmask 523264
    %v345 = vsel %vm343, 0.0, 0
    %347 = vmatprep.subr.mxu0 0.0
    %348 = vmatpush1.msra.mxu0 0.0
    %349 = vmatprep.subr.mxu0 0.0
    %350 = vmatpush1.msra.mxu0 0.0
    %351 = vmatprep.subr.mxu0 0.0
    %352 = vmatpush1.msra.mxu0 0.0
    %353 = vmatprep.subr.mxu0 0.0
    %354 = vmatpush1.msra.mxu0 0.0
    %355 = vmatprep.subr.mxu0 0.0
    %356 = vmatpush1.msra.mxu0 0.0
    %357 = vmatprep.subr.mxu0 0.0
    %358 = vmatpush1.msra.mxu0 0.0
    %359 = vmatprep.subr.mxu0 0.0
    %360 = vmatpush1.msra.mxu0 0.0
    %361 = vmatprep.subr.mxu0 0.0
    %362 = vmatpush1.msra.mxu0 0.0
    %363 = vmatprep.subr.mxu0 %v340
    %364 = vmatpush1.msra.mxu0 %v339
    %365 = vmatprep.subr.mxu0 %v338
    %366 = vmatpush1.msra.mxu0 %v337
    %367 = vmatprep.subr.mxu0 %v336
    %368 = vmatpush1.msra.mxu0 %v335
    %369 = vmatprep.subr.mxu0 %v334
    %370 = vmatpush1.msra.mxu0 %v333
    %371 = vmatprep.subr.mxu0 %v332
    %372 = vmatpush1.msra.mxu0 %v331
    %373 = vmatprep.subr.mxu0 %v330
    %374 = vmatpush1.msra.mxu0 %v329
    %375 = vmatprep.subr.mxu0 %v328
    %376 = vmatpush1.msra.mxu0 %v327
    %377 = vmatprep.subr.mxu0 %v326
    %378 = vmatpush1.msra.mxu0 %v325
    %379 = vmatprep.subr.mxu0 0.0
    %380 = vmatpush2.msra.mxu0 0.0
    %381 = vmatprep.subr.mxu0 0.0
    %382 = vmatpush2.msra.mxu0 0.0
    %383 = vmatprep.subr.mxu0 0.0
    %384 = vmatpush2.msra.mxu0 0.0
    %385 = vmatprep.subr.mxu0 0.0
    %386 = vmatpush2.msra.mxu0 0.0
    %387 = vmatprep.subr.mxu0 0.0
    %388 = vmatpush2.msra.mxu0 0.0
    %389 = vmatprep.subr.mxu0 0.0
    %390 = vmatpush2.msra.mxu0 0.0
    %391 = vmatprep.subr.mxu0 0.0
    %392 = vmatpush2.msra.mxu0 0.0
    %393 = vmatprep.subr.mxu0 0.0
    %394 = vmatpush2.msra.mxu0 0.0
    %395 = vmatprep.subr.mxu0 0.0
    %396 = vmatpush2.msra.mxu0 0.0
    %397 = vmatprep.subr.mxu0 0.0
    %398 = vmatpush2.msra.mxu0 0.0
    %399 = vmatprep.subr.mxu0 0.0
    %400 = vmatpush2.msra.mxu0 0.0
    %401 = vmatprep.subr.mxu0 0.0
    %402 = vmatpush2.msra.mxu0 0.0
    %403 = vmatprep.subr.mxu0 0.0
    %404 = vmatpush2.msra.mxu0 0.0
    %405 = vmatprep.subr.mxu0 0.0
    %406 = vmatpush2.msra.mxu0 0.0
    %407 = vmatprep.subr.mxu0 0.0
    %408 = vmatpush2.msra.mxu0 0.0
    %409 = vmatprep.subr.mxu0 0.0
    %410 = vmatpush2.msra.mxu0 0.0
    %411 = vmatprep.mubr.f32.mxu0 0.0
    %412 = vmatmul.mubr.f32.gmra.mxu0 %v345
    %v413 = vpop.f32.mrf.mxu0
    %v414 = vadd.f32 %v341, %v413
    %v415 = vpop.f32.mrf.mxu0
    %v416 = vadd.f32 %v342, %v415
    %417 = vdwg.mxu0
    %v418 = vxor.u32 %v414, 2147483648
    %v419 = vxor.u32 %v416, 2147483648
    %v420 = vmul.f32 %v418, 1.442695
    %v421 = vpow.pop %v420
    %v422 = vmul.f32 %v419, 1.442695
    %v423 = vpow.pop %v422
    %v424 = vadd.f32 %v421, 1.0
    %v425 = vadd.f32 %v423, 1.0
    %v426 = vrcp.pop %v424
    %v427 = vmul.f32 1.0, %v426
    %v428 = vrcp.pop %v425
    %v429 = vmul.f32 1.0, %v428
    %v430 = vtanh.pop %v416
    %v431 = vmul.f32 %v427, 0.0
    %433 = vrot.lane.b32.xlu0 %v430, 64
    %v434 = vpop.permute.xlu0 %433
    %v436 = vmul.f32 %v427, %v434
    %438 = vrot.lane.b32.xlu0 %v436, 64
    %v439 = vpop.permute.xlu0 %438
    %v441 = vadd.f32 %v431, %v439
    %v442 = vtanh.pop %v441
    %444 = vrot.lane.b32.xlu0 %v442, 64
    %v445 = vpop.permute.xlu0 %444
    %v447 = vmul.f32 %v429, %v445
    %vm448 = vcmask 254976
    %449 = vst.msk [vmem:[#allocation4] sm:$0x3] %vm448, %v447
    %vm450 = vcmask 517376
    %451 = vst.msk [vmem:[#allocation4 + $0xe] sm:$0x3] %vm450, %v447
    %v452 = vld [vmem:[#allocation3] sm:$0xc]
    %v453 = vld [vmem:[#allocation3 + $0x8] sm:$0xc]
    %v456 = vrot.slane %v452, 2
    %v457 = vrot.slane %v453, 2
    %v461 = vsel %vm343, %v447, 0
    %463 = vmatprep.subr.mxu0 0.0
    %464 = vmatpush1.msra.mxu0 0.0
    %465 = vmatprep.subr.mxu0 0.0
    %466 = vmatpush1.msra.mxu0 0.0
    %467 = vmatprep.subr.mxu0 0.0
    %468 = vmatpush1.msra.mxu0 0.0
    %469 = vmatprep.subr.mxu0 0.0
    %470 = vmatpush1.msra.mxu0 0.0
    %471 = vmatprep.subr.mxu0 0.0
    %472 = vmatpush1.msra.mxu0 0.0
    %473 = vmatprep.subr.mxu0 0.0
    %474 = vmatpush1.msra.mxu0 0.0
    %475 = vmatprep.subr.mxu0 0.0
    %476 = vmatpush1.msra.mxu0 0.0
    %477 = vmatprep.subr.mxu0 0.0
    %478 = vmatpush1.msra.mxu0 0.0
    %479 = vmatprep.subr.mxu0 %v340
    %480 = vmatpush1.msra.mxu0 %v339
    %481 = vmatprep.subr.mxu0 %v338
    %482 = vmatpush1.msra.mxu0 %v337
    %483 = vmatprep.subr.mxu0 %v336
    %484 = vmatpush1.msra.mxu0 %v335
    %485 = vmatprep.subr.mxu0 %v334
    %486 = vmatpush1.msra.mxu0 %v333
    %487 = vmatprep.subr.mxu0 %v332
    %488 = vmatpush1.msra.mxu0 %v331
    %489 = vmatprep.subr.mxu0 %v330
    %490 = vmatpush1.msra.mxu0 %v329
    %491 = vmatprep.subr.mxu0 %v328
    %492 = vmatpush1.msra.mxu0 %v327
    %493 = vmatprep.subr.mxu0 %v326
    %494 = vmatpush1.msra.mxu0 %v325
    %495 = vmatprep.subr.mxu0 0.0
    %496 = vmatpush2.msra.mxu0 0.0
    %497 = vmatprep.subr.mxu0 0.0
    %498 = vmatpush2.msra.mxu0 0.0
    %499 = vmatprep.subr.mxu0 0.0
    %500 = vmatpush2.msra.mxu0 0.0
    %501 = vmatprep.subr.mxu0 0.0
    %502 = vmatpush2.msra.mxu0 0.0
    %503 = vmatprep.subr.mxu0 0.0
    %504 = vmatpush2.msra.mxu0 0.0
    %505 = vmatprep.subr.mxu0 0.0
    %506 = vmatpush2.msra.mxu0 0.0
    %507 = vmatprep.subr.mxu0 0.0
    %508 = vmatpush2.msra.mxu0 0.0
    %509 = vmatprep.subr.mxu0 0.0
    %510 = vmatpush2.msra.mxu0 0.0
    %511 = vmatprep.subr.mxu0 0.0
    %512 = vmatpush2.msra.mxu0 0.0
    %513 = vmatprep.subr.mxu0 0.0
    %514 = vmatpush2.msra.mxu0 0.0
    %515 = vmatprep.subr.mxu0 0.0
    %516 = vmatpush2.msra.mxu0 0.0
    %517 = vmatprep.subr.mxu0 0.0
    %518 = vmatpush2.msra.mxu0 0.0
    %519 = vmatprep.subr.mxu0 0.0
    %520 = vmatpush2.msra.mxu0 0.0
    %521 = vmatprep.subr.mxu0 0.0
    %522 = vmatpush2.msra.mxu0 0.0
    %523 = vmatprep.subr.mxu0 0.0
    %524 = vmatpush2.msra.mxu0 0.0
    %525 = vmatprep.subr.mxu0 0.0
    %526 = vmatpush2.msra.mxu0 0.0
    %527 = vmatprep.mubr.f32.mxu0 0.0
    %528 = vmatmul.mubr.f32.gmra.mxu0 %v461
    %v529 = vpop.f32.mrf.mxu0
    %v530 = vadd.f32 %v456, %v529
    %v531 = vpop.f32.mrf.mxu0
    %v532 = vadd.f32 %v457, %v531
    %533 = vdwg.mxu0
    %v534 = vxor.u32 %v530, 2147483648
    %v535 = vxor.u32 %v532, 2147483648
    %v536 = vmul.f32 %v534, 1.442695
    %v537 = vpow.pop %v536
    %v538 = vmul.f32 %v535, 1.442695
    %v539 = vpow.pop %v538
    %v540 = vadd.f32 %v537, 1.0
    %v541 = vadd.f32 %v539, 1.0
    %v542 = vrcp.pop %v540
    %v543 = vmul.f32 1.0, %v542
    %v544 = vrcp.pop %v541
    %v545 = vmul.f32 1.0, %v544
    %v546 = vtanh.pop %v532
    %v547 = vmul.f32 %v543, %v441
    %549 = vrot.lane.b32.xlu0 %v546, 64
    %v550 = vpop.permute.xlu0 %549
    %v552 = vmul.f32 %v543, %v550
    %554 = vrot.lane.b32.xlu0 %v552, 64
    %v555 = vpop.permute.xlu0 %554
    %v557 = vadd.f32 %v547, %v555
    %v558 = vtanh.pop %v557
    %560 = vrot.lane.b32.xlu0 %v558, 64
    %v561 = vpop.permute.xlu0 %560
    %v563 = vmul.f32 %v545, %v561
    %564 = vst.msk [vmem:[#allocation4 + $0x2] sm:$0x3] %vm448, %v563
    %565 = vst.msk [vmem:[#allocation4 + $0xc] sm:$0x3] %vm450, %v563
    %v566 = vld [vmem:[#allocation3] sm:$0x30]
    %v567 = vld [vmem:[#allocation3 + $0x8] sm:$0x30]
    %v570 = vrot.slane %v566, 4
    %v571 = vrot.slane %v567, 4
    %v575 = vsel %vm343, %v563, 0
    %577 = vmatprep.subr.mxu0 0.0
    %578 = vmatpush1.msra.mxu0 0.0
    %579 = vmatprep.subr.mxu0 0.0
    %580 = vmatpush1.msra.mxu0 0.0
    %581 = vmatprep.subr.mxu0 0.0
    %582 = vmatpush1.msra.mxu0 0.0
    %583 = vmatprep.subr.mxu0 0.0
    %584 = vmatpush1.msra.mxu0 0.0
    %585 = vmatprep.subr.mxu0 0.0
    %586 = vmatpush1.msra.mxu0 0.0
    %587 = vmatprep.subr.mxu0 0.0
    %588 = vmatpush1.msra.mxu0 0.0
    %589 = vmatprep.subr.mxu0 0.0
    %590 = vmatpush1.msra.mxu0 0.0
    %591 = vmatprep.subr.mxu0 0.0
    %592 = vmatpush1.msra.mxu0 0.0
    %593 = vmatprep.subr.mxu0 %v340
    %594 = vmatpush1.msra.mxu0 %v339
    %595 = vmatprep.subr.mxu0 %v338
    %596 = vmatpush1.msra.mxu0 %v337
    %597 = vmatprep.subr.mxu0 %v336
    %598 = vmatpush1.msra.mxu0 %v335
    %599 = vmatprep.subr.mxu0 %v334
    %600 = vmatpush1.msra.mxu0 %v333
    %601 = vmatprep.subr.mxu0 %v332
    %602 = vmatpush1.msra.mxu0 %v331
    %603 = vmatprep.subr.mxu0 %v330
    %604 = vmatpush1.msra.mxu0 %v329
    %605 = vmatprep.subr.mxu0 %v328
    %606 = vmatpush1.msra.mxu0 %v327
    %607 = vmatprep.subr.mxu0 %v326
    %608 = vmatpush1.msra.mxu0 %v325
    %609 = vmatprep.subr.mxu0 0.0
    %610 = vmatpush2.msra.mxu0 0.0
    %611 = vmatprep.subr.mxu0 0.0
    %612 = vmatpush2.msra.mxu0 0.0
    %613 = vmatprep.subr.mxu0 0.0
    %614 = vmatpush2.msra.mxu0 0.0
    %615 = vmatprep.subr.mxu0 0.0
    %616 = vmatpush2.msra.mxu0 0.0
    %617 = vmatprep.subr.mxu0 0.0
    %618 = vmatpush2.msra.mxu0 0.0
    %619 = vmatprep.subr.mxu0 0.0
    %620 = vmatpush2.msra.mxu0 0.0
    %621 = vmatprep.subr.mxu0 0.0
    %622 = vmatpush2.msra.mxu0 0.0
    %623 = vmatprep.subr.mxu0 0.0
    %624 = vmatpush2.msra.mxu0 0.0
    %625 = vmatprep.subr.mxu0 0.0
    %626 = vmatpush2.msra.mxu0 0.0
    %627 = vmatprep.subr.mxu0 0.0
    %628 = vmatpush2.msra.mxu0 0.0
    %629 = vmatprep.subr.mxu0 0.0
    %630 = vmatpush2.msra.mxu0 0.0
    %631 = vmatprep.subr.mxu0 0.0
    %632 = vmatpush2.msra.mxu0 0.0
    %633 = vmatprep.subr.mxu0 0.0
    %634 = vmatpush2.msra.mxu0 0.0
    %635 = vmatprep.subr.mxu0 0.0
    %636 = vmatpush2.msra.mxu0 0.0
    %637 = vmatprep.subr.mxu0 0.0
    %638 = vmatpush2.msra.mxu0 0.0
    %639 = vmatprep.subr.mxu0 0.0
    %640 = vmatpush2.msra.mxu0 0.0
    %641 = vmatprep.mubr.f32.mxu0 0.0
    %642 = vmatmul.mubr.f32.gmra.mxu0 %v575
    %v643 = vpop.f32.mrf.mxu0
    %v644 = vadd.f32 %v570, %v643
    %v645 = vpop.f32.mrf.mxu0
    %v646 = vadd.f32 %v571, %v645
    %647 = vdwg.mxu0
    %v648 = vxor.u32 %v644, 2147483648
    %v649 = vxor.u32 %v646, 2147483648
    %v650 = vmul.f32 %v648, 1.442695
    %v651 = vpow.pop %v650
    %v652 = vmul.f32 %v649, 1.442695
    %v653 = vpow.pop %v652
    %v654 = vadd.f32 %v651, 1.0
    %v655 = vadd.f32 %v653, 1.0
    %v656 = vrcp.pop %v654
    %v657 = vmul.f32 1.0, %v656
    %v658 = vrcp.pop %v655
    %v659 = vmul.f32 1.0, %v658
    %v660 = vtanh.pop %v646
    %v661 = vmul.f32 %v657, %v557
    %663 = vrot.lane.b32.xlu0 %v660, 64
    %v664 = vpop.permute.xlu0 %663
    %v666 = vmul.f32 %v657, %v664
    %668 = vrot.lane.b32.xlu0 %v666, 64
    %v669 = vpop.permute.xlu0 %668
    %v671 = vadd.f32 %v661, %v669
    %v672 = vtanh.pop %v671
    %674 = vrot.lane.b32.xlu0 %v672, 64
    %v675 = vpop.permute.xlu0 %674
    %v677 = vmul.f32 %v659, %v675
    %678 = vst.msk [vmem:[#allocation4 + $0x4] sm:$0x3] %vm448, %v677
    %679 = vst.msk [vmem:[#allocation4 + $0xa] sm:$0x3] %vm450, %v677
    %v680 = vld [vmem:[#allocation3] sm:$0xc0]
    %v681 = vld [vmem:[#allocation3 + $0x8] sm:$0xc0]
    %v684 = vrot.slane %v680, 6
    %v685 = vrot.slane %v681, 6
    %v689 = vsel %vm343, %v677, 0
    %691 = vmatprep.subr.mxu0 0.0
    %692 = vmatpush1.msra.mxu0 0.0
    %693 = vmatprep.subr.mxu0 0.0
    %694 = vmatpush1.msra.mxu0 0.0
    %695 = vmatprep.subr.mxu0 0.0
    %696 = vmatpush1.msra.mxu0 0.0
    %697 = vmatprep.subr.mxu0 0.0
    %698 = vmatpush1.msra.mxu0 0.0
    %699 = vmatprep.subr.mxu0 0.0
    %700 = vmatpush1.msra.mxu0 0.0
    %701 = vmatprep.subr.mxu0 0.0
    %702 = vmatpush1.msra.mxu0 0.0
    %703 = vmatprep.subr.mxu0 0.0
    %704 = vmatpush1.msra.mxu0 0.0
    %705 = vmatprep.subr.mxu0 0.0
    %706 = vmatpush1.msra.mxu0 0.0
    %707 = vmatprep.subr.mxu0 %v340
    %708 = vmatpush1.msra.mxu0 %v339
    %709 = vmatprep.subr.mxu0 %v338
    %710 = vmatpush1.msra.mxu0 %v337
    %711 = vmatprep.subr.mxu0 %v336
    %712 = vmatpush1.msra.mxu0 %v335
    %713 = vmatprep.subr.mxu0 %v334
    %714 = vmatpush1.msra.mxu0 %v333
    %715 = vmatprep.subr.mxu0 %v332
    %716 = vmatpush1.msra.mxu0 %v331
    %717 = vmatprep.subr.mxu0 %v330
    %718 = vmatpush1.msra.mxu0 %v329
    %719 = vmatprep.subr.mxu0 %v328
    %720 = vmatpush1.msra.mxu0 %v327
    %721 = vmatprep.subr.mxu0 %v326
    %722 = vmatpush1.msra.mxu0 %v325
    %723 = vmatprep.subr.mxu0 0.0
    %724 = vmatpush2.msra.mxu0 0.0
    %725 = vmatprep.subr.mxu0 0.0
    %726 = vmatpush2.msra.mxu0 0.0
    %727 = vmatprep.subr.mxu0 0.0
    %728 = vmatpush2.msra.mxu0 0.0
    %729 = vmatprep.subr.mxu0 0.0
    %730 = vmatpush2.msra.mxu0 0.0
    %731 = vmatprep.subr.mxu0 0.0
    %732 = vmatpush2.msra.mxu0 0.0
    %733 = vmatprep.subr.mxu0 0.0
    %734 = vmatpush2.msra.mxu0 0.0
    %735 = vmatprep.subr.mxu0 0.0
    %736 = vmatpush2.msra.mxu0 0.0
    %737 = vmatprep.subr.mxu0 0.0
    %738 = vmatpush2.msra.mxu0 0.0
    %739 = vmatprep.subr.mxu0 0.0
    %740 = vmatpush2.msra.mxu0 0.0
    %741 = vmatprep.subr.mxu0 0.0
    %742 = vmatpush2.msra.mxu0 0.0
    %743 = vmatprep.subr.mxu0 0.0
    %744 = vmatpush2.msra.mxu0 0.0
    %745 = vmatprep.subr.mxu0 0.0
    %746 = vmatpush2.msra.mxu0 0.0
    %747 = vmatprep.subr.mxu0 0.0
    %748 = vmatpush2.msra.mxu0 0.0
    %749 = vmatprep.subr.mxu0 0.0
    %750 = vmatpush2.msra.mxu0 0.0
    %751 = vmatprep.subr.mxu0 0.0
    %752 = vmatpush2.msra.mxu0 0.0
    %753 = vmatprep.subr.mxu0 0.0
    %754 = vmatpush2.msra.mxu0 0.0
    %755 = vmatprep.mubr.f32.mxu0 0.0
    %756 = vmatmul.mubr.f32.gmra.mxu0 %v689
    %v757 = vpop.f32.mrf.mxu0
    %v758 = vadd.f32 %v684, %v757
    %v759 = vpop.f32.mrf.mxu0
    %v760 = vadd.f32 %v685, %v759
    %761 = vdwg.mxu0
    %v762 = vxor.u32 %v758, 2147483648
    %v763 = vxor.u32 %v760, 2147483648
    %v764 = vmul.f32 %v762, 1.442695
    %v765 = vpow.pop %v764
    %v766 = vmul.f32 %v763, 1.442695
    %v767 = vpow.pop %v766
    %v768 = vadd.f32 %v765, 1.0
    %v769 = vadd.f32 %v767, 1.0
    %v770 = vrcp.pop %v768
    %v771 = vmul.f32 1.0, %v770
    %v772 = vrcp.pop %v769
    %v773 = vmul.f32 1.0, %v772
    %v774 = vtanh.pop %v760
    %v775 = vmul.f32 %v771, %v671
    %777 = vrot.lane.b32.xlu0 %v774, 64
    %v778 = vpop.permute.xlu0 %777
    %v780 = vmul.f32 %v771, %v778
    %782 = vrot.lane.b32.xlu0 %v780, 64
    %v783 = vpop.permute.xlu0 %782
    %v785 = vadd.f32 %v775, %v783
    %v786 = vtanh.pop %v785
    %788 = vrot.lane.b32.xlu0 %v786, 64
    %v789 = vpop.permute.xlu0 %788
    %v791 = vmul.f32 %v773, %v789
    %792 = vst.msk [vmem:[#allocation4 + $0x6] sm:$0x3] %vm448, %v791
    %793 = vst.msk [vmem:[#allocation4 + $0x8] sm:$0x3] %vm450, %v791
    %v794 = vld [vmem:[#allocation3 + $0x10] sm:$0x3]
    %v795 = vld [vmem:[#allocation3 + $0x18] sm:$0x3]
    %v797 = vsel %vm343, %v791, 0
    %799 = vmatprep.subr.mxu0 0.0
    %800 = vmatpush1.msra.mxu0 0.0
    %801 = vmatprep.subr.mxu0 0.0
    %802 = vmatpush1.msra.mxu0 0.0
    %803 = vmatprep.subr.mxu0 0.0
    %804 = vmatpush1.msra.mxu0 0.0
    %805 = vmatprep.subr.mxu0 0.0
    %806 = vmatpush1.msra.mxu0 0.0
    %807 = vmatprep.subr.mxu0 0.0
    %808 = vmatpush1.msra.mxu0 0.0
    %809 = vmatprep.subr.mxu0 0.0
    %810 = vmatpush1.msra.mxu0 0.0
    %811 = vmatprep.subr.mxu0 0.0
    %812 = vmatpush1.msra.mxu0 0.0
    %813 = vmatprep.subr.mxu0 0.0
    %814 = vmatpush1.msra.mxu0 0.0
    %815 = vmatprep.subr.mxu0 %v340
    %816 = vmatpush1.msra.mxu0 %v339
    %817 = vmatprep.subr.mxu0 %v338
    %818 = vmatpush1.msra.mxu0 %v337
    %819 = vmatprep.subr.mxu0 %v336
    %820 = vmatpush1.msra.mxu0 %v335
    %821 = vmatprep.subr.mxu0 %v334
    %822 = vmatpush1.msra.mxu0 %v333
    %823 = vmatprep.subr.mxu0 %v332
    %824 = vmatpush1.msra.mxu0 %v331
    %825 = vmatprep.subr.mxu0 %v330
    %826 = vmatpush1.msra.mxu0 %v329
    %827 = vmatprep.subr.mxu0 %v328
    %828 = vmatpush1.msra.mxu0 %v327
    %829 = vmatprep.subr.mxu0 %v326
    %830 = vmatpush1.msra.mxu0 %v325
    %831 = vmatprep.subr.mxu0 0.0
    %832 = vmatpush2.msra.mxu0 0.0
    %833 = vmatprep.subr.mxu0 0.0
    %834 = vmatpush2.msra.mxu0 0.0
    %835 = vmatprep.subr.mxu0 0.0
    %836 = vmatpush2.msra.mxu0 0.0
    %837 = vmatprep.subr.mxu0 0.0
    %838 = vmatpush2.msra.mxu0 0.0
    %839 = vmatprep.subr.mxu0 0.0
    %840 = vmatpush2.msra.mxu0 0.0
    %841 = vmatprep.subr.mxu0 0.0
    %842 = vmatpush2.msra.mxu0 0.0
    %843 = vmatprep.subr.mxu0 0.0
    %844 = vmatpush2.msra.mxu0 0.0
    %845 = vmatprep.subr.mxu0 0.0
    %846 = vmatpush2.msra.mxu0 0.0
    %847 = vmatprep.subr.mxu0 0.0
    %848 = vmatpush2.msra.mxu0 0.0
    %849 = vmatprep.subr.mxu0 0.0
    %850 = vmatpush2.msra.mxu0 0.0
    %851 = vmatprep.subr.mxu0 0.0
    %852 = vmatpush2.msra.mxu0 0.0
    %853 = vmatprep.subr.mxu0 0.0
    %854 = vmatpush2.msra.mxu0 0.0
    %855 = vmatprep.subr.mxu0 0.0
    %856 = vmatpush2.msra.mxu0 0.0
    %857 = vmatprep.subr.mxu0 0.0
    %858 = vmatpush2.msra.mxu0 0.0
    %859 = vmatprep.subr.mxu0 0.0
    %860 = vmatpush2.msra.mxu0 0.0
    %861 = vmatprep.subr.mxu0 0.0
    %862 = vmatpush2.msra.mxu0 0.0
    %863 = vmatprep.mubr.f32.mxu0 0.0
    %864 = vmatmul.mubr.f32.gmra.mxu0 %v797
    %v865 = vpop.f32.mrf.mxu0
    %v866 = vadd.f32 %v794, %v865
    %v867 = vpop.f32.mrf.mxu0
    %v868 = vadd.f32 %v795, %v867
    %869 = vdwg.mxu0
    %v870 = vxor.u32 %v866, 2147483648
    %v871 = vxor.u32 %v868, 2147483648
    %v872 = vmul.f32 %v870, 1.442695
    %v873 = vpow.pop %v872
    %v874 = vmul.f32 %v871, 1.442695
    %v875 = vpow.pop %v874
    %v876 = vadd.f32 %v873, 1.0
    %v877 = vadd.f32 %v875, 1.0
    %v878 = vrcp.pop %v876
    %v879 = vmul.f32 1.0, %v878
    %v880 = vrcp.pop %v877
    %v881 = vmul.f32 1.0, %v880
    %v882 = vtanh.pop %v868
    %v883 = vmul.f32 %v879, %v785
    %885 = vrot.lane.b32.xlu0 %v882, 64
    %v886 = vpop.permute.xlu0 %885
    %v888 = vmul.f32 %v879, %v886
    %890 = vrot.lane.b32.xlu0 %v888, 64
    %v891 = vpop.permute.xlu0 %890
    %v893 = vadd.f32 %v883, %v891
    %v894 = vtanh.pop %v893
    %896 = vrot.lane.b32.xlu0 %v894, 64
    %v897 = vpop.permute.xlu0 %896
    %v899 = vmul.f32 %v881, %v897
    %900 = vst.msk [vmem:[#allocation4 + $0x8] sm:$0x3] %vm448, %v899
    %901 = vst.msk [vmem:[#allocation4 + $0x6] sm:$0x3] %vm450, %v899
    %v902 = vld [vmem:[#allocation3 + $0x10] sm:$0xc]
    %v903 = vld [vmem:[#allocation3 + $0x18] sm:$0xc]
    %v906 = vrot.slane %v902, 2
    %v907 = vrot.slane %v903, 2
    %v911 = vsel %vm343, %v899, 0
    %913 = vmatprep.subr.mxu0 0.0
    %914 = vmatpush1.msra.mxu0 0.0
    %915 = vmatprep.subr.mxu0 0.0
    %916 = vmatpush1.msra.mxu0 0.0
    %917 = vmatprep.subr.mxu0 0.0
    %918 = vmatpush1.msra.mxu0 0.0
    %919 = vmatprep.subr.mxu0 0.0
    %920 = vmatpush1.msra.mxu0 0.0
    %921 = vmatprep.subr.mxu0 0.0
    %922 = vmatpush1.msra.mxu0 0.0
    %923 = vmatprep.subr.mxu0 0.0
    %924 = vmatpush1.msra.mxu0 0.0
    %925 = vmatprep.subr.mxu0 0.0
    %926 = vmatpush1.msra.mxu0 0.0
    %927 = vmatprep.subr.mxu0 0.0
    %928 = vmatpush1.msra.mxu0 0.0
    %929 = vmatprep.subr.mxu0 %v340
    %930 = vmatpush1.msra.mxu0 %v339
    %931 = vmatprep.subr.mxu0 %v338
    %932 = vmatpush1.msra.mxu0 %v337
    %933 = vmatprep.subr.mxu0 %v336
    %934 = vmatpush1.msra.mxu0 %v335
    %935 = vmatprep.subr.mxu0 %v334
    %936 = vmatpush1.msra.mxu0 %v333
    %937 = vmatprep.subr.mxu0 %v332
    %938 = vmatpush1.msra.mxu0 %v331
    %939 = vmatprep.subr.mxu0 %v330
    %940 = vmatpush1.msra.mxu0 %v329
    %941 = vmatprep.subr.mxu0 %v328
    %942 = vmatpush1.msra.mxu0 %v327
    %943 = vmatprep.subr.mxu0 %v326
    %944 = vmatpush1.msra.mxu0 %v325
    %945 = vmatprep.subr.mxu0 0.0
    %946 = vmatpush2.msra.mxu0 0.0
    %947 = vmatprep.subr.mxu0 0.0
    %948 = vmatpush2.msra.mxu0 0.0
    %949 = vmatprep.subr.mxu0 0.0
    %950 = vmatpush2.msra.mxu0 0.0
    %951 = vmatprep.subr.mxu0 0.0
    %952 = vmatpush2.msra.mxu0 0.0
    %953 = vmatprep.subr.mxu0 0.0
    %954 = vmatpush2.msra.mxu0 0.0
    %955 = vmatprep.subr.mxu0 0.0
    %956 = vmatpush2.msra.mxu0 0.0
    %957 = vmatprep.subr.mxu0 0.0
    %958 = vmatpush2.msra.mxu0 0.0
    %959 = vmatprep.subr.mxu0 0.0
    %960 = vmatpush2.msra.mxu0 0.0
    %961 = vmatprep.subr.mxu0 0.0
    %962 = vmatpush2.msra.mxu0 0.0
    %963 = vmatprep.subr.mxu0 0.0
    %964 = vmatpush2.msra.mxu0 0.0
    %965 = vmatprep.subr.mxu0 0.0
    %966 = vmatpush2.msra.mxu0 0.0
    %967 = vmatprep.subr.mxu0 0.0
    %968 = vmatpush2.msra.mxu0 0.0
    %969 = vmatprep.subr.mxu0 0.0
    %970 = vmatpush2.msra.mxu0 0.0
    %971 = vmatprep.subr.mxu0 0.0
    %972 = vmatpush2.msra.mxu0 0.0
    %973 = vmatprep.subr.mxu0 0.0
    %974 = vmatpush2.msra.mxu0 0.0
    %975 = vmatprep.subr.mxu0 0.0
    %976 = vmatpush2.msra.mxu0 0.0
    %977 = vmatprep.mubr.f32.mxu0 0.0
    %978 = vmatmul.mubr.f32.gmra.mxu0 %v911
    %v979 = vpop.f32.mrf.mxu0
    %v980 = vadd.f32 %v906, %v979
    %v981 = vpop.f32.mrf.mxu0
    %v982 = vadd.f32 %v907, %v981
    %983 = vdwg.mxu0
    %v984 = vxor.u32 %v980, 2147483648
    %v985 = vxor.u32 %v982, 2147483648
    %v986 = vmul.f32 %v984, 1.442695
    %v987 = vpow.pop %v986
    %v988 = vmul.f32 %v985, 1.442695
    %v989 = vpow.pop %v988
    %v990 = vadd.f32 %v987, 1.0
    %v991 = vadd.f32 %v989, 1.0
    %v992 = vrcp.pop %v990
    %v993 = vmul.f32 1.0, %v992
    %v994 = vrcp.pop %v991
    %v995 = vmul.f32 1.0, %v994
    %v996 = vtanh.pop %v982
    %v997 = vmul.f32 %v993, %v893
    %999 = vrot.lane.b32.xlu0 %v996, 64
    %v1000 = vpop.permute.xlu0 %999
    %v1002 = vmul.f32 %v993, %v1000
    %1004 = vrot.lane.b32.xlu0 %v1002, 64
    %v1005 = vpop.permute.xlu0 %1004
    %v1007 = vadd.f32 %v997, %v1005
    %v1008 = vtanh.pop %v1007
    %1010 = vrot.lane.b32.xlu0 %v1008, 64
    %v1011 = vpop.permute.xlu0 %1010
    %v1013 = vmul.f32 %v995, %v1011
    %1014 = vst.msk [vmem:[#allocation4 + $0xa] sm:$0x3] %vm448, %v1013
    %1015 = vst.msk [vmem:[#allocation4 + $0x4] sm:$0x3] %vm450, %v1013
    %v1016 = vld [vmem:[#allocation3 + $0x10] sm:$0x30]
    %v1017 = vld [vmem:[#allocation3 + $0x18] sm:$0x30]
    %v1020 = vrot.slane %v1016, 4
    %v1021 = vrot.slane %v1017, 4
    %v1025 = vsel %vm343, %v1013, 0
    %1027 = vmatprep.subr.mxu0 0.0
    %1028 = vmatpush1.msra.mxu0 0.0
    %1029 = vmatprep.subr.mxu0 0.0
    %1030 = vmatpush1.msra.mxu0 0.0
    %1031 = vmatprep.subr.mxu0 0.0
    %1032 = vmatpush1.msra.mxu0 0.0
    %1033 = vmatprep.subr.mxu0 0.0
    %1034 = vmatpush1.msra.mxu0 0.0
    %1035 = vmatprep.subr.mxu0 0.0
    %1036 = vmatpush1.msra.mxu0 0.0
    %1037 = vmatprep.subr.mxu0 0.0
    %1038 = vmatpush1.msra.mxu0 0.0
    %1039 = vmatprep.subr.mxu0 0.0
    %1040 = vmatpush1.msra.mxu0 0.0
    %1041 = vmatprep.subr.mxu0 0.0
    %1042 = vmatpush1.msra.mxu0 0.0
    %1043 = vmatprep.subr.mxu0 %v340
    %1044 = vmatpush1.msra.mxu0 %v339
    %1045 = vmatprep.subr.mxu0 %v338
    %1046 = vmatpush1.msra.mxu0 %v337
    %1047 = vmatprep.subr.mxu0 %v336
    %1048 = vmatpush1.msra.mxu0 %v335
    %1049 = vmatprep.subr.mxu0 %v334
    %1050 = vmatpush1.msra.mxu0 %v333
    %1051 = vmatprep.subr.mxu0 %v332
    %1052 = vmatpush1.msra.mxu0 %v331
    %1053 = vmatprep.subr.mxu0 %v330
    %1054 = vmatpush1.msra.mxu0 %v329
    %1055 = vmatprep.subr.mxu0 %v328
    %1056 = vmatpush1.msra.mxu0 %v327
    %1057 = vmatprep.subr.mxu0 %v326
    %1058 = vmatpush1.msra.mxu0 %v325
    %1059 = vmatprep.subr.mxu0 0.0
    %1060 = vmatpush2.msra.mxu0 0.0
    %1061 = vmatprep.subr.mxu0 0.0
    %1062 = vmatpush2.msra.mxu0 0.0
    %1063 = vmatprep.subr.mxu0 0.0
    %1064 = vmatpush2.msra.mxu0 0.0
    %1065 = vmatprep.subr.mxu0 0.0
    %1066 = vmatpush2.msra.mxu0 0.0
    %1067 = vmatprep.subr.mxu0 0.0
    %1068 = vmatpush2.msra.mxu0 0.0
    %1069 = vmatprep.subr.mxu0 0.0
    %1070 = vmatpush2.msra.mxu0 0.0
    %1071 = vmatprep.subr.mxu0 0.0
    %1072 = vmatpush2.msra.mxu0 0.0
    %1073 = vmatprep.subr.mxu0 0.0
    %1074 = vmatpush2.msra.mxu0 0.0
    %1075 = vmatprep.subr.mxu0 0.0
    %1076 = vmatpush2.msra.mxu0 0.0
    %1077 = vmatprep.subr.mxu0 0.0
    %1078 = vmatpush2.msra.mxu0 0.0
    %1079 = vmatprep.subr.mxu0 0.0
    %1080 = vmatpush2.msra.mxu0 0.0
    %1081 = vmatprep.subr.mxu0 0.0
    %1082 = vmatpush2.msra.mxu0 0.0
    %1083 = vmatprep.subr.mxu0 0.0
    %1084 = vmatpush2.msra.mxu0 0.0
    %1085 = vmatprep.subr.mxu0 0.0
    %1086 = vmatpush2.msra.mxu0 0.0
    %1087 = vmatprep.subr.mxu0 0.0
    %1088 = vmatpush2.msra.mxu0 0.0
    %1089 = vmatprep.subr.mxu0 0.0
    %1090 = vmatpush2.msra.mxu0 0.0
    %1091 = vmatprep.mubr.f32.mxu0 0.0
    %1092 = vmatmul.mubr.f32.gmra.mxu0 %v1025
    %v1093 = vpop.f32.mrf.mxu0
    %v1094 = vadd.f32 %v1020, %v1093
    %v1095 = vpop.f32.mrf.mxu0
    %v1096 = vadd.f32 %v1021, %v1095
    %1097 = vdwg.mxu0
    %v1098 = vxor.u32 %v1094, 2147483648
    %v1099 = vxor.u32 %v1096, 2147483648
    %v1100 = vmul.f32 %v1098, 1.442695
    %v1101 = vpow.pop %v1100
    %v1102 = vmul.f32 %v1099, 1.442695
    %v1103 = vpow.pop %v1102
    %v1104 = vadd.f32 %v1101, 1.0
    %v1105 = vadd.f32 %v1103, 1.0
    %v1106 = vrcp.pop %v1104
    %v1107 = vmul.f32 1.0, %v1106
    %v1108 = vrcp.pop %v1105
    %v1109 = vmul.f32 1.0, %v1108
    %v1110 = vtanh.pop %v1096
    %v1111 = vmul.f32 %v1107, %v1007
    %1113 = vrot.lane.b32.xlu0 %v1110, 64
    %v1114 = vpop.permute.xlu0 %1113
    %v1116 = vmul.f32 %v1107, %v1114
    %1118 = vrot.lane.b32.xlu0 %v1116, 64
    %v1119 = vpop.permute.xlu0 %1118
    %v1121 = vadd.f32 %v1111, %v1119
    %v1122 = vtanh.pop %v1121
    %1124 = vrot.lane.b32.xlu0 %v1122, 64
    %v1125 = vpop.permute.xlu0 %1124
    %v1127 = vmul.f32 %v1109, %v1125
    %1128 = vst.msk [vmem:[#allocation4 + $0xc] sm:$0x3] %vm448, %v1127
    %1129 = vst.msk [vmem:[#allocation4 + $0x2] sm:$0x3] %vm450, %v1127
    %v1130 = vld [vmem:[#allocation3 + $0x10] sm:$0xc0]
    %v1131 = vld [vmem:[#allocation3 + $0x18] sm:$0xc0]
    %v1134 = vrot.slane %v1130, 6
    %v1135 = vrot.slane %v1131, 6
    %v1139 = vsel %vm343, %v1127, 0
    %1141 = vmatprep.subr.mxu0 0.0
    %1142 = vmatpush1.msra.mxu0 0.0
    %1143 = vmatprep.subr.mxu0 0.0
    %1144 = vmatpush1.msra.mxu0 0.0
    %1145 = vmatprep.subr.mxu0 0.0
    %1146 = vmatpush1.msra.mxu0 0.0
    %1147 = vmatprep.subr.mxu0 0.0
    %1148 = vmatpush1.msra.mxu0 0.0
    %1149 = vmatprep.subr.mxu0 0.0
    %1150 = vmatpush1.msra.mxu0 0.0
    %1151 = vmatprep.subr.mxu0 0.0
    %1152 = vmatpush1.msra.mxu0 0.0
    %1153 = vmatprep.subr.mxu0 0.0
    %1154 = vmatpush1.msra.mxu0 0.0
    %1155 = vmatprep.subr.mxu0 0.0
    %1156 = vmatpush1.msra.mxu0 0.0
    %1157 = vmatprep.subr.mxu0 %v340
    %1158 = vmatpush1.msra.mxu0 %v339
    %1159 = vmatprep.subr.mxu0 %v338
    %1160 = vmatpush1.msra.mxu0 %v337
    %1161 = vmatprep.subr.mxu0 %v336
    %1162 = vmatpush1.msra.mxu0 %v335
    %1163 = vmatprep.subr.mxu0 %v334
    %1164 = vmatpush1.msra.mxu0 %v333
    %1165 = vmatprep.subr.mxu0 %v332
    %1166 = vmatpush1.msra.mxu0 %v331
    %1167 = vmatprep.subr.mxu0 %v330
    %1168 = vmatpush1.msra.mxu0 %v329
    %1169 = vmatprep.subr.mxu0 %v328
    %1170 = vmatpush1.msra.mxu0 %v327
    %1171 = vmatprep.subr.mxu0 %v326
    %1172 = vmatpush1.msra.mxu0 %v325
    %1173 = vmatprep.subr.mxu0 0.0
    %1174 = vmatpush2.msra.mxu0 0.0
    %1175 = vmatprep.subr.mxu0 0.0
    %1176 = vmatpush2.msra.mxu0 0.0
    %1177 = vmatprep.subr.mxu0 0.0
    %1178 = vmatpush2.msra.mxu0 0.0
    %1179 = vmatprep.subr.mxu0 0.0
    %1180 = vmatpush2.msra.mxu0 0.0
    %1181 = vmatprep.subr.mxu0 0.0
    %1182 = vmatpush2.msra.mxu0 0.0
    %1183 = vmatprep.subr.mxu0 0.0
    %1184 = vmatpush2.msra.mxu0 0.0
    %1185 = vmatprep.subr.mxu0 0.0
    %1186 = vmatpush2.msra.mxu0 0.0
    %1187 = vmatprep.subr.mxu0 0.0
    %1188 = vmatpush2.msra.mxu0 0.0
    %1189 = vmatprep.subr.mxu0 0.0
    %1190 = vmatpush2.msra.mxu0 0.0
    %1191 = vmatprep.subr.mxu0 0.0
    %1192 = vmatpush2.msra.mxu0 0.0
    %1193 = vmatprep.subr.mxu0 0.0
    %1194 = vmatpush2.msra.mxu0 0.0
    %1195 = vmatprep.subr.mxu0 0.0
    %1196 = vmatpush2.msra.mxu0 0.0
    %1197 = vmatprep.subr.mxu0 0.0
    %1198 = vmatpush2.msra.mxu0 0.0
    %1199 = vmatprep.subr.mxu0 0.0
    %1200 = vmatpush2.msra.mxu0 0.0
    %1201 = vmatprep.subr.mxu0 0.0
    %1202 = vmatpush2.msra.mxu0 0.0
    %1203 = vmatprep.subr.mxu0 0.0
    %1204 = vmatpush2.msra.mxu0 0.0
    %1205 = vmatprep.mubr.f32.mxu0 0.0
    %1206 = vmatmul.mubr.f32.gmra.mxu0 %v1139
    %v1207 = vpop.f32.mrf.mxu0
    %v1208 = vadd.f32 %v1134, %v1207
    %v1209 = vpop.f32.mrf.mxu0
    %v1210 = vadd.f32 %v1135, %v1209
    %1211 = vdwg.mxu0
    %v1212 = vxor.u32 %v1208, 2147483648
    %v1213 = vxor.u32 %v1210, 2147483648
    %v1214 = vmul.f32 %v1212, 1.442695
    %v1215 = vpow.pop %v1214
    %v1216 = vmul.f32 %v1213, 1.442695
    %v1217 = vpow.pop %v1216
    %v1218 = vadd.f32 %v1215, 1.0
    %v1219 = vadd.f32 %v1217, 1.0
    %v1220 = vrcp.pop %v1218
    %v1221 = vmul.f32 1.0, %v1220
    %v1222 = vrcp.pop %v1219
    %v1223 = vmul.f32 1.0, %v1222
    %v1224 = vtanh.pop %v1210
    %v1225 = vmul.f32 %v1221, %v1121
    %1227 = vrot.lane.b32.xlu0 %v1224, 64
    %v1228 = vpop.permute.xlu0 %1227
    %v1230 = vmul.f32 %v1221, %v1228
    %1232 = vrot.lane.b32.xlu0 %v1230, 64
    %v1233 = vpop.permute.xlu0 %1232
    %v1235 = vadd.f32 %v1225, %v1233
    %v1236 = vtanh.pop %v1235
    %1238 = vrot.lane.b32.xlu0 %v1236, 64
    %v1239 = vpop.permute.xlu0 %1238
    %v1241 = vmul.f32 %v1223, %v1239
    %1242 = vst.msk [vmem:[#allocation4 + $0xe] sm:$0x3] %vm448, %v1241
    %1243 = vst.msk [vmem:[#allocation4] sm:$0x3] %vm450, %v1241
    %v1244 = vld [vmem:[#allocation4] sm:$0xff]
    %v1245 = vld [vmem:[#allocation4 + $0x8] sm:$0xff]
    %v1246 = vld [vmem:[#allocation8] sm:$0xff]
    %v1247 = vld [vmem:[#allocation8 + $0x8] sm:$0xff]
    %v1248 = vld [vmem:[#allocation8 + $0x10] sm:$0xff]
    %v1249 = vld [vmem:[#allocation8 + $0x18] sm:$0xff]
    %v1250 = vld [vmem:[#allocation8 + $0x20] sm:$0xff]
    %v1251 = vld [vmem:[#allocation8 + $0x28] sm:$0xff]
    %v1252 = vld [vmem:[#allocation8 + $0x30] sm:$0xff]
    %v1253 = vld [vmem:[#allocation8 + $0x38] sm:$0xff]
    %v1254 = vld [vmem:[#allocation8 + $0x40] sm:$0xff]
    %v1255 = vld [vmem:[#allocation8 + $0x48] sm:$0xff]
    %v1256 = vld [vmem:[#allocation8 + $0x50] sm:$0xff]
    %v1257 = vld [vmem:[#allocation8 + $0x58] sm:$0xff]
    %v1258 = vld [vmem:[#allocation8 + $0x60] sm:$0xff]
    %v1259 = vld [vmem:[#allocation8 + $0x68] sm:$0xff]
    %v1260 = vld [vmem:[#allocation8 + $0x70] sm:$0xff]
    %v1261 = vld [vmem:[#allocation8 + $0x78] sm:$0xff]
    %v1262 = vld [vmem:[%s6] sm:$0x3]
    %v1264 = vlaneseq
    %v1265 = vshrl.u32 %v1264, 7
    %v1266 = vsub.s32 0, %v1265
    %v1267 = vrot.slane %v1262, %v1266
    %v1268 = vlaneseq
    %v1269 = vshrl.u32 %v1268, 7
    %v1270 = vsub.s32 1, %v1269
    %v1271 = vrot.slane %v1262, %v1270
    %v1275 = vsel %vm343, %v1244, 0
    %v1278 = vsel %vm343, %v1245, 0
    %1280 = vmatprep.subr.mxu0 0.0
    %1281 = vmatpush1.msra.mxu0 0.0
    %1282 = vmatprep.subr.mxu0 0.0
    %1283 = vmatpush1.msra.mxu0 0.0
    %1284 = vmatprep.subr.mxu0 0.0
    %1285 = vmatpush1.msra.mxu0 0.0
    %1286 = vmatprep.subr.mxu0 0.0
    %1287 = vmatpush1.msra.mxu0 0.0
    %1288 = vmatprep.subr.mxu0 0.0
    %1289 = vmatpush1.msra.mxu0 0.0
    %1290 = vmatprep.subr.mxu0 0.0
    %1291 = vmatpush1.msra.mxu0 0.0
    %1292 = vmatprep.subr.mxu0 0.0
    %1293 = vmatpush1.msra.mxu0 0.0
    %1294 = vmatprep.subr.mxu0 0.0
    %1295 = vmatpush1.msra.mxu0 0.0
    %1296 = vmatprep.subr.mxu0 %v1261
    %1297 = vmatpush1.msra.mxu0 %v1260
    %1298 = vmatprep.subr.mxu0 %v1259
    %1299 = vmatpush1.msra.mxu0 %v1258
    %1300 = vmatprep.subr.mxu0 %v1257
    %1301 = vmatpush1.msra.mxu0 %v1256
    %1302 = vmatprep.subr.mxu0 %v1255
    %1303 = vmatpush1.msra.mxu0 %v1254
    %1304 = vmatprep.subr.mxu0 %v1253
    %1305 = vmatpush1.msra.mxu0 %v1252
    %1306 = vmatprep.subr.mxu0 %v1251
    %1307 = vmatpush1.msra.mxu0 %v1250
    %1308 = vmatprep.subr.mxu0 %v1249
    %1309 = vmatpush1.msra.mxu0 %v1248
    %1310 = vmatprep.subr.mxu0 %v1247
    %1311 = vmatpush1.msra.mxu0 %v1246
    %1312 = vmatprep.subr.mxu0 0.0
    %1313 = vmatpush2.msra.mxu0 0.0
    %1314 = vmatprep.subr.mxu0 0.0
    %1315 = vmatpush2.msra.mxu0 0.0
    %1316 = vmatprep.subr.mxu0 0.0
    %1317 = vmatpush2.msra.mxu0 0.0
    %1318 = vmatprep.subr.mxu0 0.0
    %1319 = vmatpush2.msra.mxu0 0.0
    %1320 = vmatprep.subr.mxu0 0.0
    %1321 = vmatpush2.msra.mxu0 0.0
    %1322 = vmatprep.subr.mxu0 0.0
    %1323 = vmatpush2.msra.mxu0 0.0
    %1324 = vmatprep.subr.mxu0 0.0
    %1325 = vmatpush2.msra.mxu0 0.0
    %1326 = vmatprep.subr.mxu0 0.0
    %1327 = vmatpush2.msra.mxu0 0.0
    %1328 = vmatprep.subr.mxu0 0.0
    %1329 = vmatpush2.msra.mxu0 0.0
    %1330 = vmatprep.subr.mxu0 0.0
    %1331 = vmatpush2.msra.mxu0 0.0
    %1332 = vmatprep.subr.mxu0 0.0
    %1333 = vmatpush2.msra.mxu0 0.0
    %1334 = vmatprep.subr.mxu0 0.0
    %1335 = vmatpush2.msra.mxu0 0.0
    %1336 = vmatprep.subr.mxu0 0.0
    %1337 = vmatpush2.msra.mxu0 0.0
    %1338 = vmatprep.subr.mxu0 0.0
    %1339 = vmatpush2.msra.mxu0 0.0
    %1340 = vmatprep.subr.mxu0 0.0
    %1341 = vmatpush2.msra.mxu0 0.0
    %1342 = vmatprep.subr.mxu0 0.0
    %1343 = vmatpush2.msra.mxu0 0.0
    %1344 = vmatprep.mubr.f32.mxu0 0.0
    %1345 = vmatmul.mubr.f32.gmra.mxu0 %v1275
    %v1346 = vpop.f32.mrf.mxu0
    %v1347 = vadd.f32 %v1267, %v1346
    %v1348 = vpop.f32.mrf.mxu0
    %v1349 = vadd.f32 %v1271, %v1348
    %1350 = vmatprep.mubr.f32.mxu0 0.0
    %1351 = vmatmul.mubr.f32.gmra.mxu0 %v1278
    %v1352 = vpop.f32.mrf.mxu0
    %v1353 = vadd.f32 %v1267, %v1352
    %v1354 = vpop.f32.mrf.mxu0
    %v1355 = vadd.f32 %v1271, %v1354
    %1356 = vdwg.mxu0
    %1357 = vst [vmem:[#allocation2] sm:$0xff] %v1347
    %1358 = vst [vmem:[#allocation2 + $0x8] sm:$0xff] %v1349
    %1359 = vst [vmem:[#allocation2 + $0x10] sm:$0xff] %v1353
    %1360 = vst [vmem:[#allocation2 + $0x18] sm:$0xff] %v1355
    %v1361 = vld [vmem:[#allocation2] sm:$0x3]
    %v1362 = vld [vmem:[#allocation2 + $0x8] sm:$0x3]
    %v1363 = vld [vmem:[#allocation2 + $0x10] sm:$0xc0]
    %v1364 = vld [vmem:[#allocation2 + $0x18] sm:$0xc0]
    %v1367 = vrot.slane %v1363, 6
    %v1368 = vrot.slane %v1364, 6
    %v1371 = vsel %vm101, %v1361, %v1367
    %v1372 = vsel %vm102, %v1362, %v1368
    %1373 = vst [vmem:[#allocation3] sm:$0x3] %v1371
    %1374 = vst [vmem:[#allocation3 + $0x8] sm:$0x3] %v1372
    %v1375 = vld [vmem:[#allocation2] sm:$0xc]
    %v1376 = vld [vmem:[#allocation2 + $0x8] sm:$0xc]
    %v1377 = vld [vmem:[#allocation2 + $0x10] sm:$0x30]
    %v1378 = vld [vmem:[#allocation2 + $0x18] sm:$0x30]
    %v1381 = vrot.slane %v1377, 2
    %v1382 = vrot.slane %v1378, 2
    %v1385 = vsel %vm101, %v1375, %v1381
    %v1386 = vsel %vm102, %v1376, %v1382
    %1387 = vst [vmem:[#allocation3] sm:$0xc] %v1385
    %1388 = vst [vmem:[#allocation3 + $0x8] sm:$0xc] %v1386
    %v1389 = vld [vmem:[#allocation2] sm:$0x30]
    %v1390 = vld [vmem:[#allocation2 + $0x8] sm:$0x30]
    %v1391 = vld [vmem:[#allocation2 + $0x10] sm:$0xc]
    %v1392 = vld [vmem:[#allocation2 + $0x18] sm:$0xc]
    %v1395 = vrot.slane %v1391, 6
    %v1396 = vrot.slane %v1392, 6
    %v1399 = vsel %vm101, %v1389, %v1395
    %v1400 = vsel %vm102, %v1390, %v1396
    %1401 = vst [vmem:[#allocation3] sm:$0x30] %v1399
    %1402 = vst [vmem:[#allocation3 + $0x8] sm:$0x30] %v1400
    %v1403 = vld [vmem:[#allocation2] sm:$0xc0]
    %v1404 = vld [vmem:[#allocation2 + $0x8] sm:$0xc0]
    %v1405 = vld [vmem:[#allocation2 + $0x10] sm:$0x3]
    %v1406 = vld [vmem:[#allocation2 + $0x18] sm:$0x3]
    %v1409 = vrot.slane %v1405, 2
    %v1410 = vrot.slane %v1406, 2
    %v1413 = vsel %vm101, %v1403, %v1409
    %v1414 = vsel %vm102, %v1404, %v1410
    %1415 = vst [vmem:[#allocation3] sm:$0xc0] %v1413
    %1416 = vst [vmem:[#allocation3 + $0x8] sm:$0xc0] %v1414
    %v1417 = vld [vmem:[#allocation2 + $0x10] sm:$0x3]
    %v1418 = vld [vmem:[#allocation2 + $0x18] sm:$0x3]
    %v1419 = vld [vmem:[#allocation2] sm:$0xc0]
    %v1420 = vld [vmem:[#allocation2 + $0x8] sm:$0xc0]
    %v1423 = vrot.slane %v1419, 6
    %v1424 = vrot.slane %v1420, 6
    %v1427 = vsel %vm101, %v1417, %v1423
    %v1428 = vsel %vm102, %v1418, %v1424
    %1429 = vst [vmem:[#allocation3 + $0x10] sm:$0x3] %v1427
    %1430 = vst [vmem:[#allocation3 + $0x18] sm:$0x3] %v1428
    %v1431 = vld [vmem:[#allocation2 + $0x10] sm:$0xc]
    %v1432 = vld [vmem:[#allocation2 + $0x18] sm:$0xc]
    %v1433 = vld [vmem:[#allocation2] sm:$0x30]
    %v1434 = vld [vmem:[#allocation2 + $0x8] sm:$0x30]
    %v1437 = vrot.slane %v1433, 2
    %v1438 = vrot.slane %v1434, 2
    %v1441 = vsel %vm101, %v1431, %v1437
    %v1442 = vsel %vm102, %v1432, %v1438
    %1443 = vst [vmem:[#allocation3 + $0x10] sm:$0xc] %v1441
    %1444 = vst [vmem:[#allocation3 + $0x18] sm:$0xc] %v1442
    %v1445 = vld [vmem:[#allocation2 + $0x10] sm:$0x30]
    %v1446 = vld [vmem:[#allocation2 + $0x18] sm:$0x30]
    %v1447 = vld [vmem:[#allocation2] sm:$0xc]
    %v1448 = vld [vmem:[#allocation2 + $0x8] sm:$0xc]
    %v1451 = vrot.slane %v1447, 6
    %v1452 = vrot.slane %v1448, 6
    %v1455 = vsel %vm101, %v1445, %v1451
    %v1456 = vsel %vm102, %v1446, %v1452
    %1457 = vst [vmem:[#allocation3 + $0x10] sm:$0x30] %v1455
    %1458 = vst [vmem:[#allocation3 + $0x18] sm:$0x30] %v1456
    %v1459 = vld [vmem:[#allocation2 + $0x10] sm:$0xc0]
    %v1460 = vld [vmem:[#allocation2 + $0x18] sm:$0xc0]
    %v1461 = vld [vmem:[#allocation2] sm:$0x3]
    %v1462 = vld [vmem:[#allocation2 + $0x8] sm:$0x3]
    %v1465 = vrot.slane %v1461, 2
    %v1466 = vrot.slane %v1462, 2
    %v1469 = vsel %vm101, %v1459, %v1465
    %v1470 = vsel %vm102, %v1460, %v1466
    %1471 = vst [vmem:[#allocation3 + $0x10] sm:$0xc0] %v1469
    %1472 = vst [vmem:[#allocation3 + $0x18] sm:$0xc0] %v1470
    %v1473 = vld [vmem:[#allocation10] sm:$0xff]
    %v1474 = vld [vmem:[#allocation10 + $0x8] sm:$0xff]
    %v1475 = vld [vmem:[#allocation10 + $0x10] sm:$0xff]
    %v1476 = vld [vmem:[#allocation10 + $0x18] sm:$0xff]
    %v1477 = vld [vmem:[#allocation10 + $0x20] sm:$0xff]
    %v1478 = vld [vmem:[#allocation10 + $0x28] sm:$0xff]
    %v1479 = vld [vmem:[#allocation10 + $0x30] sm:$0xff]
    %v1480 = vld [vmem:[#allocation10 + $0x38] sm:$0xff]
    %v1481 = vld [vmem:[#allocation10 + $0x40] sm:$0xff]
    %v1482 = vld [vmem:[#allocation10 + $0x48] sm:$0xff]
    %v1483 = vld [vmem:[#allocation10 + $0x50] sm:$0xff]
    %v1484 = vld [vmem:[#allocation10 + $0x58] sm:$0xff]
    %v1485 = vld [vmem:[#allocation10 + $0x60] sm:$0xff]
    %v1486 = vld [vmem:[#allocation10 + $0x68] sm:$0xff]
    %v1487 = vld [vmem:[#allocation10 + $0x70] sm:$0xff]
    %v1488 = vld [vmem:[#allocation10 + $0x78] sm:$0xff]
    %v1489 = vld [vmem:[#allocation3] sm:$0x3]
    %v1490 = vld [vmem:[#allocation3 + $0x8] sm:$0x3]
    %1491 = vmatprep.subr.mxu0 0.0
    %1492 = vmatpush1.msra.mxu0 0.0
    %1493 = vmatprep.subr.mxu0 0.0
    %1494 = vmatpush1.msra.mxu0 0.0
    %1495 = vmatprep.subr.mxu0 0.0
    %1496 = vmatpush1.msra.mxu0 0.0
    %1497 = vmatprep.subr.mxu0 0.0
    %1498 = vmatpush1.msra.mxu0 0.0
    %1499 = vmatprep.subr.mxu0 0.0
    %1500 = vmatpush1.msra.mxu0 0.0
    %1501 = vmatprep.subr.mxu0 0.0
    %1502 = vmatpush1.msra.mxu0 0.0
    %1503 = vmatprep.subr.mxu0 0.0
    %1504 = vmatpush1.msra.mxu0 0.0
    %1505 = vmatprep.subr.mxu0 0.0
    %1506 = vmatpush1.msra.mxu0 0.0
    %1507 = vmatprep.subr.mxu0 %v1488
    %1508 = vmatpush1.msra.mxu0 %v1487
    %1509 = vmatprep.subr.mxu0 %v1486
    %1510 = vmatpush1.msra.mxu0 %v1485
    %1511 = vmatprep.subr.mxu0 %v1484
    %1512 = vmatpush1.msra.mxu0 %v1483
    %1513 = vmatprep.subr.mxu0 %v1482
    %1514 = vmatpush1.msra.mxu0 %v1481
    %1515 = vmatprep.subr.mxu0 %v1480
    %1516 = vmatpush1.msra.mxu0 %v1479
    %1517 = vmatprep.subr.mxu0 %v1478
    %1518 = vmatpush1.msra.mxu0 %v1477
    %1519 = vmatprep.subr.mxu0 %v1476
    %1520 = vmatpush1.msra.mxu0 %v1475
    %1521 = vmatprep.subr.mxu0 %v1474
    %1522 = vmatpush1.msra.mxu0 %v1473
    %1523 = vmatprep.subr.mxu0 0.0
    %1524 = vmatpush2.msra.mxu0 0.0
    %1525 = vmatprep.subr.mxu0 0.0
    %1526 = vmatpush2.msra.mxu0 0.0
    %1527 = vmatprep.subr.mxu0 0.0
    %1528 = vmatpush2.msra.mxu0 0.0
    %1529 = vmatprep.subr.mxu0 0.0
    %1530 = vmatpush2.msra.mxu0 0.0
    %1531 = vmatprep.subr.mxu0 0.0
    %1532 = vmatpush2.msra.mxu0 0.0
    %1533 = vmatprep.subr.mxu0 0.0
    %1534 = vmatpush2.msra.mxu0 0.0
    %1535 = vmatprep.subr.mxu0 0.0
    %1536 = vmatpush2.msra.mxu0 0.0
    %1537 = vmatprep.subr.mxu0 0.0
    %1538 = vmatpush2.msra.mxu0 0.0
    %1539 = vmatprep.subr.mxu0 0.0
    %1540 = vmatpush2.msra.mxu0 0.0
    %1541 = vmatprep.subr.mxu0 0.0
    %1542 = vmatpush2.msra.mxu0 0.0
    %1543 = vmatprep.subr.mxu0 0.0
    %1544 = vmatpush2.msra.mxu0 0.0
    %1545 = vmatprep.subr.mxu0 0.0
    %1546 = vmatpush2.msra.mxu0 0.0
    %1547 = vmatprep.subr.mxu0 0.0
    %1548 = vmatpush2.msra.mxu0 0.0
    %1549 = vmatprep.subr.mxu0 0.0
    %1550 = vmatpush2.msra.mxu0 0.0
    %1551 = vmatprep.subr.mxu0 0.0
    %1552 = vmatpush2.msra.mxu0 0.0
    %1553 = vmatprep.subr.mxu0 0.0
    %1554 = vmatpush2.msra.mxu0 0.0
    %1555 = vmatprep.mubr.f32.mxu0 0.0
    %1556 = vmatmul.mubr.f32.gmra.mxu0 %v345
    %v1557 = vpop.f32.mrf.mxu0
    %v1558 = vadd.f32 %v1489, %v1557
    %v1559 = vpop.f32.mrf.mxu0
    %v1560 = vadd.f32 %v1490, %v1559
    %1561 = vdwg.mxu0
    %v1562 = vxor.u32 %v1558, 2147483648
    %v1563 = vxor.u32 %v1560, 2147483648
    %v1564 = vmul.f32 %v1562, 1.442695
    %v1565 = vpow.pop %v1564
    %v1566 = vmul.f32 %v1563, 1.442695
    %v1567 = vpow.pop %v1566
    %v1568 = vadd.f32 %v1565, 1.0
    %v1569 = vadd.f32 %v1567, 1.0
    %v1570 = vrcp.pop %v1568
    %v1571 = vmul.f32 1.0, %v1570
    %v1572 = vrcp.pop %v1569
    %v1573 = vmul.f32 1.0, %v1572
    %v1574 = vtanh.pop %v1560
    %v1575 = vmul.f32 %v1571, 0.0
    %1577 = vrot.lane.b32.xlu0 %v1574, 64
    %v1578 = vpop.permute.xlu0 %1577
    %v1580 = vmul.f32 %v1571, %v1578
    %1582 = vrot.lane.b32.xlu0 %v1580, 64
    %v1583 = vpop.permute.xlu0 %1582
    %v1585 = vadd.f32 %v1575, %v1583
    %v1586 = vtanh.pop %v1585
    %1588 = vrot.lane.b32.xlu0 %v1586, 64
    %v1589 = vpop.permute.xlu0 %1588
    %v1591 = vmul.f32 %v1573, %v1589
    %v1592 = vld [vmem:[#allocation3] sm:$0xc]
    %v1593 = vld [vmem:[#allocation3 + $0x8] sm:$0xc]
    %v1596 = vrot.slane %v1592, 2
    %v1597 = vrot.slane %v1593, 2
    %v1601 = vsel %vm343, %v1591, 0
    %1603 = vmatprep.subr.mxu0 0.0
    %1604 = vmatpush1.msra.mxu0 0.0
    %1605 = vmatprep.subr.mxu0 0.0
    %1606 = vmatpush1.msra.mxu0 0.0
    %1607 = vmatprep.subr.mxu0 0.0
    %1608 = vmatpush1.msra.mxu0 0.0
    %1609 = vmatprep.subr.mxu0 0.0
    %1610 = vmatpush1.msra.mxu0 0.0
    %1611 = vmatprep.subr.mxu0 0.0
    %1612 = vmatpush1.msra.mxu0 0.0
    %1613 = vmatprep.subr.mxu0 0.0
    %1614 = vmatpush1.msra.mxu0 0.0
    %1615 = vmatprep.subr.mxu0 0.0
    %1616 = vmatpush1.msra.mxu0 0.0
    %1617 = vmatprep.subr.mxu0 0.0
    %1618 = vmatpush1.msra.mxu0 0.0
    %1619 = vmatprep.subr.mxu0 %v1488
    %1620 = vmatpush1.msra.mxu0 %v1487
    %1621 = vmatprep.subr.mxu0 %v1486
    %1622 = vmatpush1.msra.mxu0 %v1485
    %1623 = vmatprep.subr.mxu0 %v1484
    %1624 = vmatpush1.msra.mxu0 %v1483
    %1625 = vmatprep.subr.mxu0 %v1482
    %1626 = vmatpush1.msra.mxu0 %v1481
    %1627 = vmatprep.subr.mxu0 %v1480
    %1628 = vmatpush1.msra.mxu0 %v1479
    %1629 = vmatprep.subr.mxu0 %v1478
    %1630 = vmatpush1.msra.mxu0 %v1477
    %1631 = vmatprep.subr.mxu0 %v1476
    %1632 = vmatpush1.msra.mxu0 %v1475
    %1633 = vmatprep.subr.mxu0 %v1474
    %1634 = vmatpush1.msra.mxu0 %v1473
    %1635 = vmatprep.subr.mxu0 0.0
    %1636 = vmatpush2.msra.mxu0 0.0
    %1637 = vmatprep.subr.mxu0 0.0
    %1638 = vmatpush2.msra.mxu0 0.0
    %1639 = vmatprep.subr.mxu0 0.0
    %1640 = vmatpush2.msra.mxu0 0.0
    %1641 = vmatprep.subr.mxu0 0.0
    %1642 = vmatpush2.msra.mxu0 0.0
    %1643 = vmatprep.subr.mxu0 0.0
    %1644 = vmatpush2.msra.mxu0 0.0
    %1645 = vmatprep.subr.mxu0 0.0
    %1646 = vmatpush2.msra.mxu0 0.0
    %1647 = vmatprep.subr.mxu0 0.0
    %1648 = vmatpush2.msra.mxu0 0.0
    %1649 = vmatprep.subr.mxu0 0.0
    %1650 = vmatpush2.msra.mxu0 0.0
    %1651 = vmatprep.subr.mxu0 0.0
    %1652 = vmatpush2.msra.mxu0 0.0
    %1653 = vmatprep.subr.mxu0 0.0
    %1654 = vmatpush2.msra.mxu0 0.0
    %1655 = vmatprep.subr.mxu0 0.0
    %1656 = vmatpush2.msra.mxu0 0.0
    %1657 = vmatprep.subr.mxu0 0.0
    %1658 = vmatpush2.msra.mxu0 0.0
    %1659 = vmatprep.subr.mxu0 0.0
    %1660 = vmatpush2.msra.mxu0 0.0
    %1661 = vmatprep.subr.mxu0 0.0
    %1662 = vmatpush2.msra.mxu0 0.0
    %1663 = vmatprep.subr.mxu0 0.0
    %1664 = vmatpush2.msra.mxu0 0.0
    %1665 = vmatprep.subr.mxu0 0.0
    %1666 = vmatpush2.msra.mxu0 0.0
    %1667 = vmatprep.mubr.f32.mxu0 0.0
    %1668 = vmatmul.mubr.f32.gmra.mxu0 %v1601
    %v1669 = vpop.f32.mrf.mxu0
    %v1670 = vadd.f32 %v1596, %v1669
    %v1671 = vpop.f32.mrf.mxu0
    %v1672 = vadd.f32 %v1597, %v1671
    %1673 = vdwg.mxu0
    %v1674 = vxor.u32 %v1670, 2147483648
    %v1675 = vxor.u32 %v1672, 2147483648
    %v1676 = vmul.f32 %v1674, 1.442695
    %v1677 = vpow.pop %v1676
    %v1678 = vmul.f32 %v1675, 1.442695
    %v1679 = vpow.pop %v1678
    %v1680 = vadd.f32 %v1677, 1.0
    %v1681 = vadd.f32 %v1679, 1.0
    %v1682 = vrcp.pop %v1680
    %v1683 = vmul.f32 1.0, %v1682
    %v1684 = vrcp.pop %v1681
    %v1685 = vmul.f32 1.0, %v1684
    %v1686 = vtanh.pop %v1672
    %v1687 = vmul.f32 %v1683, %v1585
    %1689 = vrot.lane.b32.xlu0 %v1686, 64
    %v1690 = vpop.permute.xlu0 %1689
    %v1692 = vmul.f32 %v1683, %v1690
    %1694 = vrot.lane.b32.xlu0 %v1692, 64
    %v1695 = vpop.permute.xlu0 %1694
    %v1697 = vadd.f32 %v1687, %v1695
    %v1698 = vtanh.pop %v1697
    %1700 = vrot.lane.b32.xlu0 %v1698, 64
    %v1701 = vpop.permute.xlu0 %1700
    %v1703 = vmul.f32 %v1685, %v1701
    %v1704 = vld [vmem:[#allocation3] sm:$0x30]
    %v1705 = vld [vmem:[#allocation3 + $0x8] sm:$0x30]
    %v1708 = vrot.slane %v1704, 4
    %v1709 = vrot.slane %v1705, 4
    %v1713 = vsel %vm343, %v1703, 0
    %1715 = vmatprep.subr.mxu0 0.0
    %1716 = vmatpush1.msra.mxu0 0.0
    %1717 = vmatprep.subr.mxu0 0.0
    %1718 = vmatpush1.msra.mxu0 0.0
    %1719 = vmatprep.subr.mxu0 0.0
    %1720 = vmatpush1.msra.mxu0 0.0
    %1721 = vmatprep.subr.mxu0 0.0
    %1722 = vmatpush1.msra.mxu0 0.0
    %1723 = vmatprep.subr.mxu0 0.0
    %1724 = vmatpush1.msra.mxu0 0.0
    %1725 = vmatprep.subr.mxu0 0.0
    %1726 = vmatpush1.msra.mxu0 0.0
    %1727 = vmatprep.subr.mxu0 0.0
    %1728 = vmatpush1.msra.mxu0 0.0
    %1729 = vmatprep.subr.mxu0 0.0
    %1730 = vmatpush1.msra.mxu0 0.0
    %1731 = vmatprep.subr.mxu0 %v1488
    %1732 = vmatpush1.msra.mxu0 %v1487
    %1733 = vmatprep.subr.mxu0 %v1486
    %1734 = vmatpush1.msra.mxu0 %v1485
    %1735 = vmatprep.subr.mxu0 %v1484
    %1736 = vmatpush1.msra.mxu0 %v1483
    %1737 = vmatprep.subr.mxu0 %v1482
    %1738 = vmatpush1.msra.mxu0 %v1481
    %1739 = vmatprep.subr.mxu0 %v1480
    %1740 = vmatpush1.msra.mxu0 %v1479
    %1741 = vmatprep.subr.mxu0 %v1478
    %1742 = vmatpush1.msra.mxu0 %v1477
    %1743 = vmatprep.subr.mxu0 %v1476
    %1744 = vmatpush1.msra.mxu0 %v1475
    %1745 = vmatprep.subr.mxu0 %v1474
    %1746 = vmatpush1.msra.mxu0 %v1473
    %1747 = vmatprep.subr.mxu0 0.0
    %1748 = vmatpush2.msra.mxu0 0.0
    %1749 = vmatprep.subr.mxu0 0.0
    %1750 = vmatpush2.msra.mxu0 0.0
    %1751 = vmatprep.subr.mxu0 0.0
    %1752 = vmatpush2.msra.mxu0 0.0
    %1753 = vmatprep.subr.mxu0 0.0
    %1754 = vmatpush2.msra.mxu0 0.0
    %1755 = vmatprep.subr.mxu0 0.0
    %1756 = vmatpush2.msra.mxu0 0.0
    %1757 = vmatprep.subr.mxu0 0.0
    %1758 = vmatpush2.msra.mxu0 0.0
    %1759 = vmatprep.subr.mxu0 0.0
    %1760 = vmatpush2.msra.mxu0 0.0
    %1761 = vmatprep.subr.mxu0 0.0
    %1762 = vmatpush2.msra.mxu0 0.0
    %1763 = vmatprep.subr.mxu0 0.0
    %1764 = vmatpush2.msra.mxu0 0.0
    %1765 = vmatprep.subr.mxu0 0.0
    %1766 = vmatpush2.msra.mxu0 0.0
    %1767 = vmatprep.subr.mxu0 0.0
    %1768 = vmatpush2.msra.mxu0 0.0
    %1769 = vmatprep.subr.mxu0 0.0
    %1770 = vmatpush2.msra.mxu0 0.0
    %1771 = vmatprep.subr.mxu0 0.0
    %1772 = vmatpush2.msra.mxu0 0.0
    %1773 = vmatprep.subr.mxu0 0.0
    %1774 = vmatpush2.msra.mxu0 0.0
    %1775 = vmatprep.subr.mxu0 0.0
    %1776 = vmatpush2.msra.mxu0 0.0
    %1777 = vmatprep.subr.mxu0 0.0
    %1778 = vmatpush2.msra.mxu0 0.0
    %1779 = vmatprep.mubr.f32.mxu0 0.0
    %1780 = vmatmul.mubr.f32.gmra.mxu0 %v1713
    %v1781 = vpop.f32.mrf.mxu0
    %v1782 = vadd.f32 %v1708, %v1781
    %v1783 = vpop.f32.mrf.mxu0
    %v1784 = vadd.f32 %v1709, %v1783
    %1785 = vdwg.mxu0
    %v1786 = vxor.u32 %v1782, 2147483648
    %v1787 = vxor.u32 %v1784, 2147483648
    %v1788 = vmul.f32 %v1786, 1.442695
    %v1789 = vpow.pop %v1788
    %v1790 = vmul.f32 %v1787, 1.442695
    %v1791 = vpow.pop %v1790
    %v1792 = vadd.f32 %v1789, 1.0
    %v1793 = vadd.f32 %v1791, 1.0
    %v1794 = vrcp.pop %v1792
    %v1795 = vmul.f32 1.0, %v1794
    %v1796 = vrcp.pop %v1793
    %v1797 = vmul.f32 1.0, %v1796
    %v1798 = vtanh.pop %v1784
    %v1799 = vmul.f32 %v1795, %v1697
    %1801 = vrot.lane.b32.xlu0 %v1798, 64
    %v1802 = vpop.permute.xlu0 %1801
    %v1804 = vmul.f32 %v1795, %v1802
    %1806 = vrot.lane.b32.xlu0 %v1804, 64
    %v1807 = vpop.permute.xlu0 %1806
    %v1809 = vadd.f32 %v1799, %v1807
    %v1810 = vtanh.pop %v1809
    %1812 = vrot.lane.b32.xlu0 %v1810, 64
    %v1813 = vpop.permute.xlu0 %1812
    %v1815 = vmul.f32 %v1797, %v1813
    %v1816 = vld [vmem:[#allocation3] sm:$0xc0]
    %v1817 = vld [vmem:[#allocation3 + $0x8] sm:$0xc0]
    %v1820 = vrot.slane %v1816, 6
    %v1821 = vrot.slane %v1817, 6
    %v1825 = vsel %vm343, %v1815, 0
    %1827 = vmatprep.subr.mxu0 0.0
    %1828 = vmatpush1.msra.mxu0 0.0
    %1829 = vmatprep.subr.mxu0 0.0
    %1830 = vmatpush1.msra.mxu0 0.0
    %1831 = vmatprep.subr.mxu0 0.0
    %1832 = vmatpush1.msra.mxu0 0.0
    %1833 = vmatprep.subr.mxu0 0.0
    %1834 = vmatpush1.msra.mxu0 0.0
    %1835 = vmatprep.subr.mxu0 0.0
    %1836 = vmatpush1.msra.mxu0 0.0
    %1837 = vmatprep.subr.mxu0 0.0
    %1838 = vmatpush1.msra.mxu0 0.0
    %1839 = vmatprep.subr.mxu0 0.0
    %1840 = vmatpush1.msra.mxu0 0.0
    %1841 = vmatprep.subr.mxu0 0.0
    %1842 = vmatpush1.msra.mxu0 0.0
    %1843 = vmatprep.subr.mxu0 %v1488
    %1844 = vmatpush1.msra.mxu0 %v1487
    %1845 = vmatprep.subr.mxu0 %v1486
    %1846 = vmatpush1.msra.mxu0 %v1485
    %1847 = vmatprep.subr.mxu0 %v1484
    %1848 = vmatpush1.msra.mxu0 %v1483
    %1849 = vmatprep.subr.mxu0 %v1482
    %1850 = vmatpush1.msra.mxu0 %v1481
    %1851 = vmatprep.subr.mxu0 %v1480
    %1852 = vmatpush1.msra.mxu0 %v1479
    %1853 = vmatprep.subr.mxu0 %v1478
    %1854 = vmatpush1.msra.mxu0 %v1477
    %1855 = vmatprep.subr.mxu0 %v1476
    %1856 = vmatpush1.msra.mxu0 %v1475
    %1857 = vmatprep.subr.mxu0 %v1474
    %1858 = vmatpush1.msra.mxu0 %v1473
    %1859 = vmatprep.subr.mxu0 0.0
    %1860 = vmatpush2.msra.mxu0 0.0
    %1861 = vmatprep.subr.mxu0 0.0
    %1862 = vmatpush2.msra.mxu0 0.0
    %1863 = vmatprep.subr.mxu0 0.0
    %1864 = vmatpush2.msra.mxu0 0.0
    %1865 = vmatprep.subr.mxu0 0.0
    %1866 = vmatpush2.msra.mxu0 0.0
    %1867 = vmatprep.subr.mxu0 0.0
    %1868 = vmatpush2.msra.mxu0 0.0
    %1869 = vmatprep.subr.mxu0 0.0
    %1870 = vmatpush2.msra.mxu0 0.0
    %1871 = vmatprep.subr.mxu0 0.0
    %1872 = vmatpush2.msra.mxu0 0.0
    %1873 = vmatprep.subr.mxu0 0.0
    %1874 = vmatpush2.msra.mxu0 0.0
    %1875 = vmatprep.subr.mxu0 0.0
    %1876 = vmatpush2.msra.mxu0 0.0
    %1877 = vmatprep.subr.mxu0 0.0
    %1878 = vmatpush2.msra.mxu0 0.0
    %1879 = vmatprep.subr.mxu0 0.0
    %1880 = vmatpush2.msra.mxu0 0.0
    %1881 = vmatprep.subr.mxu0 0.0
    %1882 = vmatpush2.msra.mxu0 0.0
    %1883 = vmatprep.subr.mxu0 0.0
    %1884 = vmatpush2.msra.mxu0 0.0
    %1885 = vmatprep.subr.mxu0 0.0
    %1886 = vmatpush2.msra.mxu0 0.0
    %1887 = vmatprep.subr.mxu0 0.0
    %1888 = vmatpush2.msra.mxu0 0.0
    %1889 = vmatprep.subr.mxu0 0.0
    %1890 = vmatpush2.msra.mxu0 0.0
    %1891 = vmatprep.mubr.f32.mxu0 0.0
    %1892 = vmatmul.mubr.f32.gmra.mxu0 %v1825
    %v1893 = vpop.f32.mrf.mxu0
    %v1894 = vadd.f32 %v1820, %v1893
    %v1895 = vpop.f32.mrf.mxu0
    %v1896 = vadd.f32 %v1821, %v1895
    %1897 = vdwg.mxu0
    %v1898 = vxor.u32 %v1894, 2147483648
    %v1899 = vxor.u32 %v1896, 2147483648
    %v1900 = vmul.f32 %v1898, 1.442695
    %v1901 = vpow.pop %v1900
    %v1902 = vmul.f32 %v1899, 1.442695
    %v1903 = vpow.pop %v1902
    %v1904 = vadd.f32 %v1901, 1.0
    %v1905 = vadd.f32 %v1903, 1.0
    %v1906 = vrcp.pop %v1904
    %v1907 = vmul.f32 1.0, %v1906
    %v1908 = vrcp.pop %v1905
    %v1909 = vmul.f32 1.0, %v1908
    %v1910 = vtanh.pop %v1896
    %v1911 = vmul.f32 %v1907, %v1809
    %1913 = vrot.lane.b32.xlu0 %v1910, 64
    %v1914 = vpop.permute.xlu0 %1913
    %v1916 = vmul.f32 %v1907, %v1914
    %1918 = vrot.lane.b32.xlu0 %v1916, 64
    %v1919 = vpop.permute.xlu0 %1918
    %v1921 = vadd.f32 %v1911, %v1919
    %v1922 = vtanh.pop %v1921
    %1924 = vrot.lane.b32.xlu0 %v1922, 64
    %v1925 = vpop.permute.xlu0 %1924
    %v1927 = vmul.f32 %v1909, %v1925
    %v1928 = vld [vmem:[#allocation3 + $0x10] sm:$0x3]
    %v1929 = vld [vmem:[#allocation3 + $0x18] sm:$0x3]
    %v1931 = vsel %vm343, %v1927, 0
    %1933 = vmatprep.subr.mxu0 0.0
    %1934 = vmatpush1.msra.mxu0 0.0
    %1935 = vmatprep.subr.mxu0 0.0
    %1936 = vmatpush1.msra.mxu0 0.0
    %1937 = vmatprep.subr.mxu0 0.0
    %1938 = vmatpush1.msra.mxu0 0.0
    %1939 = vmatprep.subr.mxu0 0.0
    %1940 = vmatpush1.msra.mxu0 0.0
    %1941 = vmatprep.subr.mxu0 0.0
    %1942 = vmatpush1.msra.mxu0 0.0
    %1943 = vmatprep.subr.mxu0 0.0
    %1944 = vmatpush1.msra.mxu0 0.0
    %1945 = vmatprep.subr.mxu0 0.0
    %1946 = vmatpush1.msra.mxu0 0.0
    %1947 = vmatprep.subr.mxu0 0.0
    %1948 = vmatpush1.msra.mxu0 0.0
    %1949 = vmatprep.subr.mxu0 %v1488
    %1950 = vmatpush1.msra.mxu0 %v1487
    %1951 = vmatprep.subr.mxu0 %v1486
    %1952 = vmatpush1.msra.mxu0 %v1485
    %1953 = vmatprep.subr.mxu0 %v1484
    %1954 = vmatpush1.msra.mxu0 %v1483
    %1955 = vmatprep.subr.mxu0 %v1482
    %1956 = vmatpush1.msra.mxu0 %v1481
    %1957 = vmatprep.subr.mxu0 %v1480
    %1958 = vmatpush1.msra.mxu0 %v1479
    %1959 = vmatprep.subr.mxu0 %v1478
    %1960 = vmatpush1.msra.mxu0 %v1477
    %1961 = vmatprep.subr.mxu0 %v1476
    %1962 = vmatpush1.msra.mxu0 %v1475
    %1963 = vmatprep.subr.mxu0 %v1474
    %1964 = vmatpush1.msra.mxu0 %v1473
    %1965 = vmatprep.subr.mxu0 0.0
    %1966 = vmatpush2.msra.mxu0 0.0
    %1967 = vmatprep.subr.mxu0 0.0
    %1968 = vmatpush2.msra.mxu0 0.0
    %1969 = vmatprep.subr.mxu0 0.0
    %1970 = vmatpush2.msra.mxu0 0.0
    %1971 = vmatprep.subr.mxu0 0.0
    %1972 = vmatpush2.msra.mxu0 0.0
    %1973 = vmatprep.subr.mxu0 0.0
    %1974 = vmatpush2.msra.mxu0 0.0
    %1975 = vmatprep.subr.mxu0 0.0
    %1976 = vmatpush2.msra.mxu0 0.0
    %1977 = vmatprep.subr.mxu0 0.0
    %1978 = vmatpush2.msra.mxu0 0.0
    %1979 = vmatprep.subr.mxu0 0.0
    %1980 = vmatpush2.msra.mxu0 0.0
    %1981 = vmatprep.subr.mxu0 0.0
    %1982 = vmatpush2.msra.mxu0 0.0
    %1983 = vmatprep.subr.mxu0 0.0
    %1984 = vmatpush2.msra.mxu0 0.0
    %1985 = vmatprep.subr.mxu0 0.0
    %1986 = vmatpush2.msra.mxu0 0.0
    %1987 = vmatprep.subr.mxu0 0.0
    %1988 = vmatpush2.msra.mxu0 0.0
    %1989 = vmatprep.subr.mxu0 0.0
    %1990 = vmatpush2.msra.mxu0 0.0
    %1991 = vmatprep.subr.mxu0 0.0
    %1992 = vmatpush2.msra.mxu0 0.0
    %1993 = vmatprep.subr.mxu0 0.0
    %1994 = vmatpush2.msra.mxu0 0.0
    %1995 = vmatprep.subr.mxu0 0.0
    %1996 = vmatpush2.msra.mxu0 0.0
    %1997 = vmatprep.mubr.f32.mxu0 0.0
    %1998 = vmatmul.mubr.f32.gmra.mxu0 %v1931
    %v1999 = vpop.f32.mrf.mxu0
    %v2000 = vadd.f32 %v1928, %v1999
    %v2001 = vpop.f32.mrf.mxu0
    %v2002 = vadd.f32 %v1929, %v2001
    %2003 = vdwg.mxu0
    %v2004 = vxor.u32 %v2000, 2147483648
    %v2005 = vxor.u32 %v2002, 2147483648
    %v2006 = vmul.f32 %v2004, 1.442695
    %v2007 = vpow.pop %v2006
    %v2008 = vmul.f32 %v2005, 1.442695
    %v2009 = vpow.pop %v2008
    %v2010 = vadd.f32 %v2007, 1.0
    %v2011 = vadd.f32 %v2009, 1.0
    %v2012 = vrcp.pop %v2010
    %v2013 = vmul.f32 1.0, %v2012
    %v2014 = vrcp.pop %v2011
    %v2015 = vmul.f32 1.0, %v2014
    %v2016 = vtanh.pop %v2002
    %v2017 = vmul.f32 %v2013, %v1921
    %2019 = vrot.lane.b32.xlu0 %v2016, 64
    %v2020 = vpop.permute.xlu0 %2019
    %v2022 = vmul.f32 %v2013, %v2020
    %2024 = vrot.lane.b32.xlu0 %v2022, 64
    %v2025 = vpop.permute.xlu0 %2024
    %v2027 = vadd.f32 %v2017, %v2025
    %v2028 = vtanh.pop %v2027
    %2030 = vrot.lane.b32.xlu0 %v2028, 64
    %v2031 = vpop.permute.xlu0 %2030
    %v2033 = vmul.f32 %v2015, %v2031
    %v2034 = vld [vmem:[#allocation3 + $0x10] sm:$0xc]
    %v2035 = vld [vmem:[#allocation3 + $0x18] sm:$0xc]
    %v2038 = vrot.slane %v2034, 2
    %v2039 = vrot.slane %v2035, 2
    %v2043 = vsel %vm343, %v2033, 0
    %2045 = vmatprep.subr.mxu0 0.0
    %2046 = vmatpush1.msra.mxu0 0.0
    %2047 = vmatprep.subr.mxu0 0.0
    %2048 = vmatpush1.msra.mxu0 0.0
    %2049 = vmatprep.subr.mxu0 0.0
    %2050 = vmatpush1.msra.mxu0 0.0
    %2051 = vmatprep.subr.mxu0 0.0
    %2052 = vmatpush1.msra.mxu0 0.0
    %2053 = vmatprep.subr.mxu0 0.0
    %2054 = vmatpush1.msra.mxu0 0.0
    %2055 = vmatprep.subr.mxu0 0.0
    %2056 = vmatpush1.msra.mxu0 0.0
    %2057 = vmatprep.subr.mxu0 0.0
    %2058 = vmatpush1.msra.mxu0 0.0
    %2059 = vmatprep.subr.mxu0 0.0
    %2060 = vmatpush1.msra.mxu0 0.0
    %2061 = vmatprep.subr.mxu0 %v1488
    %2062 = vmatpush1.msra.mxu0 %v1487
    %2063 = vmatprep.subr.mxu0 %v1486
    %2064 = vmatpush1.msra.mxu0 %v1485
    %2065 = vmatprep.subr.mxu0 %v1484
    %2066 = vmatpush1.msra.mxu0 %v1483
    %2067 = vmatprep.subr.mxu0 %v1482
    %2068 = vmatpush1.msra.mxu0 %v1481
    %2069 = vmatprep.subr.mxu0 %v1480
    %2070 = vmatpush1.msra.mxu0 %v1479
    %2071 = vmatprep.subr.mxu0 %v1478
    %2072 = vmatpush1.msra.mxu0 %v1477
    %2073 = vmatprep.subr.mxu0 %v1476
    %2074 = vmatpush1.msra.mxu0 %v1475
    %2075 = vmatprep.subr.mxu0 %v1474
    %2076 = vmatpush1.msra.mxu0 %v1473
    %2077 = vmatprep.subr.mxu0 0.0
    %2078 = vmatpush2.msra.mxu0 0.0
    %2079 = vmatprep.subr.mxu0 0.0
    %2080 = vmatpush2.msra.mxu0 0.0
    %2081 = vmatprep.subr.mxu0 0.0
    %2082 = vmatpush2.msra.mxu0 0.0
    %2083 = vmatprep.subr.mxu0 0.0
    %2084 = vmatpush2.msra.mxu0 0.0
    %2085 = vmatprep.subr.mxu0 0.0
    %2086 = vmatpush2.msra.mxu0 0.0
    %2087 = vmatprep.subr.mxu0 0.0
    %2088 = vmatpush2.msra.mxu0 0.0
    %2089 = vmatprep.subr.mxu0 0.0
    %2090 = vmatpush2.msra.mxu0 0.0
    %2091 = vmatprep.subr.mxu0 0.0
    %2092 = vmatpush2.msra.mxu0 0.0
    %2093 = vmatprep.subr.mxu0 0.0
    %2094 = vmatpush2.msra.mxu0 0.0
    %2095 = vmatprep.subr.mxu0 0.0
    %2096 = vmatpush2.msra.mxu0 0.0
    %2097 = vmatprep.subr.mxu0 0.0
    %2098 = vmatpush2.msra.mxu0 0.0
    %2099 = vmatprep.subr.mxu0 0.0
    %2100 = vmatpush2.msra.mxu0 0.0
    %2101 = vmatprep.subr.mxu0 0.0
    %2102 = vmatpush2.msra.mxu0 0.0
    %2103 = vmatprep.subr.mxu0 0.0
    %2104 = vmatpush2.msra.mxu0 0.0
    %2105 = vmatprep.subr.mxu0 0.0
    %2106 = vmatpush2.msra.mxu0 0.0
    %2107 = vmatprep.subr.mxu0 0.0
    %2108 = vmatpush2.msra.mxu0 0.0
    %2109 = vmatprep.mubr.f32.mxu0 0.0
    %2110 = vmatmul.mubr.f32.gmra.mxu0 %v2043
    %v2111 = vpop.f32.mrf.mxu0
    %v2112 = vadd.f32 %v2038, %v2111
    %v2113 = vpop.f32.mrf.mxu0
    %v2114 = vadd.f32 %v2039, %v2113
    %2115 = vdwg.mxu0
    %v2116 = vxor.u32 %v2112, 2147483648
    %v2117 = vxor.u32 %v2114, 2147483648
    %v2118 = vmul.f32 %v2116, 1.442695
    %v2119 = vpow.pop %v2118
    %v2120 = vmul.f32 %v2117, 1.442695
    %v2121 = vpow.pop %v2120
    %v2122 = vadd.f32 %v2119, 1.0
    %v2123 = vadd.f32 %v2121, 1.0
    %v2124 = vrcp.pop %v2122
    %v2125 = vmul.f32 1.0, %v2124
    %v2126 = vrcp.pop %v2123
    %v2127 = vmul.f32 1.0, %v2126
    %v2128 = vtanh.pop %v2114
    %v2129 = vmul.f32 %v2125, %v2027
    %2131 = vrot.lane.b32.xlu0 %v2128, 64
    %v2132 = vpop.permute.xlu0 %2131
    %v2134 = vmul.f32 %v2125, %v2132
    %2136 = vrot.lane.b32.xlu0 %v2134, 64
    %v2137 = vpop.permute.xlu0 %2136
    %v2139 = vadd.f32 %v2129, %v2137
    %v2140 = vtanh.pop %v2139
    %2142 = vrot.lane.b32.xlu0 %v2140, 64
    %v2143 = vpop.permute.xlu0 %2142
    %v2145 = vmul.f32 %v2127, %v2143
    %v2146 = vld [vmem:[#allocation3 + $0x10] sm:$0x30]
    %v2147 = vld [vmem:[#allocation3 + $0x18] sm:$0x30]
    %v2150 = vrot.slane %v2146, 4
    %v2151 = vrot.slane %v2147, 4
    %v2155 = vsel %vm343, %v2145, 0
    %2157 = vmatprep.subr.mxu0 0.0
    %2158 = vmatpush1.msra.mxu0 0.0
    %2159 = vmatprep.subr.mxu0 0.0
    %2160 = vmatpush1.msra.mxu0 0.0
    %2161 = vmatprep.subr.mxu0 0.0
    %2162 = vmatpush1.msra.mxu0 0.0
    %2163 = vmatprep.subr.mxu0 0.0
    %2164 = vmatpush1.msra.mxu0 0.0
    %2165 = vmatprep.subr.mxu0 0.0
    %2166 = vmatpush1.msra.mxu0 0.0
    %2167 = vmatprep.subr.mxu0 0.0
    %2168 = vmatpush1.msra.mxu0 0.0
    %2169 = vmatprep.subr.mxu0 0.0
    %2170 = vmatpush1.msra.mxu0 0.0
    %2171 = vmatprep.subr.mxu0 0.0
    %2172 = vmatpush1.msra.mxu0 0.0
    %2173 = vmatprep.subr.mxu0 %v1488
    %2174 = vmatpush1.msra.mxu0 %v1487
    %2175 = vmatprep.subr.mxu0 %v1486
    %2176 = vmatpush1.msra.mxu0 %v1485
    %2177 = vmatprep.subr.mxu0 %v1484
    %2178 = vmatpush1.msra.mxu0 %v1483
    %2179 = vmatprep.subr.mxu0 %v1482
    %2180 = vmatpush1.msra.mxu0 %v1481
    %2181 = vmatprep.subr.mxu0 %v1480
    %2182 = vmatpush1.msra.mxu0 %v1479
    %2183 = vmatprep.subr.mxu0 %v1478
    %2184 = vmatpush1.msra.mxu0 %v1477
    %2185 = vmatprep.subr.mxu0 %v1476
    %2186 = vmatpush1.msra.mxu0 %v1475
    %2187 = vmatprep.subr.mxu0 %v1474
    %2188 = vmatpush1.msra.mxu0 %v1473
    %2189 = vmatprep.subr.mxu0 0.0
    %2190 = vmatpush2.msra.mxu0 0.0
    %2191 = vmatprep.subr.mxu0 0.0
    %2192 = vmatpush2.msra.mxu0 0.0
    %2193 = vmatprep.subr.mxu0 0.0
    %2194 = vmatpush2.msra.mxu0 0.0
    %2195 = vmatprep.subr.mxu0 0.0
    %2196 = vmatpush2.msra.mxu0 0.0
    %2197 = vmatprep.subr.mxu0 0.0
    %2198 = vmatpush2.msra.mxu0 0.0
    %2199 = vmatprep.subr.mxu0 0.0
    %2200 = vmatpush2.msra.mxu0 0.0
    %2201 = vmatprep.subr.mxu0 0.0
    %2202 = vmatpush2.msra.mxu0 0.0
    %2203 = vmatprep.subr.mxu0 0.0
    %2204 = vmatpush2.msra.mxu0 0.0
    %2205 = vmatprep.subr.mxu0 0.0
    %2206 = vmatpush2.msra.mxu0 0.0
    %2207 = vmatprep.subr.mxu0 0.0
    %2208 = vmatpush2.msra.mxu0 0.0
    %2209 = vmatprep.subr.mxu0 0.0
    %2210 = vmatpush2.msra.mxu0 0.0
    %2211 = vmatprep.subr.mxu0 0.0
    %2212 = vmatpush2.msra.mxu0 0.0
    %2213 = vmatprep.subr.mxu0 0.0
    %2214 = vmatpush2.msra.mxu0 0.0
    %2215 = vmatprep.subr.mxu0 0.0
    %2216 = vmatpush2.msra.mxu0 0.0
    %2217 = vmatprep.subr.mxu0 0.0
    %2218 = vmatpush2.msra.mxu0 0.0
    %2219 = vmatprep.subr.mxu0 0.0
    %2220 = vmatpush2.msra.mxu0 0.0
    %2221 = vmatprep.mubr.f32.mxu0 0.0
    %2222 = vmatmul.mubr.f32.gmra.mxu0 %v2155
    %v2223 = vpop.f32.mrf.mxu0
    %v2224 = vadd.f32 %v2150, %v2223
    %v2225 = vpop.f32.mrf.mxu0
    %v2226 = vadd.f32 %v2151, %v2225
    %2227 = vdwg.mxu0
    %v2228 = vxor.u32 %v2224, 2147483648
    %v2229 = vxor.u32 %v2226, 2147483648
    %v2230 = vmul.f32 %v2228, 1.442695
    %v2231 = vpow.pop %v2230
    %v2232 = vmul.f32 %v2229, 1.442695
    %v2233 = vpow.pop %v2232
    %v2234 = vadd.f32 %v2231, 1.0
    %v2235 = vadd.f32 %v2233, 1.0
    %v2236 = vrcp.pop %v2234
    %v2237 = vmul.f32 1.0, %v2236
    %v2238 = vrcp.pop %v2235
    %v2239 = vmul.f32 1.0, %v2238
    %v2240 = vtanh.pop %v2226
    %v2241 = vmul.f32 %v2237, %v2139
    %2243 = vrot.lane.b32.xlu0 %v2240, 64
    %v2244 = vpop.permute.xlu0 %2243
    %v2246 = vmul.f32 %v2237, %v2244
    %2248 = vrot.lane.b32.xlu0 %v2246, 64
    %v2249 = vpop.permute.xlu0 %2248
    %v2251 = vadd.f32 %v2241, %v2249
    %v2252 = vtanh.pop %v2251
    %2254 = vrot.lane.b32.xlu0 %v2252, 64
    %v2255 = vpop.permute.xlu0 %2254
    %v2257 = vmul.f32 %v2239, %v2255
    %v2258 = vld [vmem:[#allocation3 + $0x10] sm:$0xc0]
    %v2259 = vld [vmem:[#allocation3 + $0x18] sm:$0xc0]
    %v2262 = vrot.slane %v2258, 6
    %v2263 = vrot.slane %v2259, 6
    %v2267 = vsel %vm343, %v2257, 0
    %2269 = vmatprep.subr.mxu0 0.0
    %2270 = vmatpush1.msra.mxu0 0.0
    %2271 = vmatprep.subr.mxu0 0.0
    %2272 = vmatpush1.msra.mxu0 0.0
    %2273 = vmatprep.subr.mxu0 0.0
    %2274 = vmatpush1.msra.mxu0 0.0
    %2275 = vmatprep.subr.mxu0 0.0
    %2276 = vmatpush1.msra.mxu0 0.0
    %2277 = vmatprep.subr.mxu0 0.0
    %2278 = vmatpush1.msra.mxu0 0.0
    %2279 = vmatprep.subr.mxu0 0.0
    %2280 = vmatpush1.msra.mxu0 0.0
    %2281 = vmatprep.subr.mxu0 0.0
    %2282 = vmatpush1.msra.mxu0 0.0
    %2283 = vmatprep.subr.mxu0 0.0
    %2284 = vmatpush1.msra.mxu0 0.0
    %2285 = vmatprep.subr.mxu0 %v1488
    %2286 = vmatpush1.msra.mxu0 %v1487
    %2287 = vmatprep.subr.mxu0 %v1486
    %2288 = vmatpush1.msra.mxu0 %v1485
    %2289 = vmatprep.subr.mxu0 %v1484
    %2290 = vmatpush1.msra.mxu0 %v1483
    %2291 = vmatprep.subr.mxu0 %v1482
    %2292 = vmatpush1.msra.mxu0 %v1481
    %2293 = vmatprep.subr.mxu0 %v1480
    %2294 = vmatpush1.msra.mxu0 %v1479
    %2295 = vmatprep.subr.mxu0 %v1478
    %2296 = vmatpush1.msra.mxu0 %v1477
    %2297 = vmatprep.subr.mxu0 %v1476
    %2298 = vmatpush1.msra.mxu0 %v1475
    %2299 = vmatprep.subr.mxu0 %v1474
    %2300 = vmatpush1.msra.mxu0 %v1473
    %2301 = vmatprep.subr.mxu0 0.0
    %2302 = vmatpush2.msra.mxu0 0.0
    %2303 = vmatprep.subr.mxu0 0.0
    %2304 = vmatpush2.msra.mxu0 0.0
    %2305 = vmatprep.subr.mxu0 0.0
    %2306 = vmatpush2.msra.mxu0 0.0
    %2307 = vmatprep.subr.mxu0 0.0
    %2308 = vmatpush2.msra.mxu0 0.0
    %2309 = vmatprep.subr.mxu0 0.0
    %2310 = vmatpush2.msra.mxu0 0.0
    %2311 = vmatprep.subr.mxu0 0.0
    %2312 = vmatpush2.msra.mxu0 0.0
    %2313 = vmatprep.subr.mxu0 0.0
    %2314 = vmatpush2.msra.mxu0 0.0
    %2315 = vmatprep.subr.mxu0 0.0
    %2316 = vmatpush2.msra.mxu0 0.0
    %2317 = vmatprep.subr.mxu0 0.0
    %2318 = vmatpush2.msra.mxu0 0.0
    %2319 = vmatprep.subr.mxu0 0.0
    %2320 = vmatpush2.msra.mxu0 0.0
    %2321 = vmatprep.subr.mxu0 0.0
    %2322 = vmatpush2.msra.mxu0 0.0
    %2323 = vmatprep.subr.mxu0 0.0
    %2324 = vmatpush2.msra.mxu0 0.0
    %2325 = vmatprep.subr.mxu0 0.0
    %2326 = vmatpush2.msra.mxu0 0.0
    %2327 = vmatprep.subr.mxu0 0.0
    %2328 = vmatpush2.msra.mxu0 0.0
    %2329 = vmatprep.subr.mxu0 0.0
    %2330 = vmatpush2.msra.mxu0 0.0
    %2331 = vmatprep.subr.mxu0 0.0
    %2332 = vmatpush2.msra.mxu0 0.0
    %2333 = vmatprep.mubr.f32.mxu0 0.0
    %2334 = vmatmul.mubr.f32.gmra.mxu0 %v2267
    %v2335 = vpop.f32.mrf.mxu0
    %v2336 = vadd.f32 %v2262, %v2335
    %v2337 = vpop.f32.mrf.mxu0
    %v2338 = vadd.f32 %v2263, %v2337
    %2339 = vdwg.mxu0
    %v2340 = vxor.u32 %v2336, 2147483648
    %v2341 = vxor.u32 %v2338, 2147483648
    %v2342 = vmul.f32 %v2340, 1.442695
    %v2343 = vpow.pop %v2342
    %v2344 = vmul.f32 %v2341, 1.442695
    %v2345 = vpow.pop %v2344
    %v2346 = vadd.f32 %v2343, 1.0
    %v2347 = vadd.f32 %v2345, 1.0
    %v2348 = vrcp.pop %v2346
    %v2349 = vmul.f32 1.0, %v2348
    %v2350 = vrcp.pop %v2347
    %v2351 = vmul.f32 1.0, %v2350
    %v2352 = vtanh.pop %v2338
    %v2353 = vmul.f32 %v2349, %v2251
    %2355 = vrot.lane.b32.xlu0 %v2352, 64
    %v2356 = vpop.permute.xlu0 %2355
    %v2358 = vmul.f32 %v2349, %v2356
    %2360 = vrot.lane.b32.xlu0 %v2358, 64
    %v2361 = vpop.permute.xlu0 %2360
    %v2363 = vadd.f32 %v2353, %v2361
    %v2364 = vtanh.pop %v2363
    %2366 = vrot.lane.b32.xlu0 %v2364, 64
    %v2367 = vpop.permute.xlu0 %2366
    %v2369 = vmul.f32 %v2351, %v2367
    %v2370 = vld [vmem:[%s7] sm:$0xff]
    %v2371 = vld [vmem:[%s7 + $0x8] sm:$0xff]
    %v2372 = vld [vmem:[%s7 + $0x10] sm:$0xff]
    %v2373 = vld [vmem:[%s7 + $0x18] sm:$0xff]
    %v2374 = vld [vmem:[%s7 + $0x20] sm:$0xff]
    %v2375 = vld [vmem:[%s7 + $0x28] sm:$0xff]
    %v2376 = vld [vmem:[%s7 + $0x30] sm:$0xff]
    %v2377 = vld [vmem:[%s7 + $0x38] sm:$0xff]
    %v2378 = vld [vmem:[%s8] sm:$0x1]
    %v2380 = vlaneseq
    %v2381 = vshrl.u32 %v2380, 7
    %v2382 = vsub.s32 0, %v2381
    %v2383 = vrot.slane %v2378, %v2382
    %v2386 = vsel %vm343, %v2369, 0
    %2388 = vmatprep.subr.mxu0 0.0
    %2389 = vmatpush1.msra.mxu0 0.0
    %2390 = vmatprep.subr.mxu0 0.0
    %2391 = vmatpush1.msra.mxu0 0.0
    %2392 = vmatprep.subr.mxu0 0.0
    %2393 = vmatpush1.msra.mxu0 0.0
    %2394 = vmatprep.subr.mxu0 0.0
    %2395 = vmatpush1.msra.mxu0 0.0
    %2396 = vmatprep.subr.mxu0 0.0
    %2397 = vmatpush1.msra.mxu0 0.0
    %2398 = vmatprep.subr.mxu0 0.0
    %2399 = vmatpush1.msra.mxu0 0.0
    %2400 = vmatprep.subr.mxu0 0.0
    %2401 = vmatpush1.msra.mxu0 0.0
    %2402 = vmatprep.subr.mxu0 0.0
    %2403 = vmatpush1.msra.mxu0 0.0
    %2404 = vmatprep.subr.mxu0 0.0
    %2405 = vmatpush1.msra.mxu0 %v2377
    %2406 = vmatprep.subr.mxu0 0.0
    %2407 = vmatpush1.msra.mxu0 %v2376
    %2408 = vmatprep.subr.mxu0 0.0
    %2409 = vmatpush1.msra.mxu0 %v2375
    %2410 = vmatprep.subr.mxu0 0.0
    %2411 = vmatpush1.msra.mxu0 %v2374
    %2412 = vmatprep.subr.mxu0 0.0
    %2413 = vmatpush1.msra.mxu0 %v2373
    %2414 = vmatprep.subr.mxu0 0.0
    %2415 = vmatpush1.msra.mxu0 %v2372
    %2416 = vmatprep.subr.mxu0 0.0
    %2417 = vmatpush1.msra.mxu0 %v2371
    %2418 = vmatprep.subr.mxu0 0.0
    %2419 = vmatpush1.msra.mxu0 %v2370
    %2420 = vmatprep.subr.mxu0 0.0
    %2421 = vmatpush2.msra.mxu0 0.0
    %2422 = vmatprep.subr.mxu0 0.0
    %2423 = vmatpush2.msra.mxu0 0.0
    %2424 = vmatprep.subr.mxu0 0.0
    %2425 = vmatpush2.msra.mxu0 0.0
    %2426 = vmatprep.subr.mxu0 0.0
    %2427 = vmatpush2.msra.mxu0 0.0
    %2428 = vmatprep.subr.mxu0 0.0
    %2429 = vmatpush2.msra.mxu0 0.0
    %2430 = vmatprep.subr.mxu0 0.0
    %2431 = vmatpush2.msra.mxu0 0.0
    %2432 = vmatprep.subr.mxu0 0.0
    %2433 = vmatpush2.msra.mxu0 0.0
    %2434 = vmatprep.subr.mxu0 0.0
    %2435 = vmatpush2.msra.mxu0 0.0
    %2436 = vmatprep.subr.mxu0 0.0
    %2437 = vmatpush2.msra.mxu0 0.0
    %2438 = vmatprep.subr.mxu0 0.0
    %2439 = vmatpush2.msra.mxu0 0.0
    %2440 = vmatprep.subr.mxu0 0.0
    %2441 = vmatpush2.msra.mxu0 0.0
    %2442 = vmatprep.subr.mxu0 0.0
    %2443 = vmatpush2.msra.mxu0 0.0
    %2444 = vmatprep.subr.mxu0 0.0
    %2445 = vmatpush2.msra.mxu0 0.0
    %2446 = vmatprep.subr.mxu0 0.0
    %2447 = vmatpush2.msra.mxu0 0.0
    %2448 = vmatprep.subr.mxu0 0.0
    %2449 = vmatpush2.msra.mxu0 0.0
    %2450 = vmatprep.subr.mxu0 0.0
    %2451 = vmatpush2.msra.mxu0 0.0
    %2452 = vmatprep.mubr.f32.mxu0 0.0
    %2453 = vmatmul.mubr.f32.gmra.mxu0 %v2386
    %v2454 = vpop.f32.mrf.mxu0
    %v2455 = vadd.f32 %v2383, %v2454
    %v2456 = vpop.f32.mrf.mxu0
    %2457 = vdwg.mxu0
    %2458 = vst.msk [vmem:[#allocation11] sm:$0x3] %vm448, %v2455
    // Predicated region
    $region50: #{tpu_custom_call.1} parent=1 // pred_check
      _
    $region51: #{tpu_custom_call.1} parent=1 // pred_check_branch
      %2460 = sbr.rel (0) target = $region53
    $region52: #{tpu_custom_call.1} parent=1 // pred_region
      %s2462 = ssub.s32 32, 32
      %2463 = vsyncadd [#allocation7], %s2462
      %s2465 = sshll.u32 [#allocation11], 4
      %s2466 = int_to_ptr.vmem [resolvable:$true] %s2465
      %2468 = dma.vmem_to_hbm [thread:$0]  %s2466, 32, %s9, [#allocation7]
    $region53: #{tpu_custom_call.1} parent=1 // pred_fallthru
      _
    // Predicated region
    $region54: #{tpu_custom_call.1} parent=1 // pred_check
      _
    $region55: #{tpu_custom_call.1} parent=1 // pred_check_branch
      %2470 = sbr.rel (0) target = $region57
    $region56: #{tpu_custom_call.1} parent=1 // pred_region
      %2471 = dma.done [#allocation7], 32
    $region57: #{tpu_custom_call.1} parent=1 // pred_fallthru
      _
    %2472 = vsyncpa [#allocation6], 1
    %2473 = vsyncpa [#allocation9], 1
    %2474 = vsyncpa [#allocation7], 1

</llo_original>
